<compile_context>
chip_gen: v7x
topology: tpu7x:2x2x1
jax: 0.10.0
libtpu: 0.0.40
codegen_flags: <defaults>
</compile_context>

<pallas_src>
import functools

import jax
import jax.numpy as jnp
from jax import lax
from jax.experimental import pallas as pl
from jax.experimental.pallas import tpu as pltpu

EPS = 1e-6


# ---------------------------------------------------------------------------------------
# VMEM budgeting (per generation: v5e/v6e 128 MiB physical, v7x 64 MiB per TensorCore)
# ---------------------------------------------------------------------------------------
def _vmem_budget_and_limit():
    """Return (tile budget, explicit vmem_limit_bytes) derived from the local part."""
    cap = 64 << 20                      # assume the smallest current part (v7x per-TC) on failure
    try:
        cap = int(getattr(pltpu.get_tpu_info(), "vmem_capacity_bytes", cap)) or cap
    except Exception:                   # noqa: BLE001 - hardware query is best-effort
        pass
    # ~40 MiB tile budget on 64 MiB parts (v7x), 48 MiB on 128 MiB parts (v5e/v6e).
    budget = min(48 << 20, (cap * 5) // 8)
    # Explicit scoped-VMEM limit (default scoped limits are far below physical capacity).
    limit = min(cap - (8 << 20), budget + (16 << 20))
    return int(budget), int(limit)


def _choose_b_tile(batch, mics, freqs, budget_bytes):
    """Batches per Stage-A grid step: fill sublanes (<=8) while fitting the VMEM budget."""
    m_pad = max(8, mics)
    # 4 double-buffered (M, M, F) SCM planes + 2 double-buffered (M, F) outputs
    # + ~24 (M, F) f32 working slabs (Gauss-Jordan rows + quadratic-form accumulators).
    per_b = 4 * (4 * 2 * mics * m_pad * freqs + 2 * 2 * m_pad * freqs + 24 * m_pad * freqs)
    bt = max(1, min(8, budget_bytes // max(per_b, 1), batch))
    while batch % bt:
        bt -= 1
    return int(bt)


def _choose_t_tile(mics, freqs, frames, budget_bytes):
    """Largest T tile (multiple of 128, capped at 2048) fitting the per-core VMEM budget.

    Accounts for double-buffered mix/out blocks AND the (F, tt) f32 temporaries Mosaic
    materializes for the fused multiply-adds (review item: accumulator VMEM accounting)."""
    per_lane = 4 * (2 * 2 * mics * freqs      # mix real+imag, double-buffered
                    + 2 * 2 * freqs           # out real+imag, double-buffered (ref-accumulated)
                    + 4 * freqs)              # in-flight elementwise temporaries
    fixed = 4 * freqs * 128 * 4               # resident (F, M) weight blocks, lane-padded
    avail = max(budget_bytes - fixed, 1 << 20)
    tile = avail // max(per_lane, 1)
    if tile >= frames:
        return int(frames)                    # full-extent block (always legal)
    tile = (tile // 128) * 128                # lane-dense, unmasked steady-state stores
    tile = min(tile, 2048)
    if tile < 128:
        tile = min(128, frames)
    return int(tile)


# ---------------------------------------------------------------------------------------
# Stage A: fused solve + reference-mic selection + weight extraction (F on lanes)
# ---------------------------------------------------------------------------------------
def _weights_kernel(tgr_ref, tgi_ref, nor_ref, noi_ref, wr_ref, wi_ref, *, mu):
    # SCM refs : (Bt, M, M, F) real / imag planes, original asteroid layout (F on lanes).
    # outputs  : (Bt, M, F)    real / imag planes of the beamforming vector (mic on axis 1).
    Bt, M_, _, Fq = tgr_ref.shape

    # ---- complex Gauss-Jordan solve of (T + mu*N) X = T, vectorized over (Bt, F) lanes ----
    # Rows of A and X are kept as (Bt, M(col), F) slabs; the elimination is a tiny static
    # unrolled loop of dense VPU ops.  No pivoting: A is Hermitian PD for valid SCMs.
    # TODO(synk): torch stable_solve upcasts to complex128 and falls back to SCM conditioning
    # on singular matrices; TPU has no float64, so this is an unpivoted float32 elimination.
    a_r = [tgr_ref[:, i] + mu * nor_ref[:, i] for i in range(M_)]   # (Bt, M, F) each
    a_i = [tgi_ref[:, i] + mu * noi_ref[:, i] for i in range(M_)]
    x_r = [tgr_ref[:, i] for i in range(M_)]                        # rhs -> becomes X
    x_i = [tgi_ref[:, i] for i in range(M_)]

    for k in range(M_):
        p_r = a_r[k][:, k:k + 1, :]                                 # (Bt, 1, F) pivot
        p_i = a_i[k][:, k:k + 1, :]
        inv = 1.0 / (p_r * p_r + p_i * p_i)
        ip_r = p_r * inv                                            # 1/pivot = conj(p)/|p|^2
        ip_i = -p_i * inv
        a_r[k], a_i[k] = (a_r[k] * ip_r - a_i[k] * ip_i,
                          a_r[k] * ip_i + a_i[k] * ip_r)
        x_r[k], x_i[k] = (x_r[k] * ip_r - x_i[k] * ip_i,
                          x_r[k] * ip_i + x_i[k] * ip_r)
        for i in range(M_):
            if i == k:
                continue
            f_r = a_r[i][:, k:k + 1, :]                             # elimination factor
            f_i = a_i[i][:, k:k + 1, :]
            a_r[i], a_i[i] = (a_r[i] - (f_r * a_r[k] - f_i * a_i[k]),
                              a_i[i] - (f_r * a_i[k] + f_i * a_r[k]))
            x_r[i], x_i[i] = (x_r[i] - (f_r * x_r[k] - f_i * x_i[k]),
                              x_i[i] - (f_r * x_i[k] + f_i * x_r[k]))
    # Now x_r[l][:, m, :] = Re bf[b, f, l, m]  (row l, column m of the beamforming matrix).

    # ---- a-posteriori SNR quadratic forms, folded into (l, n>=l) Hermitian pairs ----------
    # q[b, m] = sum_{f,l,n} Re( conj(bf[f,l,m]) * S[f,l,n] * bf[f,n,m] )
    # pair (l,n)+(n,l) = (Sr[l,n]+Sr[n,l])*cr + (Si[l,n]-Si[n,l])*ci  (exact for any input).
    acc_t = jnp.zeros((Bt, M_, Fq), jnp.float32)
    acc_n = jnp.zeros((Bt, M_, Fq), jnp.float32)
    for l in range(M_):
        al_r, al_i = x_r[l], x_i[l]                 # (Bt, M, F): [b, m, f] = bf[b, f, l, m]
        c_d = al_r * al_r + al_i * al_i             # diagonal term: Im part is exactly 0
        acc_t = acc_t + tgr_ref[:, l, l:l + 1, :] * c_d
        acc_n = acc_n + nor_ref[:, l, l:l + 1, :] * c_d
        for n in range(l + 1, M_):
            bn_r, bn_i = x_r[n], x_i[n]
            cr = al_r * bn_r + al_i * bn_i          #  Re( conj(bf[.,l,m]) * bf[.,n,m] )
            ci = al_i * bn_r - al_r * bn_i          # -Im( conj(bf[.,l,m]) * bf[.,n,m] )
            acc_t = (acc_t
                     + (tgr_ref[:, l, n:n + 1, :] + tgr_ref[:, n, l:l + 1, :]) * cr
                     + (tgi_ref[:, l, n:n + 1, :] - tgi_ref[:, n, l:l + 1, :]) * ci)
            acc_n = (acc_n
                     + (nor_ref[:, l, n:n + 1, :] + nor_ref[:, n, l:l + 1, :]) * cr
                     + (noi_ref[:, l, n:n + 1, :] - noi_ref[:, n, l:l + 1, :]) * ci)

    num = jnp.sum(acc_t, axis=-1, keepdims=True)                        # (Bt, M, 1)
    den = jnp.maximum(jnp.sum(acc_n, axis=-1, keepdims=True), EPS)      # clamp(min=eps)
    snr = num / den
    # TODO(synk): torch asserts isfinite(snr_post); runtime asserts are skipped here.

    # torch.argmax (first maximum) over mics, independently per batch row.
    ridx = lax.broadcasted_iota(jnp.int32, (Bt, M_, 1), 1)
    max_snr = jnp.max(snr, axis=1, keepdims=True)
    idx = jnp.min(jnp.where(snr >= max_snr, ridx, M_), axis=1, keepdims=True)
    sel = (ridx == idx).astype(jnp.float32)                             # (Bt, M, 1) one-hot

    # bf_vect[b, mic, f] = bf[b, f, mic, ref]  == sum_col bf[b, f, mic, col] * sel[b, col]
    xr_all = jnp.concatenate([r[:, None] for r in x_r], axis=1)         # (Bt, M(l), M(m), F)
    xi_all = jnp.concatenate([r[:, None] for r in x_i], axis=1)
    sel4 = sel[:, None]                                                  # (Bt, 1, M, 1)
    wr_ref[...] = jnp.sum(xr_all * sel4, axis=2)                         # (Bt, M, F)
    wi_ref[...] = jnp.sum(xi_all * sel4, axis=2)


# ---------------------------------------------------------------------------------------
# Stage B: apply beamforming vector — streaming, T-tiled, lane-dense output
# ---------------------------------------------------------------------------------------
def _apply_kernel(wr_ref, wi_ref, xr_ref, xi_ref, or_ref, oi_ref):
    # wr/wi : (1, F, M)      resident weight block ((F,1) column slices, no relayout)
    # xr/xi : (1, M, F, TT)  streamed mixture tile (real / imag planes)
    # out   : (1, F, TT)     accumulated in place (no separate (F,TT) scratch)
    M_ = xr_ref.shape[1]
    wr0 = wr_ref[0, :, 0:1]
    wi0 = wi_ref[0, :, 0:1]
    xr0 = xr_ref[0, 0]
    xi0 = xi_ref[0, 0]
    or_ref[0] = wr0 * xr0 + wi0 * xi0            # Re(conj(w) * x), mic 0 initializes
    oi_ref[0] = wr0 * xi0 - wi0 * xr0            # Im(conj(w) * x)
    for m in range(1, M_):
        wrm = wr_ref[0, :, m:m + 1]              # (F, 1)
        wim = wi_ref[0, :, m:m + 1]
        xr = xr_ref[0, m]                        # (F, TT)
        xi = xi_ref[0, m]
        or_ref[0] = or_ref[0] + wrm * xr + wim * xi
        oi_ref[0] = oi_ref[0] + wrm * xi - wim * xr


# ---------------------------------------------------------------------------------------
# Host-side glue
# ---------------------------------------------------------------------------------------
def sdw_mwf_beamformer_planar(mix_r, mix_i, target_scm, noise_scm, mu=1.0):
    """SDW-MWF forward on planar float32 real/imag mixture planes (no complex HBM passes).

    Args:
        mix_r, mix_i : (B, M, F, T) float32 real / imag planes of the mixture STFT.
        target_scm   : (B, M, M, F) complex64 target SCM (original asteroid layout).
        noise_scm    : (B, M, M, F) complex64 noise SCM.
        mu           : static Python float (speech-distortion trade-off).
    Returns:
        (out_r, out_i): (B, F, T) float32 real / imag planes of the beamformed output.
    """
    B, Mics, Fq, T = mix_r.shape
    budget, vmem_limit = _vmem_budget_and_limit()

    # SCM real/imag planes (small: B*M*M*F) — already have F last, so no transpose needed.
    tg_r = jnp.real(target_scm).astype(jnp.float32)
    tg_i = jnp.imag(target_scm).astype(jnp.float32)
    no_r = jnp.real(noise_scm).astype(jnp.float32)
    no_i = jnp.imag(noise_scm).astype(jnp.float32)

    # --- Stage A: fused solve + ref-mic selection + weight extraction (grid over batch) ----
    bt = _choose_b_tile(B, Mics, Fq, budget)
    scm_spec = pl.BlockSpec((bt, Mics, Mics, Fq), lambda b: (b, 0, 0, 0))
    w_out_spec = pl.BlockSpec((bt, Mics, Fq), lambda b: (b, 0, 0))
    w_r, w_i = pl.pallas_call(
        functools.partial(_weights_kernel, mu=float(mu)),
        out_shape=(jax.ShapeDtypeStruct((B, Mics, Fq), jnp.float32),
                   jax.ShapeDtypeStruct((B, Mics, Fq), jnp.float32)),
        grid=(B // bt,),
        in_specs=[scm_spec, scm_spec, scm_spec, scm_spec],
        out_specs=(w_out_spec, w_out_spec),
        compiler_params=pltpu.CompilerParams(
            dimension_semantics=("parallel",), vmem_limit_bytes=vmem_limit),
    )(tg_r, tg_i, no_r, no_i)

    # Weights re-laid out to (B, F, M) so Stage B slices (F, 1) columns with no relayout.
    # TODO(synk): could be emitted as (B, F, M) directly from Stage A with an in-kernel
    # lane<->sublane transpose; kept host-side since the array is tiny (B*M*F float32).
    w_r_t = jnp.transpose(w_r, (0, 2, 1))
    w_i_t = jnp.transpose(w_i, (0, 2, 1))

    # --- Stage B: apply beamforming vector (grid over batch x T tiles) ---------------------
    tt = _choose_t_tile(Mics, Fq, T, budget)
    n_t = pl.cdiv(T, tt)
    w_spec = pl.BlockSpec((1, Fq, Mics), lambda b, t: (b, 0, 0))
    mix_spec = pl.BlockSpec((1, Mics, Fq, tt), lambda b, t: (b, 0, 0, t))
    out_spec = pl.BlockSpec((1, Fq, tt), lambda b, t: (b, 0, t))
    out_r, out_i = pl.pallas_call(
        _apply_kernel,
        out_shape=(jax.ShapeDtypeStruct((B, Fq, T), jnp.float32),
                   jax.ShapeDtypeStruct((B, Fq, T), jnp.float32)),
        grid=(B, n_t),
        in_specs=[w_spec, w_spec, mix_spec, mix_spec],
        out_specs=(out_spec, out_spec),
        compiler_params=pltpu.CompilerParams(
            dimension_semantics=("parallel", "parallel"), vmem_limit_bytes=vmem_limit),
    )(w_r_t, w_i_t, mix_r, mix_i)
    return out_r, out_i


def sdw_mwf_beamformer(mix, target_scm, noise_scm, mu=1.0):
    """JAX/Pallas equivalent of SDWMWFBeamformer.forward with ref_mic=None (complex64 API).

    TODO(synk): this wrapper pays ~2 extra HBM passes over `mix` (complex->planar split) and
    one over the output (planar->complex recombine); call `sdw_mwf_beamformer_planar` when
    the producer/consumer can work with planar float32 real/imag arrays directly.
    """
    mx_r = jnp.real(mix).astype(jnp.float32)
    mx_i = jnp.imag(mix).astype(jnp.float32)
    out_r, out_i = sdw_mwf_beamformer_planar(mx_r, mx_i, target_scm, noise_scm, mu=mu)
    return lax.complex(out_r, out_i).astype(jnp.complex64)


# ---------------------------------------------------------------------------------------
# Pure-JAX reference of the forward pass (float32 solve) for validation
# ---------------------------------------------------------------------------------------
def _solve_bf_real(tgt_t, noi_t, mu):
    """bf_mat = (target + mu*noise)^{-1} @ target, solved as a real 2Mx2M block system."""
    den = tgt_t + mu * noi_t
    ar = jnp.real(den).astype(jnp.float32)
    ai = jnp.imag(den).astype(jnp.float32)
    br = jnp.real(tgt_t).astype(jnp.float32)
    bi = jnp.imag(tgt_t).astype(jnp.float32)
    a_blk = jnp.concatenate([jnp.concatenate([ar, -ai], axis=-1),
                             jnp.concatenate([ai, ar], axis=-1)], axis=-2)
    b_blk = jnp.concatenate([br, bi], axis=-2)
    x = jnp.linalg.solve(a_blk, b_blk)
    m = tgt_t.shape[-1]
    return x[..., :m, :], x[..., m:, :]


def _reference_jax(mix, target_scm, noise_scm, mu=1.0):
    tgt_t = jnp.transpose(target_scm, (0, 3, 1, 2)).astype(jnp.complex64)
    noi_t = jnp.transpose(noise_scm, (0, 3, 1, 2)).astype(jnp.complex64)
    bf_r, bf_i = _solve_bf_real(tgt_t, noi_t, mu)
    bf = (bf_r + 1j * bf_i).astype(jnp.complex64)
    num = jnp.real(jnp.einsum('bflm,bfln,bfnm->bm', jnp.conj(bf), tgt_t, bf))
    den = jnp.maximum(
        jnp.real(jnp.einsum('bflm,bfln,bfnm->bm', jnp.conj(bf), noi_t, bf)), EPS)
    idx = jnp.argmax(num / den, axis=-1)
    onehot = jax.nn.one_hot(idx, bf.shape[-1], dtype=bf.dtype)[:, None, :, None]
    bf_vect = jnp.swapaxes(jnp.squeeze(jnp.matmul(bf, onehot), -1), -1, -2)   # (B, M, F)
    return jnp.einsum('bmf,bmft->bft', jnp.conj(bf_vect), mix)


if __name__ == "__main__":
    B, M, F, T = 2, 4, 16, 16
    key = jax.random.PRNGKey(0)
    ks = jax.random.split(key, 6)

    def make_scm(kr, ki, load):
        v = (jax.random.normal(kr, (B, F, M, M), jnp.float32)
             + 1j * jax.random.normal(ki, (B, F, M, M), jnp.float32))
        scm = jnp.einsum('bfij,bfkj->bfik', v, jnp.conj(v)) / M
        scm = scm + load * jnp.eye(M, dtype=scm.dtype)
        return jnp.transpose(scm, (0, 2, 3, 1)).astype(jnp.complex64)   # (B, M, M, F)

    target_scm = make_scm(ks[0], ks[1], 0.1)
    noise_scm = make_scm(ks[2], ks[3], 0.1)
    mix = (jax.random.normal(ks[4], (B, M, F, T), jnp.float32)
           + 1j * jax.random.normal(ks[5], (B, M, F, T), jnp.float32)).astype(jnp.complex64)

    out = sdw_mwf_beamformer(mix, target_scm, noise_scm, mu=1.0)
    out = jax.block_until_ready(out)

    assert out.shape == (B, F, T) and out.dtype == jnp.complex64
    ref = _reference_jax(mix, target_scm, noise_scm, mu=1.0)
    max_err = float(jnp.max(jnp.abs(out - ref)))
    assert jnp.allclose(out, ref, atol=5e-3, rtol=5e-3), max_err
    print("KERNEL_OK")
</pallas_src>

<mosaic_0001>
module attributes {stable_mosaic.version = 11 : i64} {
  func.func @_weights_kernel(%arg0: i32, %arg1: memref<2x4x4x16xf32, #tpu.memory_space<vmem>>, %arg2: memref<2x4x4x16xf32, #tpu.memory_space<vmem>>, %arg3: memref<2x4x4x16xf32, #tpu.memory_space<vmem>>, %arg4: memref<2x4x4x16xf32, #tpu.memory_space<vmem>>, %arg5: memref<2x4x16xf32, #tpu.memory_space<vmem>>, %arg6: memref<2x4x16xf32, #tpu.memory_space<vmem>>) attributes {dimension_semantics = [#tpu.dimension_semantics<parallel>], iteration_bounds = array<i64: 1>, scalar_prefetch = 0 : i64, scratch_operands = 0 : i64, tpu.core_type = #tpu.core_type<tc>, window_params = [{transform_indices = @transform_0, window_bounds = array<i64: 2, 4, 4, 16>}, {transform_indices = @transform_1, window_bounds = array<i64: 2, 4, 4, 16>}, {transform_indices = @transform_2, window_bounds = array<i64: 2, 4, 4, 16>}, {transform_indices = @transform_3, window_bounds = array<i64: 2, 4, 4, 16>}, {transform_indices = @transform_4, window_bounds = array<i64: 2, 4, 16>}, {transform_indices = @transform_5, window_bounds = array<i64: 2, 4, 16>}]} {
    %c0 = arith.constant 0 : index
    %c0_0 = arith.constant 0 : index
    %c0_1 = arith.constant 0 : index
    %c0_2 = arith.constant 0 : index
    %0 = vector.load %arg1[%c0, %c0_0, %c0_1, %c0_2] : memref<2x4x4x16xf32, #tpu.memory_space<vmem>>, vector<2x1x4x16xf32>
    %1 = vector.shape_cast %0 : vector<2x1x4x16xf32> to vector<2x4x16xf32>
    %c0_3 = arith.constant 0 : index
    %c0_4 = arith.constant 0 : index
    %c0_5 = arith.constant 0 : index
    %c0_6 = arith.constant 0 : index
    %2 = vector.load %arg3[%c0_3, %c0_4, %c0_5, %c0_6] : memref<2x4x4x16xf32, #tpu.memory_space<vmem>>, vector<2x1x4x16xf32>
    %3 = vector.shape_cast %2 : vector<2x1x4x16xf32> to vector<2x4x16xf32>
    %cst = arith.constant 1.000000e+00 : f32
    %4 = vector.broadcast %cst : f32 to vector<2x4x16xf32>
    %5 = arith.mulf %4, %3 : vector<2x4x16xf32>
    %6 = arith.addf %1, %5 : vector<2x4x16xf32>
    %c0_7 = arith.constant 0 : index
    %c1 = arith.constant 1 : index
    %c0_8 = arith.constant 0 : index
    %c0_9 = arith.constant 0 : index
    %7 = vector.load %arg1[%c0_7, %c1, %c0_8, %c0_9] : memref<2x4x4x16xf32, #tpu.memory_space<vmem>>, vector<2x1x4x16xf32>
    %8 = vector.shape_cast %7 : vector<2x1x4x16xf32> to vector<2x4x16xf32>
    %c0_10 = arith.constant 0 : index
    %c1_11 = arith.constant 1 : index
    %c0_12 = arith.constant 0 : index
    %c0_13 = arith.constant 0 : index
    %9 = vector.load %arg3[%c0_10, %c1_11, %c0_12, %c0_13] : memref<2x4x4x16xf32, #tpu.memory_space<vmem>>, vector<2x1x4x16xf32>
    %10 = vector.shape_cast %9 : vector<2x1x4x16xf32> to vector<2x4x16xf32>
    %cst_14 = arith.constant 1.000000e+00 : f32
    %11 = vector.broadcast %cst_14 : f32 to vector<2x4x16xf32>
    %12 = arith.mulf %11, %10 : vector<2x4x16xf32>
    %13 = arith.addf %8, %12 : vector<2x4x16xf32>
    %c0_15 = arith.constant 0 : index
    %c2 = arith.constant 2 : index
    %c0_16 = arith.constant 0 : index
    %c0_17 = arith.constant 0 : index
    %14 = vector.load %arg1[%c0_15, %c2, %c0_16, %c0_17] : memref<2x4x4x16xf32, #tpu.memory_space<vmem>>, vector<2x1x4x16xf32>
    %15 = vector.shape_cast %14 : vector<2x1x4x16xf32> to vector<2x4x16xf32>
    %c0_18 = arith.constant 0 : index
    %c2_19 = arith.constant 2 : index
    %c0_20 = arith.constant 0 : index
    %c0_21 = arith.constant 0 : index
    %16 = vector.load %arg3[%c0_18, %c2_19, %c0_20, %c0_21] : memref<2x4x4x16xf32, #tpu.memory_space<vmem>>, vector<2x1x4x16xf32>
    %17 = vector.shape_cast %16 : vector<2x1x4x16xf32> to vector<2x4x16xf32>
    %cst_22 = arith.constant 1.000000e+00 : f32
    %18 = vector.broadcast %cst_22 : f32 to vector<2x4x16xf32>
    %19 = arith.mulf %18, %17 : vector<2x4x16xf32>
    %20 = arith.addf %15, %19 : vector<2x4x16xf32>
    %c0_23 = arith.constant 0 : index
    %c3 = arith.constant 3 : index
    %c0_24 = arith.constant 0 : index
    %c0_25 = arith.constant 0 : index
    %21 = vector.load %arg1[%c0_23, %c3, %c0_24, %c0_25] : memref<2x4x4x16xf32, #tpu.memory_space<vmem>>, vector<2x1x4x16xf32>
    %22 = vector.shape_cast %21 : vector<2x1x4x16xf32> to vector<2x4x16xf32>
    %c0_26 = arith.constant 0 : index
    %c3_27 = arith.constant 3 : index
    %c0_28 = arith.constant 0 : index
    %c0_29 = arith.constant 0 : index
    %23 = vector.load %arg3[%c0_26, %c3_27, %c0_28, %c0_29] : memref<2x4x4x16xf32, #tpu.memory_space<vmem>>, vector<2x1x4x16xf32>
    %24 = vector.shape_cast %23 : vector<2x1x4x16xf32> to vector<2x4x16xf32>
    %cst_30 = arith.constant 1.000000e+00 : f32
    %25 = vector.broadcast %cst_30 : f32 to vector<2x4x16xf32>
    %26 = arith.mulf %25, %24 : vector<2x4x16xf32>
    %27 = arith.addf %22, %26 : vector<2x4x16xf32>
    %c0_31 = arith.constant 0 : index
    %c0_32 = arith.constant 0 : index
    %c0_33 = arith.constant 0 : index
    %c0_34 = arith.constant 0 : index
    %28 = vector.load %arg2[%c0_31, %c0_32, %c0_33, %c0_34] : memref<2x4x4x16xf32, #tpu.memory_space<vmem>>, vector<2x1x4x16xf32>
    %29 = vector.shape_cast %28 : vector<2x1x4x16xf32> to vector<2x4x16xf32>
    %c0_35 = arith.constant 0 : index
    %c0_36 = arith.constant 0 : index
    %c0_37 = arith.constant 0 : index
    %c0_38 = arith.constant 0 : index
    %30 = vector.load %arg4[%c0_35, %c0_36, %c0_37, %c0_38] : memref<2x4x4x16xf32, #tpu.memory_space<vmem>>, vector<2x1x4x16xf32>
    %31 = vector.shape_cast %30 : vector<2x1x4x16xf32> to vector<2x4x16xf32>
    %cst_39 = arith.constant 1.000000e+00 : f32
    %32 = vector.broadcast %cst_39 : f32 to vector<2x4x16xf32>
    %33 = arith.mulf %32, %31 : vector<2x4x16xf32>
    %34 = arith.addf %29, %33 : vector<2x4x16xf32>
    %c0_40 = arith.constant 0 : index
    %c1_41 = arith.constant 1 : index
    %c0_42 = arith.constant 0 : index
    %c0_43 = arith.constant 0 : index
    %35 = vector.load %arg2[%c0_40, %c1_41, %c0_42, %c0_43] : memref<2x4x4x16xf32, #tpu.memory_space<vmem>>, vector<2x1x4x16xf32>
    %36 = vector.shape_cast %35 : vector<2x1x4x16xf32> to vector<2x4x16xf32>
    %c0_44 = arith.constant 0 : index
    %c1_45 = arith.constant 1 : index
    %c0_46 = arith.constant 0 : index
    %c0_47 = arith.constant 0 : index
    %37 = vector.load %arg4[%c0_44, %c1_45, %c0_46, %c0_47] : memref<2x4x4x16xf32, #tpu.memory_space<vmem>>, vector<2x1x4x16xf32>
    %38 = vector.shape_cast %37 : vector<2x1x4x16xf32> to vector<2x4x16xf32>
    %cst_48 = arith.constant 1.000000e+00 : f32
    %39 = vector.broadcast %cst_48 : f32 to vector<2x4x16xf32>
    %40 = arith.mulf %39, %38 : vector<2x4x16xf32>
    %41 = arith.addf %36, %40 : vector<2x4x16xf32>
    %c0_49 = arith.constant 0 : index
    %c2_50 = arith.constant 2 : index
    %c0_51 = arith.constant 0 : index
    %c0_52 = arith.constant 0 : index
    %42 = vector.load %arg2[%c0_49, %c2_50, %c0_51, %c0_52] : memref<2x4x4x16xf32, #tpu.memory_space<vmem>>, vector<2x1x4x16xf32>
    %43 = vector.shape_cast %42 : vector<2x1x4x16xf32> to vector<2x4x16xf32>
    %c0_53 = arith.constant 0 : index
    %c2_54 = arith.constant 2 : index
    %c0_55 = arith.constant 0 : index
    %c0_56 = arith.constant 0 : index
    %44 = vector.load %arg4[%c0_53, %c2_54, %c0_55, %c0_56] : memref<2x4x4x16xf32, #tpu.memory_space<vmem>>, vector<2x1x4x16xf32>
    %45 = vector.shape_cast %44 : vector<2x1x4x16xf32> to vector<2x4x16xf32>
    %cst_57 = arith.constant 1.000000e+00 : f32
    %46 = vector.broadcast %cst_57 : f32 to vector<2x4x16xf32>
    %47 = arith.mulf %46, %45 : vector<2x4x16xf32>
    %48 = arith.addf %43, %47 : vector<2x4x16xf32>
    %c0_58 = arith.constant 0 : index
    %c3_59 = arith.constant 3 : index
    %c0_60 = arith.constant 0 : index
    %c0_61 = arith.constant 0 : index
    %49 = vector.load %arg2[%c0_58, %c3_59, %c0_60, %c0_61] : memref<2x4x4x16xf32, #tpu.memory_space<vmem>>, vector<2x1x4x16xf32>
    %50 = vector.shape_cast %49 : vector<2x1x4x16xf32> to vector<2x4x16xf32>
    %c0_62 = arith.constant 0 : index
    %c3_63 = arith.constant 3 : index
    %c0_64 = arith.constant 0 : index
    %c0_65 = arith.constant 0 : index
    %51 = vector.load %arg4[%c0_62, %c3_63, %c0_64, %c0_65] : memref<2x4x4x16xf32, #tpu.memory_space<vmem>>, vector<2x1x4x16xf32>
    %52 = vector.shape_cast %51 : vector<2x1x4x16xf32> to vector<2x4x16xf32>
    %cst_66 = arith.constant 1.000000e+00 : f32
    %53 = vector.broadcast %cst_66 : f32 to vector<2x4x16xf32>
    %54 = arith.mulf %53, %52 : vector<2x4x16xf32>
    %55 = arith.addf %50, %54 : vector<2x4x16xf32>
    %c0_67 = arith.constant 0 : index
    %c0_68 = arith.constant 0 : index
    %c0_69 = arith.constant 0 : index
    %c0_70 = arith.constant 0 : index
    %56 = vector.load %arg1[%c0_67, %c0_68, %c0_69, %c0_70] : memref<2x4x4x16xf32, #tpu.memory_space<vmem>>, vector<2x1x4x16xf32>
    %57 = vector.shape_cast %56 : vector<2x1x4x16xf32> to vector<2x4x16xf32>
    %c0_71 = arith.constant 0 : index
    %c1_72 = arith.constant 1 : index
    %c0_73 = arith.constant 0 : index
    %c0_74 = arith.constant 0 : index
    %58 = vector.load %arg1[%c0_71, %c1_72, %c0_73, %c0_74] : memref<2x4x4x16xf32, #tpu.memory_space<vmem>>, vector<2x1x4x16xf32>
    %59 = vector.shape_cast %58 : vector<2x1x4x16xf32> to vector<2x4x16xf32>
    %c0_75 = arith.constant 0 : index
    %c2_76 = arith.constant 2 : index
    %c0_77 = arith.constant 0 : index
    %c0_78 = arith.constant 0 : index
    %60 = vector.load %arg1[%c0_75, %c2_76, %c0_77, %c0_78] : memref<2x4x4x16xf32, #tpu.memory_space<vmem>>, vector<2x1x4x16xf32>
    %61 = vector.shape_cast %60 : vector<2x1x4x16xf32> to vector<2x4x16xf32>
    %c0_79 = arith.constant 0 : index
    %c3_80 = arith.constant 3 : index
    %c0_81 = arith.constant 0 : index
    %c0_82 = arith.constant 0 : index
    %62 = vector.load %arg1[%c0_79, %c3_80, %c0_81, %c0_82] : memref<2x4x4x16xf32, #tpu.memory_space<vmem>>, vector<2x1x4x16xf32>
    %63 = vector.shape_cast %62 : vector<2x1x4x16xf32> to vector<2x4x16xf32>
    %c0_83 = arith.constant 0 : index
    %c0_84 = arith.constant 0 : index
    %c0_85 = arith.constant 0 : index
    %c0_86 = arith.constant 0 : index
    %64 = vector.load %arg2[%c0_83, %c0_84, %c0_85, %c0_86] : memref<2x4x4x16xf32, #tpu.memory_space<vmem>>, vector<2x1x4x16xf32>
    %65 = vector.shape_cast %64 : vector<2x1x4x16xf32> to vector<2x4x16xf32>
    %c0_87 = arith.constant 0 : index
    %c1_88 = arith.constant 1 : index
    %c0_89 = arith.constant 0 : index
    %c0_90 = arith.constant 0 : index
    %66 = vector.load %arg2[%c0_87, %c1_88, %c0_89, %c0_90] : memref<2x4x4x16xf32, #tpu.memory_space<vmem>>, vector<2x1x4x16xf32>
    %67 = vector.shape_cast %66 : vector<2x1x4x16xf32> to vector<2x4x16xf32>
    %c0_91 = arith.constant 0 : index
    %c2_92 = arith.constant 2 : index
    %c0_93 = arith.constant 0 : index
    %c0_94 = arith.constant 0 : index
    %68 = vector.load %arg2[%c0_91, %c2_92, %c0_93, %c0_94] : memref<2x4x4x16xf32, #tpu.memory_space<vmem>>, vector<2x1x4x16xf32>
    %69 = vector.shape_cast %68 : vector<2x1x4x16xf32> to vector<2x4x16xf32>
    %c0_95 = arith.constant 0 : index
    %c3_96 = arith.constant 3 : index
    %c0_97 = arith.constant 0 : index
    %c0_98 = arith.constant 0 : index
    %70 = vector.load %arg2[%c0_95, %c3_96, %c0_97, %c0_98] : memref<2x4x4x16xf32, #tpu.memory_space<vmem>>, vector<2x1x4x16xf32>
    %71 = vector.shape_cast %70 : vector<2x1x4x16xf32> to vector<2x4x16xf32>
    %72 = vector.extract_strided_slice %6 {offsets = [0, 0, 0], sizes = [2, 1, 16], strides = [1, 1, 1]} : vector<2x4x16xf32> to vector<2x1x16xf32>
    %73 = vector.extract_strided_slice %34 {offsets = [0, 0, 0], sizes = [2, 1, 16], strides = [1, 1, 1]} : vector<2x4x16xf32> to vector<2x1x16xf32>
    %74 = arith.mulf %72, %72 : vector<2x1x16xf32>
    %75 = arith.mulf %73, %73 : vector<2x1x16xf32>
    %76 = arith.addf %74, %75 : vector<2x1x16xf32>
    %cst_99 = arith.constant 1.000000e+00 : f32
    %77 = vector.broadcast %cst_99 : f32 to vector<2x1x16xf32>
    %78 = arith.divf %77, %76 : vector<2x1x16xf32>
    %79 = arith.mulf %72, %78 : vector<2x1x16xf32>
    %cst_100 = arith.constant 0.000000e+00 : f32
    %80 = vector.broadcast %cst_100 : f32 to vector<2x1x16xf32>
    %81 = arith.subf %80, %73 : vector<2x1x16xf32>
    %82 = arith.mulf %81, %78 : vector<2x1x16xf32>
    %83 = vector.broadcast %79 : vector<2x1x16xf32> to vector<2x4x16xf32>
    %84 = arith.mulf %6, %83 : vector<2x4x16xf32>
    %85 = vector.broadcast %82 : vector<2x1x16xf32> to vector<2x4x16xf32>
    %86 = arith.mulf %34, %85 : vector<2x4x16xf32>
    %87 = arith.subf %84, %86 : vector<2x4x16xf32>
    %88 = vector.broadcast %82 : vector<2x1x16xf32> to vector<2x4x16xf32>
    %89 = arith.mulf %6, %88 : vector<2x4x16xf32>
    %90 = vector.broadcast %79 : vector<2x1x16xf32> to vector<2x4x16xf32>
    %91 = arith.mulf %34, %90 : vector<2x4x16xf32>
    %92 = arith.addf %89, %91 : vector<2x4x16xf32>
    %93 = vector.broadcast %79 : vector<2x1x16xf32> to vector<2x4x16xf32>
    %94 = arith.mulf %57, %93 : vector<2x4x16xf32>
    %95 = vector.broadcast %82 : vector<2x1x16xf32> to vector<2x4x16xf32>
    %96 = arith.mulf %65, %95 : vector<2x4x16xf32>
    %97 = arith.subf %94, %96 : vector<2x4x16xf32>
    %98 = vector.broadcast %82 : vector<2x1x16xf32> to vector<2x4x16xf32>
    %99 = arith.mulf %57, %98 : vector<2x4x16xf32>
    %100 = vector.broadcast %79 : vector<2x1x16xf32> to vector<2x4x16xf32>
    %101 = arith.mulf %65, %100 : vector<2x4x16xf32>
    %102 = arith.addf %99, %101 : vector<2x4x16xf32>
    %103 = vector.extract_strided_slice %13 {offsets = [0, 0, 0], sizes = [2, 1, 16], strides = [1, 1, 1]} : vector<2x4x16xf32> to vector<2x1x16xf32>
    %104 = vector.extract_strided_slice %41 {offsets = [0, 0, 0], sizes = [2, 1, 16], strides = [1, 1, 1]} : vector<2x4x16xf32> to vector<2x1x16xf32>
    %105 = vector.broadcast %103 : vector<2x1x16xf32> to vector<2x4x16xf32>
    %106 = arith.mulf %105, %87 : vector<2x4x16xf32>
    %107 = vector.broadcast %104 : vector<2x1x16xf32> to vector<2x4x16xf32>
    %108 = arith.mulf %107, %92 : vector<2x4x16xf32>
    %109 = arith.subf %106, %108 : vector<2x4x16xf32>
    %110 = arith.subf %13, %109 : vector<2x4x16xf32>
    %111 = vector.broadcast %103 : vector<2x1x16xf32> to vector<2x4x16xf32>
    %112 = arith.mulf %111, %92 : vector<2x4x16xf32>
    %113 = vector.broadcast %104 : vector<2x1x16xf32> to vector<2x4x16xf32>
    %114 = arith.mulf %113, %87 : vector<2x4x16xf32>
    %115 = arith.addf %112, %114 : vector<2x4x16xf32>
    %116 = arith.subf %41, %115 : vector<2x4x16xf32>
    %117 = vector.broadcast %103 : vector<2x1x16xf32> to vector<2x4x16xf32>
    %118 = arith.mulf %117, %97 : vector<2x4x16xf32>
    %119 = vector.broadcast %104 : vector<2x1x16xf32> to vector<2x4x16xf32>
    %120 = arith.mulf %119, %102 : vector<2x4x16xf32>
    %121 = arith.subf %118, %120 : vector<2x4x16xf32>
    %122 = arith.subf %59, %121 : vector<2x4x16xf32>
    %123 = vector.broadcast %103 : vector<2x1x16xf32> to vector<2x4x16xf32>
    %124 = arith.mulf %123, %102 : vector<2x4x16xf32>
    %125 = vector.broadcast %104 : vector<2x1x16xf32> to vector<2x4x16xf32>
    %126 = arith.mulf %125, %97 : vector<2x4x16xf32>
    %127 = arith.addf %124, %126 : vector<2x4x16xf32>
    %128 = arith.subf %67, %127 : vector<2x4x16xf32>
    %129 = vector.extract_strided_slice %20 {offsets = [0, 0, 0], sizes = [2, 1, 16], strides = [1, 1, 1]} : vector<2x4x16xf32> to vector<2x1x16xf32>
    %130 = vector.extract_strided_slice %48 {offsets = [0, 0, 0], sizes = [2, 1, 16], strides = [1, 1, 1]} : vector<2x4x16xf32> to vector<2x1x16xf32>
    %131 = vector.broadcast %129 : vector<2x1x16xf32> to vector<2x4x16xf32>
    %132 = arith.mulf %131, %87 : vector<2x4x16xf32>
    %133 = vector.broadcast %130 : vector<2x1x16xf32> to vector<2x4x16xf32>
    %134 = arith.mulf %133, %92 : vector<2x4x16xf32>
    %135 = arith.subf %132, %134 : vector<2x4x16xf32>
    %136 = arith.subf %20, %135 : vector<2x4x16xf32>
    %137 = vector.broadcast %129 : vector<2x1x16xf32> to vector<2x4x16xf32>
    %138 = arith.mulf %137, %92 : vector<2x4x16xf32>
    %139 = vector.broadcast %130 : vector<2x1x16xf32> to vector<2x4x16xf32>
    %140 = arith.mulf %139, %87 : vector<2x4x16xf32>
    %141 = arith.addf %138, %140 : vector<2x4x16xf32>
    %142 = arith.subf %48, %141 : vector<2x4x16xf32>
    %143 = vector.broadcast %129 : vector<2x1x16xf32> to vector<2x4x16xf32>
    %144 = arith.mulf %143, %97 : vector<2x4x16xf32>
    %145 = vector.broadcast %130 : vector<2x1x16xf32> to vector<2x4x16xf32>
    %146 = arith.mulf %145, %102 : vector<2x4x16xf32>
    %147 = arith.subf %144, %146 : vector<2x4x16xf32>
    %148 = arith.subf %61, %147 : vector<2x4x16xf32>
    %149 = vector.broadcast %129 : vector<2x1x16xf32> to vector<2x4x16xf32>
    %150 = arith.mulf %149, %102 : vector<2x4x16xf32>
    %151 = vector.broadcast %130 : vector<2x1x16xf32> to vector<2x4x16xf32>
    %152 = arith.mulf %151, %97 : vector<2x4x16xf32>
    %153 = arith.addf %150, %152 : vector<2x4x16xf32>
    %154 = arith.subf %69, %153 : vector<2x4x16xf32>
    %155 = vector.extract_strided_slice %27 {offsets = [0, 0, 0], sizes = [2, 1, 16], strides = [1, 1, 1]} : vector<2x4x16xf32> to vector<2x1x16xf32>
    %156 = vector.extract_strided_slice %55 {offsets = [0, 0, 0], sizes = [2, 1, 16], strides = [1, 1, 1]} : vector<2x4x16xf32> to vector<2x1x16xf32>
    %157 = vector.broadcast %155 : vector<2x1x16xf32> to vector<2x4x16xf32>
    %158 = arith.mulf %157, %87 : vector<2x4x16xf32>
    %159 = vector.broadcast %156 : vector<2x1x16xf32> to vector<2x4x16xf32>
    %160 = arith.mulf %159, %92 : vector<2x4x16xf32>
    %161 = arith.subf %158, %160 : vector<2x4x16xf32>
    %162 = arith.subf %27, %161 : vector<2x4x16xf32>
    %163 = vector.broadcast %155 : vector<2x1x16xf32> to vector<2x4x16xf32>
    %164 = arith.mulf %163, %92 : vector<2x4x16xf32>
    %165 = vector.broadcast %156 : vector<2x1x16xf32> to vector<2x4x16xf32>
    %166 = arith.mulf %165, %87 : vector<2x4x16xf32>
    %167 = arith.addf %164, %166 : vector<2x4x16xf32>
    %168 = arith.subf %55, %167 : vector<2x4x16xf32>
    %169 = vector.broadcast %155 : vector<2x1x16xf32> to vector<2x4x16xf32>
    %170 = arith.mulf %169, %97 : vector<2x4x16xf32>
    %171 = vector.broadcast %156 : vector<2x1x16xf32> to vector<2x4x16xf32>
    %172 = arith.mulf %171, %102 : vector<2x4x16xf32>
    %173 = arith.subf %170, %172 : vector<2x4x16xf32>
    %174 = arith.subf %63, %173 : vector<2x4x16xf32>
    %175 = vector.broadcast %155 : vector<2x1x16xf32> to vector<2x4x16xf32>
    %176 = arith.mulf %175, %102 : vector<2x4x16xf32>
    %177 = vector.broadcast %156 : vector<2x1x16xf32> to vector<2x4x16xf32>
    %178 = arith.mulf %177, %97 : vector<2x4x16xf32>
    %179 = arith.addf %176, %178 : vector<2x4x16xf32>
    %180 = arith.subf %71, %179 : vector<2x4x16xf32>
    %181 = vector.extract_strided_slice %110 {offsets = [0, 1, 0], sizes = [2, 1, 16], strides = [1, 1, 1]} : vector<2x4x16xf32> to vector<2x1x16xf32>
    %182 = vector.extract_strided_slice %116 {offsets = [0, 1, 0], sizes = [2, 1, 16], strides = [1, 1, 1]} : vector<2x4x16xf32> to vector<2x1x16xf32>
    %183 = arith.mulf %181, %181 : vector<2x1x16xf32>
    %184 = arith.mulf %182, %182 : vector<2x1x16xf32>
    %185 = arith.addf %183, %184 : vector<2x1x16xf32>
    %cst_101 = arith.constant 1.000000e+00 : f32
    %186 = vector.broadcast %cst_101 : f32 to vector<2x1x16xf32>
    %187 = arith.divf %186, %185 : vector<2x1x16xf32>
    %188 = arith.mulf %181, %187 : vector<2x1x16xf32>
    %cst_102 = arith.constant 0.000000e+00 : f32
    %189 = vector.broadcast %cst_102 : f32 to vector<2x1x16xf32>
    %190 = arith.subf %189, %182 : vector<2x1x16xf32>
    %191 = arith.mulf %190, %187 : vector<2x1x16xf32>
    %192 = vector.broadcast %188 : vector<2x1x16xf32> to vector<2x4x16xf32>
    %193 = arith.mulf %110, %192 : vector<2x4x16xf32>
    %194 = vector.broadcast %191 : vector<2x1x16xf32> to vector<2x4x16xf32>
    %195 = arith.mulf %116, %194 : vector<2x4x16xf32>
    %196 = arith.subf %193, %195 : vector<2x4x16xf32>
    %197 = vector.broadcast %191 : vector<2x1x16xf32> to vector<2x4x16xf32>
    %198 = arith.mulf %110, %197 : vector<2x4x16xf32>
    %199 = vector.broadcast %188 : vector<2x1x16xf32> to vector<2x4x16xf32>
    %200 = arith.mulf %116, %199 : vector<2x4x16xf32>
    %201 = arith.addf %198, %200 : vector<2x4x16xf32>
    %202 = vector.broadcast %188 : vector<2x1x16xf32> to vector<2x4x16xf32>
    %203 = arith.mulf %122, %202 : vector<2x4x16xf32>
    %204 = vector.broadcast %191 : vector<2x1x16xf32> to vector<2x4x16xf32>
    %205 = arith.mulf %128, %204 : vector<2x4x16xf32>
    %206 = arith.subf %203, %205 : vector<2x4x16xf32>
    %207 = vector.broadcast %191 : vector<2x1x16xf32> to vector<2x4x16xf32>
    %208 = arith.mulf %122, %207 : vector<2x4x16xf32>
    %209 = vector.broadcast %188 : vector<2x1x16xf32> to vector<2x4x16xf32>
    %210 = arith.mulf %128, %209 : vector<2x4x16xf32>
    %211 = arith.addf %208, %210 : vector<2x4x16xf32>
    %212 = vector.extract_strided_slice %87 {offsets = [0, 1, 0], sizes = [2, 1, 16], strides = [1, 1, 1]} : vector<2x4x16xf32> to vector<2x1x16xf32>
    %213 = vector.extract_strided_slice %92 {offsets = [0, 1, 0], sizes = [2, 1, 16], strides = [1, 1, 1]} : vector<2x4x16xf32> to vector<2x1x16xf32>
    %214 = vector.broadcast %212 : vector<2x1x16xf32> to vector<2x4x16xf32>
    %215 = arith.mulf %214, %196 : vector<2x4x16xf32>
    %216 = vector.broadcast %213 : vector<2x1x16xf32> to vector<2x4x16xf32>
    %217 = arith.mulf %216, %201 : vector<2x4x16xf32>
    %218 = arith.subf %215, %217 : vector<2x4x16xf32>
    %219 = arith.subf %87, %218 : vector<2x4x16xf32>
    %220 = vector.broadcast %212 : vector<2x1x16xf32> to vector<2x4x16xf32>
    %221 = arith.mulf %220, %201 : vector<2x4x16xf32>
    %222 = vector.broadcast %213 : vector<2x1x16xf32> to vector<2x4x16xf32>
    %223 = arith.mulf %222, %196 : vector<2x4x16xf32>
    %224 = arith.addf %221, %223 : vector<2x4x16xf32>
    %225 = arith.subf %92, %224 : vector<2x4x16xf32>
    %226 = vector.broadcast %212 : vector<2x1x16xf32> to vector<2x4x16xf32>
    %227 = arith.mulf %226, %206 : vector<2x4x16xf32>
    %228 = vector.broadcast %213 : vector<2x1x16xf32> to vector<2x4x16xf32>
    %229 = arith.mulf %228, %211 : vector<2x4x16xf32>
    %230 = arith.subf %227, %229 : vector<2x4x16xf32>
    %231 = arith.subf %97, %230 : vector<2x4x16xf32>
    %232 = vector.broadcast %212 : vector<2x1x16xf32> to vector<2x4x16xf32>
    %233 = arith.mulf %232, %211 : vector<2x4x16xf32>
    %234 = vector.broadcast %213 : vector<2x1x16xf32> to vector<2x4x16xf32>
    %235 = arith.mulf %234, %206 : vector<2x4x16xf32>
    %236 = arith.addf %233, %235 : vector<2x4x16xf32>
    %237 = arith.subf %102, %236 : vector<2x4x16xf32>
    %238 = vector.extract_strided_slice %136 {offsets = [0, 1, 0], sizes = [2, 1, 16], strides = [1, 1, 1]} : vector<2x4x16xf32> to vector<2x1x16xf32>
    %239 = vector.extract_strided_slice %142 {offsets = [0, 1, 0], sizes = [2, 1, 16], strides = [1, 1, 1]} : vector<2x4x16xf32> to vector<2x1x16xf32>
    %240 = vector.broadcast %238 : vector<2x1x16xf32> to vector<2x4x16xf32>
    %241 = arith.mulf %240, %196 : vector<2x4x16xf32>
    %242 = vector.broadcast %239 : vector<2x1x16xf32> to vector<2x4x16xf32>
    %243 = arith.mulf %242, %201 : vector<2x4x16xf32>
    %244 = arith.subf %241, %243 : vector<2x4x16xf32>
    %245 = arith.subf %136, %244 : vector<2x4x16xf32>
    %246 = vector.broadcast %238 : vector<2x1x16xf32> to vector<2x4x16xf32>
    %247 = arith.mulf %246, %201 : vector<2x4x16xf32>
    %248 = vector.broadcast %239 : vector<2x1x16xf32> to vector<2x4x16xf32>
    %249 = arith.mulf %248, %196 : vector<2x4x16xf32>
    %250 = arith.addf %247, %249 : vector<2x4x16xf32>
    %251 = arith.subf %142, %250 : vector<2x4x16xf32>
    %252 = vector.broadcast %238 : vector<2x1x16xf32> to vector<2x4x16xf32>
    %253 = arith.mulf %252, %206 : vector<2x4x16xf32>
    %254 = vector.broadcast %239 : vector<2x1x16xf32> to vector<2x4x16xf32>
    %255 = arith.mulf %254, %211 : vector<2x4x16xf32>
    %256 = arith.subf %253, %255 : vector<2x4x16xf32>
    %257 = arith.subf %148, %256 : vector<2x4x16xf32>
    %258 = vector.broadcast %238 : vector<2x1x16xf32> to vector<2x4x16xf32>
    %259 = arith.mulf %258, %211 : vector<2x4x16xf32>
    %260 = vector.broadcast %239 : vector<2x1x16xf32> to vector<2x4x16xf32>
    %261 = arith.mulf %260, %206 : vector<2x4x16xf32>
    %262 = arith.addf %259, %261 : vector<2x4x16xf32>
    %263 = arith.subf %154, %262 : vector<2x4x16xf32>
    %264 = vector.extract_strided_slice %162 {offsets = [0, 1, 0], sizes = [2, 1, 16], strides = [1, 1, 1]} : vector<2x4x16xf32> to vector<2x1x16xf32>
    %265 = vector.extract_strided_slice %168 {offsets = [0, 1, 0], sizes = [2, 1, 16], strides = [1, 1, 1]} : vector<2x4x16xf32> to vector<2x1x16xf32>
    %266 = vector.broadcast %264 : vector<2x1x16xf32> to vector<2x4x16xf32>
    %267 = arith.mulf %266, %196 : vector<2x4x16xf32>
    %268 = vector.broadcast %265 : vector<2x1x16xf32> to vector<2x4x16xf32>
    %269 = arith.mulf %268, %201 : vector<2x4x16xf32>
    %270 = arith.subf %267, %269 : vector<2x4x16xf32>
    %271 = arith.subf %162, %270 : vector<2x4x16xf32>
    %272 = vector.broadcast %264 : vector<2x1x16xf32> to vector<2x4x16xf32>
    %273 = arith.mulf %272, %201 : vector<2x4x16xf32>
    %274 = vector.broadcast %265 : vector<2x1x16xf32> to vector<2x4x16xf32>
    %275 = arith.mulf %274, %196 : vector<2x4x16xf32>
    %276 = arith.addf %273, %275 : vector<2x4x16xf32>
    %277 = arith.subf %168, %276 : vector<2x4x16xf32>
    %278 = vector.broadcast %264 : vector<2x1x16xf32> to vector<2x4x16xf32>
    %279 = arith.mulf %278, %206 : vector<2x4x16xf32>
    %280 = vector.broadcast %265 : vector<2x1x16xf32> to vector<2x4x16xf32>
    %281 = arith.mulf %280, %211 : vector<2x4x16xf32>
    %282 = arith.subf %279, %281 : vector<2x4x16xf32>
    %283 = arith.subf %174, %282 : vector<2x4x16xf32>
    %284 = vector.broadcast %264 : vector<2x1x16xf32> to vector<2x4x16xf32>
    %285 = arith.mulf %284, %211 : vector<2x4x16xf32>
    %286 = vector.broadcast %265 : vector<2x1x16xf32> to vector<2x4x16xf32>
    %287 = arith.mulf %286, %206 : vector<2x4x16xf32>
    %288 = arith.addf %285, %287 : vector<2x4x16xf32>
    %289 = arith.subf %180, %288 : vector<2x4x16xf32>
    %290 = vector.extract_strided_slice %245 {offsets = [0, 2, 0], sizes = [2, 1, 16], strides = [1, 1, 1]} : vector<2x4x16xf32> to vector<2x1x16xf32>
    %291 = vector.extract_strided_slice %251 {offsets = [0, 2, 0], sizes = [2, 1, 16], strides = [1, 1, 1]} : vector<2x4x16xf32> to vector<2x1x16xf32>
    %292 = arith.mulf %290, %290 : vector<2x1x16xf32>
    %293 = arith.mulf %291, %291 : vector<2x1x16xf32>
    %294 = arith.addf %292, %293 : vector<2x1x16xf32>
    %cst_103 = arith.constant 1.000000e+00 : f32
    %295 = vector.broadcast %cst_103 : f32 to vector<2x1x16xf32>
    %296 = arith.divf %295, %294 : vector<2x1x16xf32>
    %297 = arith.mulf %290, %296 : vector<2x1x16xf32>
    %cst_104 = arith.constant 0.000000e+00 : f32
    %298 = vector.broadcast %cst_104 : f32 to vector<2x1x16xf32>
    %299 = arith.subf %298, %291 : vector<2x1x16xf32>
    %300 = arith.mulf %299, %296 : vector<2x1x16xf32>
    %301 = vector.broadcast %297 : vector<2x1x16xf32> to vector<2x4x16xf32>
    %302 = arith.mulf %245, %301 : vector<2x4x16xf32>
    %303 = vector.broadcast %300 : vector<2x1x16xf32> to vector<2x4x16xf32>
    %304 = arith.mulf %251, %303 : vector<2x4x16xf32>
    %305 = arith.subf %302, %304 : vector<2x4x16xf32>
    %306 = vector.broadcast %300 : vector<2x1x16xf32> to vector<2x4x16xf32>
    %307 = arith.mulf %245, %306 : vector<2x4x16xf32>
    %308 = vector.broadcast %297 : vector<2x1x16xf32> to vector<2x4x16xf32>
    %309 = arith.mulf %251, %308 : vector<2x4x16xf32>
    %310 = arith.addf %307, %309 : vector<2x4x16xf32>
    %311 = vector.broadcast %297 : vector<2x1x16xf32> to vector<2x4x16xf32>
    %312 = arith.mulf %257, %311 : vector<2x4x16xf32>
    %313 = vector.broadcast %300 : vector<2x1x16xf32> to vector<2x4x16xf32>
    %314 = arith.mulf %263, %313 : vector<2x4x16xf32>
    %315 = arith.subf %312, %314 : vector<2x4x16xf32>
    %316 = vector.broadcast %300 : vector<2x1x16xf32> to vector<2x4x16xf32>
    %317 = arith.mulf %257, %316 : vector<2x4x16xf32>
    %318 = vector.broadcast %297 : vector<2x1x16xf32> to vector<2x4x16xf32>
    %319 = arith.mulf %263, %318 : vector<2x4x16xf32>
    %320 = arith.addf %317, %319 : vector<2x4x16xf32>
    %321 = vector.extract_strided_slice %219 {offsets = [0, 2, 0], sizes = [2, 1, 16], strides = [1, 1, 1]} : vector<2x4x16xf32> to vector<2x1x16xf32>
    %322 = vector.extract_strided_slice %225 {offsets = [0, 2, 0], sizes = [2, 1, 16], strides = [1, 1, 1]} : vector<2x4x16xf32> to vector<2x1x16xf32>
    %323 = vector.broadcast %321 : vector<2x1x16xf32> to vector<2x4x16xf32>
    %324 = arith.mulf %323, %305 : vector<2x4x16xf32>
    %325 = vector.broadcast %322 : vector<2x1x16xf32> to vector<2x4x16xf32>
    %326 = arith.mulf %325, %310 : vector<2x4x16xf32>
    %327 = arith.subf %324, %326 : vector<2x4x16xf32>
    %328 = arith.subf %219, %327 : vector<2x4x16xf32>
    %329 = vector.broadcast %321 : vector<2x1x16xf32> to vector<2x4x16xf32>
    %330 = arith.mulf %329, %310 : vector<2x4x16xf32>
    %331 = vector.broadcast %322 : vector<2x1x16xf32> to vector<2x4x16xf32>
    %332 = arith.mulf %331, %305 : vector<2x4x16xf32>
    %333 = arith.addf %330, %332 : vector<2x4x16xf32>
    %334 = arith.subf %225, %333 : vector<2x4x16xf32>
    %335 = vector.broadcast %321 : vector<2x1x16xf32> to vector<2x4x16xf32>
    %336 = arith.mulf %335, %315 : vector<2x4x16xf32>
    %337 = vector.broadcast %322 : vector<2x1x16xf32> to vector<2x4x16xf32>
    %338 = arith.mulf %337, %320 : vector<2x4x16xf32>
    %339 = arith.subf %336, %338 : vector<2x4x16xf32>
    %340 = arith.subf %231, %339 : vector<2x4x16xf32>
    %341 = vector.broadcast %321 : vector<2x1x16xf32> to vector<2x4x16xf32>
    %342 = arith.mulf %341, %320 : vector<2x4x16xf32>
    %343 = vector.broadcast %322 : vector<2x1x16xf32> to vector<2x4x16xf32>
    %344 = arith.mulf %343, %315 : vector<2x4x16xf32>
    %345 = arith.addf %342, %344 : vector<2x4x16xf32>
    %346 = arith.subf %237, %345 : vector<2x4x16xf32>
    %347 = vector.extract_strided_slice %196 {offsets = [0, 2, 0], sizes = [2, 1, 16], strides = [1, 1, 1]} : vector<2x4x16xf32> to vector<2x1x16xf32>
    %348 = vector.extract_strided_slice %201 {offsets = [0, 2, 0], sizes = [2, 1, 16], strides = [1, 1, 1]} : vector<2x4x16xf32> to vector<2x1x16xf32>
    %349 = vector.broadcast %347 : vector<2x1x16xf32> to vector<2x4x16xf32>
    %350 = arith.mulf %349, %305 : vector<2x4x16xf32>
    %351 = vector.broadcast %348 : vector<2x1x16xf32> to vector<2x4x16xf32>
    %352 = arith.mulf %351, %310 : vector<2x4x16xf32>
    %353 = arith.subf %350, %352 : vector<2x4x16xf32>
    %354 = arith.subf %196, %353 : vector<2x4x16xf32>
    %355 = vector.broadcast %347 : vector<2x1x16xf32> to vector<2x4x16xf32>
    %356 = arith.mulf %355, %310 : vector<2x4x16xf32>
    %357 = vector.broadcast %348 : vector<2x1x16xf32> to vector<2x4x16xf32>
    %358 = arith.mulf %357, %305 : vector<2x4x16xf32>
    %359 = arith.addf %356, %358 : vector<2x4x16xf32>
    %360 = arith.subf %201, %359 : vector<2x4x16xf32>
    %361 = vector.broadcast %347 : vector<2x1x16xf32> to vector<2x4x16xf32>
    %362 = arith.mulf %361, %315 : vector<2x4x16xf32>
    %363 = vector.broadcast %348 : vector<2x1x16xf32> to vector<2x4x16xf32>
    %364 = arith.mulf %363, %320 : vector<2x4x16xf32>
    %365 = arith.subf %362, %364 : vector<2x4x16xf32>
    %366 = arith.subf %206, %365 : vector<2x4x16xf32>
    %367 = vector.broadcast %347 : vector<2x1x16xf32> to vector<2x4x16xf32>
    %368 = arith.mulf %367, %320 : vector<2x4x16xf32>
    %369 = vector.broadcast %348 : vector<2x1x16xf32> to vector<2x4x16xf32>
    %370 = arith.mulf %369, %315 : vector<2x4x16xf32>
    %371 = arith.addf %368, %370 : vector<2x4x16xf32>
    %372 = arith.subf %211, %371 : vector<2x4x16xf32>
    %373 = vector.extract_strided_slice %271 {offsets = [0, 2, 0], sizes = [2, 1, 16], strides = [1, 1, 1]} : vector<2x4x16xf32> to vector<2x1x16xf32>
    %374 = vector.extract_strided_slice %277 {offsets = [0, 2, 0], sizes = [2, 1, 16], strides = [1, 1, 1]} : vector<2x4x16xf32> to vector<2x1x16xf32>
    %375 = vector.broadcast %373 : vector<2x1x16xf32> to vector<2x4x16xf32>
    %376 = arith.mulf %375, %305 : vector<2x4x16xf32>
    %377 = vector.broadcast %374 : vector<2x1x16xf32> to vector<2x4x16xf32>
    %378 = arith.mulf %377, %310 : vector<2x4x16xf32>
    %379 = arith.subf %376, %378 : vector<2x4x16xf32>
    %380 = arith.subf %271, %379 : vector<2x4x16xf32>
    %381 = vector.broadcast %373 : vector<2x1x16xf32> to vector<2x4x16xf32>
    %382 = arith.mulf %381, %310 : vector<2x4x16xf32>
    %383 = vector.broadcast %374 : vector<2x1x16xf32> to vector<2x4x16xf32>
    %384 = arith.mulf %383, %305 : vector<2x4x16xf32>
    %385 = arith.addf %382, %384 : vector<2x4x16xf32>
    %386 = arith.subf %277, %385 : vector<2x4x16xf32>
    %387 = vector.broadcast %373 : vector<2x1x16xf32> to vector<2x4x16xf32>
    %388 = arith.mulf %387, %315 : vector<2x4x16xf32>
    %389 = vector.broadcast %374 : vector<2x1x16xf32> to vector<2x4x16xf32>
    %390 = arith.mulf %389, %320 : vector<2x4x16xf32>
    %391 = arith.subf %388, %390 : vector<2x4x16xf32>
    %392 = arith.subf %283, %391 : vector<2x4x16xf32>
    %393 = vector.broadcast %373 : vector<2x1x16xf32> to vector<2x4x16xf32>
    %394 = arith.mulf %393, %320 : vector<2x4x16xf32>
    %395 = vector.broadcast %374 : vector<2x1x16xf32> to vector<2x4x16xf32>
    %396 = arith.mulf %395, %315 : vector<2x4x16xf32>
    %397 = arith.addf %394, %396 : vector<2x4x16xf32>
    %398 = arith.subf %289, %397 : vector<2x4x16xf32>
    %399 = vector.extract_strided_slice %380 {offsets = [0, 3, 0], sizes = [2, 1, 16], strides = [1, 1, 1]} : vector<2x4x16xf32> to vector<2x1x16xf32>
    %400 = vector.extract_strided_slice %386 {offsets = [0, 3, 0], sizes = [2, 1, 16], strides = [1, 1, 1]} : vector<2x4x16xf32> to vector<2x1x16xf32>
    %401 = arith.mulf %399, %399 : vector<2x1x16xf32>
    %402 = arith.mulf %400, %400 : vector<2x1x16xf32>
    %403 = arith.addf %401, %402 : vector<2x1x16xf32>
    %cst_105 = arith.constant 1.000000e+00 : f32
    %404 = vector.broadcast %cst_105 : f32 to vector<2x1x16xf32>
    %405 = arith.divf %404, %403 : vector<2x1x16xf32>
    %406 = arith.mulf %399, %405 : vector<2x1x16xf32>
    %cst_106 = arith.constant 0.000000e+00 : f32
    %407 = vector.broadcast %cst_106 : f32 to vector<2x1x16xf32>
    %408 = arith.subf %407, %400 : vector<2x1x16xf32>
    %409 = arith.mulf %408, %405 : vector<2x1x16xf32>
    %410 = vector.broadcast %406 : vector<2x1x16xf32> to vector<2x4x16xf32>
    %411 = arith.mulf %392, %410 : vector<2x4x16xf32>
    %412 = vector.broadcast %409 : vector<2x1x16xf32> to vector<2x4x16xf32>
    %413 = arith.mulf %398, %412 : vector<2x4x16xf32>
    %414 = arith.subf %411, %413 : vector<2x4x16xf32>
    %415 = vector.broadcast %409 : vector<2x1x16xf32> to vector<2x4x16xf32>
    %416 = arith.mulf %392, %415 : vector<2x4x16xf32>
    %417 = vector.broadcast %406 : vector<2x1x16xf32> to vector<2x4x16xf32>
    %418 = arith.mulf %398, %417 : vector<2x4x16xf32>
    %419 = arith.addf %416, %418 : vector<2x4x16xf32>
    %420 = vector.extract_strided_slice %328 {offsets = [0, 3, 0], sizes = [2, 1, 16], strides = [1, 1, 1]} : vector<2x4x16xf32> to vector<2x1x16xf32>
    %421 = vector.extract_strided_slice %334 {offsets = [0, 3, 0], sizes = [2, 1, 16], strides = [1, 1, 1]} : vector<2x4x16xf32> to vector<2x1x16xf32>
    %422 = vector.broadcast %420 : vector<2x1x16xf32> to vector<2x4x16xf32>
    %423 = arith.mulf %422, %414 : vector<2x4x16xf32>
    %424 = vector.broadcast %421 : vector<2x1x16xf32> to vector<2x4x16xf32>
    %425 = arith.mulf %424, %419 : vector<2x4x16xf32>
    %426 = arith.subf %423, %425 : vector<2x4x16xf32>
    %427 = arith.subf %340, %426 : vector<2x4x16xf32>
    %428 = vector.broadcast %420 : vector<2x1x16xf32> to vector<2x4x16xf32>
    %429 = arith.mulf %428, %419 : vector<2x4x16xf32>
    %430 = vector.broadcast %421 : vector<2x1x16xf32> to vector<2x4x16xf32>
    %431 = arith.mulf %430, %414 : vector<2x4x16xf32>
    %432 = arith.addf %429, %431 : vector<2x4x16xf32>
    %433 = arith.subf %346, %432 : vector<2x4x16xf32>
    %434 = vector.extract_strided_slice %354 {offsets = [0, 3, 0], sizes = [2, 1, 16], strides = [1, 1, 1]} : vector<2x4x16xf32> to vector<2x1x16xf32>
    %435 = vector.extract_strided_slice %360 {offsets = [0, 3, 0], sizes = [2, 1, 16], strides = [1, 1, 1]} : vector<2x4x16xf32> to vector<2x1x16xf32>
    %436 = vector.broadcast %434 : vector<2x1x16xf32> to vector<2x4x16xf32>
    %437 = arith.mulf %436, %414 : vector<2x4x16xf32>
    %438 = vector.broadcast %435 : vector<2x1x16xf32> to vector<2x4x16xf32>
    %439 = arith.mulf %438, %419 : vector<2x4x16xf32>
    %440 = arith.subf %437, %439 : vector<2x4x16xf32>
    %441 = arith.subf %366, %440 : vector<2x4x16xf32>
    %442 = vector.broadcast %434 : vector<2x1x16xf32> to vector<2x4x16xf32>
    %443 = arith.mulf %442, %419 : vector<2x4x16xf32>
    %444 = vector.broadcast %435 : vector<2x1x16xf32> to vector<2x4x16xf32>
    %445 = arith.mulf %444, %414 : vector<2x4x16xf32>
    %446 = arith.addf %443, %445 : vector<2x4x16xf32>
    %447 = arith.subf %372, %446 : vector<2x4x16xf32>
    %448 = vector.extract_strided_slice %305 {offsets = [0, 3, 0], sizes = [2, 1, 16], strides = [1, 1, 1]} : vector<2x4x16xf32> to vector<2x1x16xf32>
    %449 = vector.extract_strided_slice %310 {offsets = [0, 3, 0], sizes = [2, 1, 16], strides = [1, 1, 1]} : vector<2x4x16xf32> to vector<2x1x16xf32>
    %450 = vector.broadcast %448 : vector<2x1x16xf32> to vector<2x4x16xf32>
    %451 = arith.mulf %450, %414 : vector<2x4x16xf32>
    %452 = vector.broadcast %449 : vector<2x1x16xf32> to vector<2x4x16xf32>
    %453 = arith.mulf %452, %419 : vector<2x4x16xf32>
    %454 = arith.subf %451, %453 : vector<2x4x16xf32>
    %455 = arith.subf %315, %454 : vector<2x4x16xf32>
    %456 = vector.broadcast %448 : vector<2x1x16xf32> to vector<2x4x16xf32>
    %457 = arith.mulf %456, %419 : vector<2x4x16xf32>
    %458 = vector.broadcast %449 : vector<2x1x16xf32> to vector<2x4x16xf32>
    %459 = arith.mulf %458, %414 : vector<2x4x16xf32>
    %460 = arith.addf %457, %459 : vector<2x4x16xf32>
    %461 = arith.subf %320, %460 : vector<2x4x16xf32>
    %cst_107 = arith.constant 0.000000e+00 : f32
    %462 = vector.broadcast %cst_107 : f32 to vector<2x4x16xf32>
    %cst_108 = arith.constant 0.000000e+00 : f32
    %463 = vector.broadcast %cst_108 : f32 to vector<2x4x16xf32>
    %464 = arith.mulf %427, %427 : vector<2x4x16xf32>
    %465 = arith.mulf %433, %433 : vector<2x4x16xf32>
    %466 = arith.addf %464, %465 : vector<2x4x16xf32>
    %c0_109 = arith.constant 0 : index
    %c0_110 = arith.constant 0 : index
    %c0_111 = arith.constant 0 : index
    %c0_112 = arith.constant 0 : index
    %467 = vector.load %arg1[%c0_109, %c0_110, %c0_111, %c0_112] : memref<2x4x4x16xf32, #tpu.memory_space<vmem>>, vector<2x1x1x16xf32>
    %468 = vector.shape_cast %467 : vector<2x1x1x16xf32> to vector<2x1x16xf32>
    %469 = vector.broadcast %468 : vector<2x1x16xf32> to vector<2x4x16xf32>
    %470 = arith.mulf %469, %466 : vector<2x4x16xf32>
    %471 = arith.addf %462, %470 : vector<2x4x16xf32>
    %c0_113 = arith.constant 0 : index
    %c0_114 = arith.constant 0 : index
    %c0_115 = arith.constant 0 : index
    %c0_116 = arith.constant 0 : index
    %472 = vector.load %arg3[%c0_113, %c0_114, %c0_115, %c0_116] : memref<2x4x4x16xf32, #tpu.memory_space<vmem>>, vector<2x1x1x16xf32>
    %473 = vector.shape_cast %472 : vector<2x1x1x16xf32> to vector<2x1x16xf32>
    %474 = vector.broadcast %473 : vector<2x1x16xf32> to vector<2x4x16xf32>
    %475 = arith.mulf %474, %466 : vector<2x4x16xf32>
    %476 = arith.addf %463, %475 : vector<2x4x16xf32>
    %477 = arith.mulf %427, %441 : vector<2x4x16xf32>
    %478 = arith.mulf %433, %447 : vector<2x4x16xf32>
    %479 = arith.addf %477, %478 : vector<2x4x16xf32>
    %480 = arith.mulf %433, %441 : vector<2x4x16xf32>
    %481 = arith.mulf %427, %447 : vector<2x4x16xf32>
    %482 = arith.subf %480, %481 : vector<2x4x16xf32>
    %c0_117 = arith.constant 0 : index
    %c0_118 = arith.constant 0 : index
    %c1_119 = arith.constant 1 : index
    %c0_120 = arith.constant 0 : index
    %483 = vector.load %arg1[%c0_117, %c0_118, %c1_119, %c0_120] : memref<2x4x4x16xf32, #tpu.memory_space<vmem>>, vector<2x1x1x16xf32>
    %484 = vector.shape_cast %483 : vector<2x1x1x16xf32> to vector<2x1x16xf32>
    %c0_121 = arith.constant 0 : index
    %c1_122 = arith.constant 1 : index
    %c0_123 = arith.constant 0 : index
    %c0_124 = arith.constant 0 : index
    %485 = vector.load %arg1[%c0_121, %c1_122, %c0_123, %c0_124] : memref<2x4x4x16xf32, #tpu.memory_space<vmem>>, vector<2x1x1x16xf32>
    %486 = vector.shape_cast %485 : vector<2x1x1x16xf32> to vector<2x1x16xf32>
    %487 = arith.addf %484, %486 : vector<2x1x16xf32>
    %488 = vector.broadcast %487 : vector<2x1x16xf32> to vector<2x4x16xf32>
    %489 = arith.mulf %488, %479 : vector<2x4x16xf32>
    %490 = arith.addf %471, %489 : vector<2x4x16xf32>
    %c0_125 = arith.constant 0 : index
    %c0_126 = arith.constant 0 : index
    %c1_127 = arith.constant 1 : index
    %c0_128 = arith.constant 0 : index
    %491 = vector.load %arg2[%c0_125, %c0_126, %c1_127, %c0_128] : memref<2x4x4x16xf32, #tpu.memory_space<vmem>>, vector<2x1x1x16xf32>
    %492 = vector.shape_cast %491 : vector<2x1x1x16xf32> to vector<2x1x16xf32>
    %c0_129 = arith.constant 0 : index
    %c1_130 = arith.constant 1 : index
    %c0_131 = arith.constant 0 : index
    %c0_132 = arith.constant 0 : index
    %493 = vector.load %arg2[%c0_129, %c1_130, %c0_131, %c0_132] : memref<2x4x4x16xf32, #tpu.memory_space<vmem>>, vector<2x1x1x16xf32>
    %494 = vector.shape_cast %493 : vector<2x1x1x16xf32> to vector<2x1x16xf32>
    %495 = arith.subf %492, %494 : vector<2x1x16xf32>
    %496 = vector.broadcast %495 : vector<2x1x16xf32> to vector<2x4x16xf32>
    %497 = arith.mulf %496, %482 : vector<2x4x16xf32>
    %498 = arith.addf %490, %497 : vector<2x4x16xf32>
    %c0_133 = arith.constant 0 : index
    %c0_134 = arith.constant 0 : index
    %c1_135 = arith.constant 1 : index
    %c0_136 = arith.constant 0 : index
    %499 = vector.load %arg3[%c0_133, %c0_134, %c1_135, %c0_136] : memref<2x4x4x16xf32, #tpu.memory_space<vmem>>, vector<2x1x1x16xf32>
    %500 = vector.shape_cast %499 : vector<2x1x1x16xf32> to vector<2x1x16xf32>
    %c0_137 = arith.constant 0 : index
    %c1_138 = arith.constant 1 : index
    %c0_139 = arith.constant 0 : index
    %c0_140 = arith.constant 0 : index
    %501 = vector.load %arg3[%c0_137, %c1_138, %c0_139, %c0_140] : memref<2x4x4x16xf32, #tpu.memory_space<vmem>>, vector<2x1x1x16xf32>
    %502 = vector.shape_cast %501 : vector<2x1x1x16xf32> to vector<2x1x16xf32>
    %503 = arith.addf %500, %502 : vector<2x1x16xf32>
    %504 = vector.broadcast %503 : vector<2x1x16xf32> to vector<2x4x16xf32>
    %505 = arith.mulf %504, %479 : vector<2x4x16xf32>
    %506 = arith.addf %476, %505 : vector<2x4x16xf32>
    %c0_141 = arith.constant 0 : index
    %c0_142 = arith.constant 0 : index
    %c1_143 = arith.constant 1 : index
    %c0_144 = arith.constant 0 : index
    %507 = vector.load %arg4[%c0_141, %c0_142, %c1_143, %c0_144] : memref<2x4x4x16xf32, #tpu.memory_space<vmem>>, vector<2x1x1x16xf32>
    %508 = vector.shape_cast %507 : vector<2x1x1x16xf32> to vector<2x1x16xf32>
    %c0_145 = arith.constant 0 : index
    %c1_146 = arith.constant 1 : index
    %c0_147 = arith.constant 0 : index
    %c0_148 = arith.constant 0 : index
    %509 = vector.load %arg4[%c0_145, %c1_146, %c0_147, %c0_148] : memref<2x4x4x16xf32, #tpu.memory_space<vmem>>, vector<2x1x1x16xf32>
    %510 = vector.shape_cast %509 : vector<2x1x1x16xf32> to vector<2x1x16xf32>
    %511 = arith.subf %508, %510 : vector<2x1x16xf32>
    %512 = vector.broadcast %511 : vector<2x1x16xf32> to vector<2x4x16xf32>
    %513 = arith.mulf %512, %482 : vector<2x4x16xf32>
    %514 = arith.addf %506, %513 : vector<2x4x16xf32>
    %515 = arith.mulf %427, %455 : vector<2x4x16xf32>
    %516 = arith.mulf %433, %461 : vector<2x4x16xf32>
    %517 = arith.addf %515, %516 : vector<2x4x16xf32>
    %518 = arith.mulf %433, %455 : vector<2x4x16xf32>
    %519 = arith.mulf %427, %461 : vector<2x4x16xf32>
    %520 = arith.subf %518, %519 : vector<2x4x16xf32>
    %c0_149 = arith.constant 0 : index
    %c0_150 = arith.constant 0 : index
    %c2_151 = arith.constant 2 : index
    %c0_152 = arith.constant 0 : index
    %521 = vector.load %arg1[%c0_149, %c0_150, %c2_151, %c0_152] : memref<2x4x4x16xf32, #tpu.memory_space<vmem>>, vector<2x1x1x16xf32>
    %522 = vector.shape_cast %521 : vector<2x1x1x16xf32> to vector<2x1x16xf32>
    %c0_153 = arith.constant 0 : index
    %c2_154 = arith.constant 2 : index
    %c0_155 = arith.constant 0 : index
    %c0_156 = arith.constant 0 : index
    %523 = vector.load %arg1[%c0_153, %c2_154, %c0_155, %c0_156] : memref<2x4x4x16xf32, #tpu.memory_space<vmem>>, vector<2x1x1x16xf32>
    %524 = vector.shape_cast %523 : vector<2x1x1x16xf32> to vector<2x1x16xf32>
    %525 = arith.addf %522, %524 : vector<2x1x16xf32>
    %526 = vector.broadcast %525 : vector<2x1x16xf32> to vector<2x4x16xf32>
    %527 = arith.mulf %526, %517 : vector<2x4x16xf32>
    %528 = arith.addf %498, %527 : vector<2x4x16xf32>
    %c0_157 = arith.constant 0 : index
    %c0_158 = arith.constant 0 : index
    %c2_159 = arith.constant 2 : index
    %c0_160 = arith.constant 0 : index
    %529 = vector.load %arg2[%c0_157, %c0_158, %c2_159, %c0_160] : memref<2x4x4x16xf32, #tpu.memory_space<vmem>>, vector<2x1x1x16xf32>
    %530 = vector.shape_cast %529 : vector<2x1x1x16xf32> to vector<2x1x16xf32>
    %c0_161 = arith.constant 0 : index
    %c2_162 = arith.constant 2 : index
    %c0_163 = arith.constant 0 : index
    %c0_164 = arith.constant 0 : index
    %531 = vector.load %arg2[%c0_161, %c2_162, %c0_163, %c0_164] : memref<2x4x4x16xf32, #tpu.memory_space<vmem>>, vector<2x1x1x16xf32>
    %532 = vector.shape_cast %531 : vector<2x1x1x16xf32> to vector<2x1x16xf32>
    %533 = arith.subf %530, %532 : vector<2x1x16xf32>
    %534 = vector.broadcast %533 : vector<2x1x16xf32> to vector<2x4x16xf32>
    %535 = arith.mulf %534, %520 : vector<2x4x16xf32>
    %536 = arith.addf %528, %535 : vector<2x4x16xf32>
    %c0_165 = arith.constant 0 : index
    %c0_166 = arith.constant 0 : index
    %c2_167 = arith.constant 2 : index
    %c0_168 = arith.constant 0 : index
    %537 = vector.load %arg3[%c0_165, %c0_166, %c2_167, %c0_168] : memref<2x4x4x16xf32, #tpu.memory_space<vmem>>, vector<2x1x1x16xf32>
    %538 = vector.shape_cast %537 : vector<2x1x1x16xf32> to vector<2x1x16xf32>
    %c0_169 = arith.constant 0 : index
    %c2_170 = arith.constant 2 : index
    %c0_171 = arith.constant 0 : index
    %c0_172 = arith.constant 0 : index
    %539 = vector.load %arg3[%c0_169, %c2_170, %c0_171, %c0_172] : memref<2x4x4x16xf32, #tpu.memory_space<vmem>>, vector<2x1x1x16xf32>
    %540 = vector.shape_cast %539 : vector<2x1x1x16xf32> to vector<2x1x16xf32>
    %541 = arith.addf %538, %540 : vector<2x1x16xf32>
    %542 = vector.broadcast %541 : vector<2x1x16xf32> to vector<2x4x16xf32>
    %543 = arith.mulf %542, %517 : vector<2x4x16xf32>
    %544 = arith.addf %514, %543 : vector<2x4x16xf32>
    %c0_173 = arith.constant 0 : index
    %c0_174 = arith.constant 0 : index
    %c2_175 = arith.constant 2 : index
    %c0_176 = arith.constant 0 : index
    %545 = vector.load %arg4[%c0_173, %c0_174, %c2_175, %c0_176] : memref<2x4x4x16xf32, #tpu.memory_space<vmem>>, vector<2x1x1x16xf32>
    %546 = vector.shape_cast %545 : vector<2x1x1x16xf32> to vector<2x1x16xf32>
    %c0_177 = arith.constant 0 : index
    %c2_178 = arith.constant 2 : index
    %c0_179 = arith.constant 0 : index
    %c0_180 = arith.constant 0 : index
    %547 = vector.load %arg4[%c0_177, %c2_178, %c0_179, %c0_180] : memref<2x4x4x16xf32, #tpu.memory_space<vmem>>, vector<2x1x1x16xf32>
    %548 = vector.shape_cast %547 : vector<2x1x1x16xf32> to vector<2x1x16xf32>
    %549 = arith.subf %546, %548 : vector<2x1x16xf32>
    %550 = vector.broadcast %549 : vector<2x1x16xf32> to vector<2x4x16xf32>
    %551 = arith.mulf %550, %520 : vector<2x4x16xf32>
    %552 = arith.addf %544, %551 : vector<2x4x16xf32>
    %553 = arith.mulf %427, %414 : vector<2x4x16xf32>
    %554 = arith.mulf %433, %419 : vector<2x4x16xf32>
    %555 = arith.addf %553, %554 : vector<2x4x16xf32>
    %556 = arith.mulf %433, %414 : vector<2x4x16xf32>
    %557 = arith.mulf %427, %419 : vector<2x4x16xf32>
    %558 = arith.subf %556, %557 : vector<2x4x16xf32>
    %c0_181 = arith.constant 0 : index
    %c0_182 = arith.constant 0 : index
    %c3_183 = arith.constant 3 : index
    %c0_184 = arith.constant 0 : index
    %559 = vector.load %arg1[%c0_181, %c0_182, %c3_183, %c0_184] : memref<2x4x4x16xf32, #tpu.memory_space<vmem>>, vector<2x1x1x16xf32>
    %560 = vector.shape_cast %559 : vector<2x1x1x16xf32> to vector<2x1x16xf32>
    %c0_185 = arith.constant 0 : index
    %c3_186 = arith.constant 3 : index
    %c0_187 = arith.constant 0 : index
    %c0_188 = arith.constant 0 : index
    %561 = vector.load %arg1[%c0_185, %c3_186, %c0_187, %c0_188] : memref<2x4x4x16xf32, #tpu.memory_space<vmem>>, vector<2x1x1x16xf32>
    %562 = vector.shape_cast %561 : vector<2x1x1x16xf32> to vector<2x1x16xf32>
    %563 = arith.addf %560, %562 : vector<2x1x16xf32>
    %564 = vector.broadcast %563 : vector<2x1x16xf32> to vector<2x4x16xf32>
    %565 = arith.mulf %564, %555 : vector<2x4x16xf32>
    %566 = arith.addf %536, %565 : vector<2x4x16xf32>
    %c0_189 = arith.constant 0 : index
    %c0_190 = arith.constant 0 : index
    %c3_191 = arith.constant 3 : index
    %c0_192 = arith.constant 0 : index
    %567 = vector.load %arg2[%c0_189, %c0_190, %c3_191, %c0_192] : memref<2x4x4x16xf32, #tpu.memory_space<vmem>>, vector<2x1x1x16xf32>
    %568 = vector.shape_cast %567 : vector<2x1x1x16xf32> to vector<2x1x16xf32>
    %c0_193 = arith.constant 0 : index
    %c3_194 = arith.constant 3 : index
    %c0_195 = arith.constant 0 : index
    %c0_196 = arith.constant 0 : index
    %569 = vector.load %arg2[%c0_193, %c3_194, %c0_195, %c0_196] : memref<2x4x4x16xf32, #tpu.memory_space<vmem>>, vector<2x1x1x16xf32>
    %570 = vector.shape_cast %569 : vector<2x1x1x16xf32> to vector<2x1x16xf32>
    %571 = arith.subf %568, %570 : vector<2x1x16xf32>
    %572 = vector.broadcast %571 : vector<2x1x16xf32> to vector<2x4x16xf32>
    %573 = arith.mulf %572, %558 : vector<2x4x16xf32>
    %574 = arith.addf %566, %573 : vector<2x4x16xf32>
    %c0_197 = arith.constant 0 : index
    %c0_198 = arith.constant 0 : index
    %c3_199 = arith.constant 3 : index
    %c0_200 = arith.constant 0 : index
    %575 = vector.load %arg3[%c0_197, %c0_198, %c3_199, %c0_200] : memref<2x4x4x16xf32, #tpu.memory_space<vmem>>, vector<2x1x1x16xf32>
    %576 = vector.shape_cast %575 : vector<2x1x1x16xf32> to vector<2x1x16xf32>
    %c0_201 = arith.constant 0 : index
    %c3_202 = arith.constant 3 : index
    %c0_203 = arith.constant 0 : index
    %c0_204 = arith.constant 0 : index
    %577 = vector.load %arg3[%c0_201, %c3_202, %c0_203, %c0_204] : memref<2x4x4x16xf32, #tpu.memory_space<vmem>>, vector<2x1x1x16xf32>
    %578 = vector.shape_cast %577 : vector<2x1x1x16xf32> to vector<2x1x16xf32>
    %579 = arith.addf %576, %578 : vector<2x1x16xf32>
    %580 = vector.broadcast %579 : vector<2x1x16xf32> to vector<2x4x16xf32>
    %581 = arith.mulf %580, %555 : vector<2x4x16xf32>
    %582 = arith.addf %552, %581 : vector<2x4x16xf32>
    %c0_205 = arith.constant 0 : index
    %c0_206 = arith.constant 0 : index
    %c3_207 = arith.constant 3 : index
    %c0_208 = arith.constant 0 : index
    %583 = vector.load %arg4[%c0_205, %c0_206, %c3_207, %c0_208] : memref<2x4x4x16xf32, #tpu.memory_space<vmem>>, vector<2x1x1x16xf32>
    %584 = vector.shape_cast %583 : vector<2x1x1x16xf32> to vector<2x1x16xf32>
    %c0_209 = arith.constant 0 : index
    %c3_210 = arith.constant 3 : index
    %c0_211 = arith.constant 0 : index
    %c0_212 = arith.constant 0 : index
    %585 = vector.load %arg4[%c0_209, %c3_210, %c0_211, %c0_212] : memref<2x4x4x16xf32, #tpu.memory_space<vmem>>, vector<2x1x1x16xf32>
    %586 = vector.shape_cast %585 : vector<2x1x1x16xf32> to vector<2x1x16xf32>
    %587 = arith.subf %584, %586 : vector<2x1x16xf32>
    %588 = vector.broadcast %587 : vector<2x1x16xf32> to vector<2x4x16xf32>
    %589 = arith.mulf %588, %558 : vector<2x4x16xf32>
    %590 = arith.addf %582, %589 : vector<2x4x16xf32>
    %591 = arith.mulf %441, %441 : vector<2x4x16xf32>
    %592 = arith.mulf %447, %447 : vector<2x4x16xf32>
    %593 = arith.addf %591, %592 : vector<2x4x16xf32>
    %c0_213 = arith.constant 0 : index
    %c1_214 = arith.constant 1 : index
    %c1_215 = arith.constant 1 : index
    %c0_216 = arith.constant 0 : index
    %594 = vector.load %arg1[%c0_213, %c1_214, %c1_215, %c0_216] : memref<2x4x4x16xf32, #tpu.memory_space<vmem>>, vector<2x1x1x16xf32>
    %595 = vector.shape_cast %594 : vector<2x1x1x16xf32> to vector<2x1x16xf32>
    %596 = vector.broadcast %595 : vector<2x1x16xf32> to vector<2x4x16xf32>
    %597 = arith.mulf %596, %593 : vector<2x4x16xf32>
    %598 = arith.addf %574, %597 : vector<2x4x16xf32>
    %c0_217 = arith.constant 0 : index
    %c1_218 = arith.constant 1 : index
    %c1_219 = arith.constant 1 : index
    %c0_220 = arith.constant 0 : index
    %599 = vector.load %arg3[%c0_217, %c1_218, %c1_219, %c0_220] : memref<2x4x4x16xf32, #tpu.memory_space<vmem>>, vector<2x1x1x16xf32>
    %600 = vector.shape_cast %599 : vector<2x1x1x16xf32> to vector<2x1x16xf32>
    %601 = vector.broadcast %600 : vector<2x1x16xf32> to vector<2x4x16xf32>
    %602 = arith.mulf %601, %593 : vector<2x4x16xf32>
    %603 = arith.addf %590, %602 : vector<2x4x16xf32>
    %604 = arith.mulf %441, %455 : vector<2x4x16xf32>
    %605 = arith.mulf %447, %461 : vector<2x4x16xf32>
    %606 = arith.addf %604, %605 : vector<2x4x16xf32>
    %607 = arith.mulf %447, %455 : vector<2x4x16xf32>
    %608 = arith.mulf %441, %461 : vector<2x4x16xf32>
    %609 = arith.subf %607, %608 : vector<2x4x16xf32>
    %c0_221 = arith.constant 0 : index
    %c1_222 = arith.constant 1 : index
    %c2_223 = arith.constant 2 : index
    %c0_224 = arith.constant 0 : index
    %610 = vector.load %arg1[%c0_221, %c1_222, %c2_223, %c0_224] : memref<2x4x4x16xf32, #tpu.memory_space<vmem>>, vector<2x1x1x16xf32>
    %611 = vector.shape_cast %610 : vector<2x1x1x16xf32> to vector<2x1x16xf32>
    %c0_225 = arith.constant 0 : index
    %c2_226 = arith.constant 2 : index
    %c1_227 = arith.constant 1 : index
    %c0_228 = arith.constant 0 : index
    %612 = vector.load %arg1[%c0_225, %c2_226, %c1_227, %c0_228] : memref<2x4x4x16xf32, #tpu.memory_space<vmem>>, vector<2x1x1x16xf32>
    %613 = vector.shape_cast %612 : vector<2x1x1x16xf32> to vector<2x1x16xf32>
    %614 = arith.addf %611, %613 : vector<2x1x16xf32>
    %615 = vector.broadcast %614 : vector<2x1x16xf32> to vector<2x4x16xf32>
    %616 = arith.mulf %615, %606 : vector<2x4x16xf32>
    %617 = arith.addf %598, %616 : vector<2x4x16xf32>
    %c0_229 = arith.constant 0 : index
    %c1_230 = arith.constant 1 : index
    %c2_231 = arith.constant 2 : index
    %c0_232 = arith.constant 0 : index
    %618 = vector.load %arg2[%c0_229, %c1_230, %c2_231, %c0_232] : memref<2x4x4x16xf32, #tpu.memory_space<vmem>>, vector<2x1x1x16xf32>
    %619 = vector.shape_cast %618 : vector<2x1x1x16xf32> to vector<2x1x16xf32>
    %c0_233 = arith.constant 0 : index
    %c2_234 = arith.constant 2 : index
    %c1_235 = arith.constant 1 : index
    %c0_236 = arith.constant 0 : index
    %620 = vector.load %arg2[%c0_233, %c2_234, %c1_235, %c0_236] : memref<2x4x4x16xf32, #tpu.memory_space<vmem>>, vector<2x1x1x16xf32>
    %621 = vector.shape_cast %620 : vector<2x1x1x16xf32> to vector<2x1x16xf32>
    %622 = arith.subf %619, %621 : vector<2x1x16xf32>
    %623 = vector.broadcast %622 : vector<2x1x16xf32> to vector<2x4x16xf32>
    %624 = arith.mulf %623, %609 : vector<2x4x16xf32>
    %625 = arith.addf %617, %624 : vector<2x4x16xf32>
    %c0_237 = arith.constant 0 : index
    %c1_238 = arith.constant 1 : index
    %c2_239 = arith.constant 2 : index
    %c0_240 = arith.constant 0 : index
    %626 = vector.load %arg3[%c0_237, %c1_238, %c2_239, %c0_240] : memref<2x4x4x16xf32, #tpu.memory_space<vmem>>, vector<2x1x1x16xf32>
    %627 = vector.shape_cast %626 : vector<2x1x1x16xf32> to vector<2x1x16xf32>
    %c0_241 = arith.constant 0 : index
    %c2_242 = arith.constant 2 : index
    %c1_243 = arith.constant 1 : index
    %c0_244 = arith.constant 0 : index
    %628 = vector.load %arg3[%c0_241, %c2_242, %c1_243, %c0_244] : memref<2x4x4x16xf32, #tpu.memory_space<vmem>>, vector<2x1x1x16xf32>
    %629 = vector.shape_cast %628 : vector<2x1x1x16xf32> to vector<2x1x16xf32>
    %630 = arith.addf %627, %629 : vector<2x1x16xf32>
    %631 = vector.broadcast %630 : vector<2x1x16xf32> to vector<2x4x16xf32>
    %632 = arith.mulf %631, %606 : vector<2x4x16xf32>
    %633 = arith.addf %603, %632 : vector<2x4x16xf32>
    %c0_245 = arith.constant 0 : index
    %c1_246 = arith.constant 1 : index
    %c2_247 = arith.constant 2 : index
    %c0_248 = arith.constant 0 : index
    %634 = vector.load %arg4[%c0_245, %c1_246, %c2_247, %c0_248] : memref<2x4x4x16xf32, #tpu.memory_space<vmem>>, vector<2x1x1x16xf32>
    %635 = vector.shape_cast %634 : vector<2x1x1x16xf32> to vector<2x1x16xf32>
    %c0_249 = arith.constant 0 : index
    %c2_250 = arith.constant 2 : index
    %c1_251 = arith.constant 1 : index
    %c0_252 = arith.constant 0 : index
    %636 = vector.load %arg4[%c0_249, %c2_250, %c1_251, %c0_252] : memref<2x4x4x16xf32, #tpu.memory_space<vmem>>, vector<2x1x1x16xf32>
    %637 = vector.shape_cast %636 : vector<2x1x1x16xf32> to vector<2x1x16xf32>
    %638 = arith.subf %635, %637 : vector<2x1x16xf32>
    %639 = vector.broadcast %638 : vector<2x1x16xf32> to vector<2x4x16xf32>
    %640 = arith.mulf %639, %609 : vector<2x4x16xf32>
    %641 = arith.addf %633, %640 : vector<2x4x16xf32>
    %642 = arith.mulf %441, %414 : vector<2x4x16xf32>
    %643 = arith.mulf %447, %419 : vector<2x4x16xf32>
    %644 = arith.addf %642, %643 : vector<2x4x16xf32>
    %645 = arith.mulf %447, %414 : vector<2x4x16xf32>
    %646 = arith.mulf %441, %419 : vector<2x4x16xf32>
    %647 = arith.subf %645, %646 : vector<2x4x16xf32>
    %c0_253 = arith.constant 0 : index
    %c1_254 = arith.constant 1 : index
    %c3_255 = arith.constant 3 : index
    %c0_256 = arith.constant 0 : index
    %648 = vector.load %arg1[%c0_253, %c1_254, %c3_255, %c0_256] : memref<2x4x4x16xf32, #tpu.memory_space<vmem>>, vector<2x1x1x16xf32>
    %649 = vector.shape_cast %648 : vector<2x1x1x16xf32> to vector<2x1x16xf32>
    %c0_257 = arith.constant 0 : index
    %c3_258 = arith.constant 3 : index
    %c1_259 = arith.constant 1 : index
    %c0_260 = arith.constant 0 : index
    %650 = vector.load %arg1[%c0_257, %c3_258, %c1_259, %c0_260] : memref<2x4x4x16xf32, #tpu.memory_space<vmem>>, vector<2x1x1x16xf32>
    %651 = vector.shape_cast %650 : vector<2x1x1x16xf32> to vector<2x1x16xf32>
    %652 = arith.addf %649, %651 : vector<2x1x16xf32>
    %653 = vector.broadcast %652 : vector<2x1x16xf32> to vector<2x4x16xf32>
    %654 = arith.mulf %653, %644 : vector<2x4x16xf32>
    %655 = arith.addf %625, %654 : vector<2x4x16xf32>
    %c0_261 = arith.constant 0 : index
    %c1_262 = arith.constant 1 : index
    %c3_263 = arith.constant 3 : index
    %c0_264 = arith.constant 0 : index
    %656 = vector.load %arg2[%c0_261, %c1_262, %c3_263, %c0_264] : memref<2x4x4x16xf32, #tpu.memory_space<vmem>>, vector<2x1x1x16xf32>
    %657 = vector.shape_cast %656 : vector<2x1x1x16xf32> to vector<2x1x16xf32>
    %c0_265 = arith.constant 0 : index
    %c3_266 = arith.constant 3 : index
    %c1_267 = arith.constant 1 : index
    %c0_268 = arith.constant 0 : index
    %658 = vector.load %arg2[%c0_265, %c3_266, %c1_267, %c0_268] : memref<2x4x4x16xf32, #tpu.memory_space<vmem>>, vector<2x1x1x16xf32>
    %659 = vector.shape_cast %658 : vector<2x1x1x16xf32> to vector<2x1x16xf32>
    %660 = arith.subf %657, %659 : vector<2x1x16xf32>
    %661 = vector.broadcast %660 : vector<2x1x16xf32> to vector<2x4x16xf32>
    %662 = arith.mulf %661, %647 : vector<2x4x16xf32>
    %663 = arith.addf %655, %662 : vector<2x4x16xf32>
    %c0_269 = arith.constant 0 : index
    %c1_270 = arith.constant 1 : index
    %c3_271 = arith.constant 3 : index
    %c0_272 = arith.constant 0 : index
    %664 = vector.load %arg3[%c0_269, %c1_270, %c3_271, %c0_272] : memref<2x4x4x16xf32, #tpu.memory_space<vmem>>, vector<2x1x1x16xf32>
    %665 = vector.shape_cast %664 : vector<2x1x1x16xf32> to vector<2x1x16xf32>
    %c0_273 = arith.constant 0 : index
    %c3_274 = arith.constant 3 : index
    %c1_275 = arith.constant 1 : index
    %c0_276 = arith.constant 0 : index
    %666 = vector.load %arg3[%c0_273, %c3_274, %c1_275, %c0_276] : memref<2x4x4x16xf32, #tpu.memory_space<vmem>>, vector<2x1x1x16xf32>
    %667 = vector.shape_cast %666 : vector<2x1x1x16xf32> to vector<2x1x16xf32>
    %668 = arith.addf %665, %667 : vector<2x1x16xf32>
    %669 = vector.broadcast %668 : vector<2x1x16xf32> to vector<2x4x16xf32>
    %670 = arith.mulf %669, %644 : vector<2x4x16xf32>
    %671 = arith.addf %641, %670 : vector<2x4x16xf32>
    %c0_277 = arith.constant 0 : index
    %c1_278 = arith.constant 1 : index
    %c3_279 = arith.constant 3 : index
    %c0_280 = arith.constant 0 : index
    %672 = vector.load %arg4[%c0_277, %c1_278, %c3_279, %c0_280] : memref<2x4x4x16xf32, #tpu.memory_space<vmem>>, vector<2x1x1x16xf32>
    %673 = vector.shape_cast %672 : vector<2x1x1x16xf32> to vector<2x1x16xf32>
    %c0_281 = arith.constant 0 : index
    %c3_282 = arith.constant 3 : index
    %c1_283 = arith.constant 1 : index
    %c0_284 = arith.constant 0 : index
    %674 = vector.load %arg4[%c0_281, %c3_282, %c1_283, %c0_284] : memref<2x4x4x16xf32, #tpu.memory_space<vmem>>, vector<2x1x1x16xf32>
    %675 = vector.shape_cast %674 : vector<2x1x1x16xf32> to vector<2x1x16xf32>
    %676 = arith.subf %673, %675 : vector<2x1x16xf32>
    %677 = vector.broadcast %676 : vector<2x1x16xf32> to vector<2x4x16xf32>
    %678 = arith.mulf %677, %647 : vector<2x4x16xf32>
    %679 = arith.addf %671, %678 : vector<2x4x16xf32>
    %680 = arith.mulf %455, %455 : vector<2x4x16xf32>
    %681 = arith.mulf %461, %461 : vector<2x4x16xf32>
    %682 = arith.addf %680, %681 : vector<2x4x16xf32>
    %c0_285 = arith.constant 0 : index
    %c2_286 = arith.constant 2 : index
    %c2_287 = arith.constant 2 : index
    %c0_288 = arith.constant 0 : index
    %683 = vector.load %arg1[%c0_285, %c2_286, %c2_287, %c0_288] : memref<2x4x4x16xf32, #tpu.memory_space<vmem>>, vector<2x1x1x16xf32>
    %684 = vector.shape_cast %683 : vector<2x1x1x16xf32> to vector<2x1x16xf32>
    %685 = vector.broadcast %684 : vector<2x1x16xf32> to vector<2x4x16xf32>
    %686 = arith.mulf %685, %682 : vector<2x4x16xf32>
    %687 = arith.addf %663, %686 : vector<2x4x16xf32>
    %c0_289 = arith.constant 0 : index
    %c2_290 = arith.constant 2 : index
    %c2_291 = arith.constant 2 : index
    %c0_292 = arith.constant 0 : index
    %688 = vector.load %arg3[%c0_289, %c2_290, %c2_291, %c0_292] : memref<2x4x4x16xf32, #tpu.memory_space<vmem>>, vector<2x1x1x16xf32>
    %689 = vector.shape_cast %688 : vector<2x1x1x16xf32> to vector<2x1x16xf32>
    %690 = vector.broadcast %689 : vector<2x1x16xf32> to vector<2x4x16xf32>
    %691 = arith.mulf %690, %682 : vector<2x4x16xf32>
    %692 = arith.addf %679, %691 : vector<2x4x16xf32>
    %693 = arith.mulf %455, %414 : vector<2x4x16xf32>
    %694 = arith.mulf %461, %419 : vector<2x4x16xf32>
    %695 = arith.addf %693, %694 : vector<2x4x16xf32>
    %696 = arith.mulf %461, %414 : vector<2x4x16xf32>
    %697 = arith.mulf %455, %419 : vector<2x4x16xf32>
    %698 = arith.subf %696, %697 : vector<2x4x16xf32>
    %c0_293 = arith.constant 0 : index
    %c2_294 = arith.constant 2 : index
    %c3_295 = arith.constant 3 : index
    %c0_296 = arith.constant 0 : index
    %699 = vector.load %arg1[%c0_293, %c2_294, %c3_295, %c0_296] : memref<2x4x4x16xf32, #tpu.memory_space<vmem>>, vector<2x1x1x16xf32>
    %700 = vector.shape_cast %699 : vector<2x1x1x16xf32> to vector<2x1x16xf32>
    %c0_297 = arith.constant 0 : index
    %c3_298 = arith.constant 3 : index
    %c2_299 = arith.constant 2 : index
    %c0_300 = arith.constant 0 : index
    %701 = vector.load %arg1[%c0_297, %c3_298, %c2_299, %c0_300] : memref<2x4x4x16xf32, #tpu.memory_space<vmem>>, vector<2x1x1x16xf32>
    %702 = vector.shape_cast %701 : vector<2x1x1x16xf32> to vector<2x1x16xf32>
    %703 = arith.addf %700, %702 : vector<2x1x16xf32>
    %704 = vector.broadcast %703 : vector<2x1x16xf32> to vector<2x4x16xf32>
    %705 = arith.mulf %704, %695 : vector<2x4x16xf32>
    %706 = arith.addf %687, %705 : vector<2x4x16xf32>
    %c0_301 = arith.constant 0 : index
    %c2_302 = arith.constant 2 : index
    %c3_303 = arith.constant 3 : index
    %c0_304 = arith.constant 0 : index
    %707 = vector.load %arg2[%c0_301, %c2_302, %c3_303, %c0_304] : memref<2x4x4x16xf32, #tpu.memory_space<vmem>>, vector<2x1x1x16xf32>
    %708 = vector.shape_cast %707 : vector<2x1x1x16xf32> to vector<2x1x16xf32>
    %c0_305 = arith.constant 0 : index
    %c3_306 = arith.constant 3 : index
    %c2_307 = arith.constant 2 : index
    %c0_308 = arith.constant 0 : index
    %709 = vector.load %arg2[%c0_305, %c3_306, %c2_307, %c0_308] : memref<2x4x4x16xf32, #tpu.memory_space<vmem>>, vector<2x1x1x16xf32>
    %710 = vector.shape_cast %709 : vector<2x1x1x16xf32> to vector<2x1x16xf32>
    %711 = arith.subf %708, %710 : vector<2x1x16xf32>
    %712 = vector.broadcast %711 : vector<2x1x16xf32> to vector<2x4x16xf32>
    %713 = arith.mulf %712, %698 : vector<2x4x16xf32>
    %714 = arith.addf %706, %713 : vector<2x4x16xf32>
    %c0_309 = arith.constant 0 : index
    %c2_310 = arith.constant 2 : index
    %c3_311 = arith.constant 3 : index
    %c0_312 = arith.constant 0 : index
    %715 = vector.load %arg3[%c0_309, %c2_310, %c3_311, %c0_312] : memref<2x4x4x16xf32, #tpu.memory_space<vmem>>, vector<2x1x1x16xf32>
    %716 = vector.shape_cast %715 : vector<2x1x1x16xf32> to vector<2x1x16xf32>
    %c0_313 = arith.constant 0 : index
    %c3_314 = arith.constant 3 : index
    %c2_315 = arith.constant 2 : index
    %c0_316 = arith.constant 0 : index
    %717 = vector.load %arg3[%c0_313, %c3_314, %c2_315, %c0_316] : memref<2x4x4x16xf32, #tpu.memory_space<vmem>>, vector<2x1x1x16xf32>
    %718 = vector.shape_cast %717 : vector<2x1x1x16xf32> to vector<2x1x16xf32>
    %719 = arith.addf %716, %718 : vector<2x1x16xf32>
    %720 = vector.broadcast %719 : vector<2x1x16xf32> to vector<2x4x16xf32>
    %721 = arith.mulf %720, %695 : vector<2x4x16xf32>
    %722 = arith.addf %692, %721 : vector<2x4x16xf32>
    %c0_317 = arith.constant 0 : index
    %c2_318 = arith.constant 2 : index
    %c3_319 = arith.constant 3 : index
    %c0_320 = arith.constant 0 : index
    %723 = vector.load %arg4[%c0_317, %c2_318, %c3_319, %c0_320] : memref<2x4x4x16xf32, #tpu.memory_space<vmem>>, vector<2x1x1x16xf32>
    %724 = vector.shape_cast %723 : vector<2x1x1x16xf32> to vector<2x1x16xf32>
    %c0_321 = arith.constant 0 : index
    %c3_322 = arith.constant 3 : index
    %c2_323 = arith.constant 2 : index
    %c0_324 = arith.constant 0 : index
    %725 = vector.load %arg4[%c0_321, %c3_322, %c2_323, %c0_324] : memref<2x4x4x16xf32, #tpu.memory_space<vmem>>, vector<2x1x1x16xf32>
    %726 = vector.shape_cast %725 : vector<2x1x1x16xf32> to vector<2x1x16xf32>
    %727 = arith.subf %724, %726 : vector<2x1x16xf32>
    %728 = vector.broadcast %727 : vector<2x1x16xf32> to vector<2x4x16xf32>
    %729 = arith.mulf %728, %698 : vector<2x4x16xf32>
    %730 = arith.addf %722, %729 : vector<2x4x16xf32>
    %731 = arith.mulf %414, %414 : vector<2x4x16xf32>
    %732 = arith.mulf %419, %419 : vector<2x4x16xf32>
    %733 = arith.addf %731, %732 : vector<2x4x16xf32>
    %c0_325 = arith.constant 0 : index
    %c3_326 = arith.constant 3 : index
    %c3_327 = arith.constant 3 : index
    %c0_328 = arith.constant 0 : index
    %734 = vector.load %arg1[%c0_325, %c3_326, %c3_327, %c0_328] : memref<2x4x4x16xf32, #tpu.memory_space<vmem>>, vector<2x1x1x16xf32>
    %735 = vector.shape_cast %734 : vector<2x1x1x16xf32> to vector<2x1x16xf32>
    %736 = vector.broadcast %735 : vector<2x1x16xf32> to vector<2x4x16xf32>
    %737 = arith.mulf %736, %733 : vector<2x4x16xf32>
    %738 = arith.addf %714, %737 : vector<2x4x16xf32>
    %c0_329 = arith.constant 0 : index
    %c3_330 = arith.constant 3 : index
    %c3_331 = arith.constant 3 : index
    %c0_332 = arith.constant 0 : index
    %739 = vector.load %arg3[%c0_329, %c3_330, %c3_331, %c0_332] : memref<2x4x4x16xf32, #tpu.memory_space<vmem>>, vector<2x1x1x16xf32>
    %740 = vector.shape_cast %739 : vector<2x1x1x16xf32> to vector<2x1x16xf32>
    %741 = vector.broadcast %740 : vector<2x1x16xf32> to vector<2x4x16xf32>
    %742 = arith.mulf %741, %733 : vector<2x4x16xf32>
    %743 = arith.addf %730, %742 : vector<2x4x16xf32>
    %cst_333 = arith.constant dense<0.000000e+00> : vector<2x4xf32>
    %744 = vector.multi_reduction <add>, %738, %cst_333 [2] : vector<2x4x16xf32> to vector<2x4xf32>
    %745 = vector.shape_cast %744 : vector<2x4xf32> to vector<2x4x1xf32>
    %cst_334 = arith.constant dense<0.000000e+00> : vector<2x4xf32>
    %746 = vector.multi_reduction <add>, %743, %cst_334 [2] : vector<2x4x16xf32> to vector<2x4xf32>
    %747 = vector.shape_cast %746 : vector<2x4xf32> to vector<2x4x1xf32>
    %cst_335 = arith.constant 9.99999997E-7 : f32
    %748 = vector.broadcast %cst_335 : f32 to vector<2x4x1xf32>
    %749 = arith.maximumf %747, %748 : vector<2x4x1xf32>
    %750 = arith.divf %745, %749 : vector<2x4x1xf32>
    %751 = tpu.iota {dimensions = array<i32: 1>} : vector<2x4x1xi32>
    %cst_336 = arith.constant dense<0xFF800000> : vector<2x1xf32>
    %752 = vector.multi_reduction <maximumf>, %750, %cst_336 [1] : vector<2x4x1xf32> to vector<2x1xf32>
    %753 = vector.shape_cast %752 : vector<2x1xf32> to vector<2x1x1xf32>
    %754 = vector.broadcast %753 : vector<2x1x1xf32> to vector<2x4x1xf32>
    %755 = arith.cmpf oge, %750, %754 : vector<2x4x1xf32>
    %c4_i32 = arith.constant 4 : i32
    %756 = vector.broadcast %c4_i32 : i32 to vector<2x4x1xi32>
    %757 = arith.select %755, %751, %756 : vector<2x4x1xi1>, vector<2x4x1xi32>
    %cst_337 = arith.constant dense<2147483647> : vector<2x1xi32>
    %758 = vector.multi_reduction <minsi>, %757, %cst_337 [1] : vector<2x4x1xi32> to vector<2x1xi32>
    %759 = vector.shape_cast %758 : vector<2x1xi32> to vector<2x1x1xi32>
    %760 = vector.broadcast %759 : vector<2x1x1xi32> to vector<2x4x1xi32>
    %761 = arith.cmpi eq, %751, %760 : vector<2x4x1xi32>
    %762 = arith.extui %761 : vector<2x4x1xi1> to vector<2x4x1xi32>
    %763 = arith.sitofp %762 : vector<2x4x1xi32> to vector<2x4x1xf32>
    %764 = vector.shape_cast %427 : vector<2x4x16xf32> to vector<2x1x4x16xf32>
    %765 = vector.shape_cast %441 : vector<2x4x16xf32> to vector<2x1x4x16xf32>
    %766 = vector.shape_cast %455 : vector<2x4x16xf32> to vector<2x1x4x16xf32>
    %767 = vector.shape_cast %414 : vector<2x4x16xf32> to vector<2x1x4x16xf32>
    %768 = tpu.concatenate %764, %765, %766, %767 in 1 : vector<2x1x4x16xf32>, vector<2x1x4x16xf32>, vector<2x1x4x16xf32>, vector<2x1x4x16xf32> -> vector<2x4x4x16xf32>
    %769 = vector.shape_cast %433 : vector<2x4x16xf32> to vector<2x1x4x16xf32>
    %770 = vector.shape_cast %447 : vector<2x4x16xf32> to vector<2x1x4x16xf32>
    %771 = vector.shape_cast %461 : vector<2x4x16xf32> to vector<2x1x4x16xf32>
    %772 = vector.shape_cast %419 : vector<2x4x16xf32> to vector<2x1x4x16xf32>
    %773 = tpu.concatenate %769, %770, %771, %772 in 1 : vector<2x1x4x16xf32>, vector<2x1x4x16xf32>, vector<2x1x4x16xf32>, vector<2x1x4x16xf32> -> vector<2x4x4x16xf32>
    %774 = vector.shape_cast %763 : vector<2x4x1xf32> to vector<2x1x4x1xf32>
    %775 = vector.broadcast %774 : vector<2x1x4x1xf32> to vector<2x4x4x16xf32>
    %776 = arith.mulf %768, %775 : vector<2x4x4x16xf32>
    %cst_338 = arith.constant dense<0.000000e+00> : vector<2x4x16xf32>
    %777 = vector.multi_reduction <add>, %776, %cst_338 [2] : vector<2x4x4x16xf32> to vector<2x4x16xf32>
    %c0_339 = arith.constant 0 : index
    %c0_340 = arith.constant 0 : index
    %c0_341 = arith.constant 0 : index
    %778 = vector.load %arg5[%c0_339, %c0_340, %c0_341] : memref<2x4x16xf32, #tpu.memory_space<vmem>>, vector<2x4x16xf32>
    tpu.vector_store %arg5[%c0_339, %c0_340, %c0_341], %777 {strides = array<i32>} : memref<2x4x16xf32, #tpu.memory_space<vmem>>, vector<2x4x16xf32>,
    %779 = vector.broadcast %774 : vector<2x1x4x1xf32> to vector<2x4x4x16xf32>
    %780 = arith.mulf %773, %779 : vector<2x4x4x16xf32>
    %cst_342 = arith.constant dense<0.000000e+00> : vector<2x4x16xf32>
    %781 = vector.multi_reduction <add>, %780, %cst_342 [2] : vector<2x4x4x16xf32> to vector<2x4x16xf32>
    %c0_343 = arith.constant 0 : index
    %c0_344 = arith.constant 0 : index
    %c0_345 = arith.constant 0 : index
    %782 = vector.load %arg6[%c0_343, %c0_344, %c0_345] : memref<2x4x16xf32, #tpu.memory_space<vmem>>, vector<2x4x16xf32>
    tpu.vector_store %arg6[%c0_343, %c0_344, %c0_345], %781 {strides = array<i32>} : memref<2x4x16xf32, #tpu.memory_space<vmem>>, vector<2x4x16xf32>,
    return
  }
  func.func @transform_0(%arg0: i32) -> (i32, i32, i32, i32) {
    %c0_i32 = arith.constant 0 : i32
    %c0_i32_0 = arith.constant 0 : i32
    %c0_i32_1 = arith.constant 0 : i32
    %c0_i32_2 = arith.constant 0 : i32
    return %arg0, %c0_i32, %c0_i32_0, %c0_i32_1 : i32, i32, i32, i32
  }
  func.func @transform_1(%arg0: i32) -> (i32, i32, i32, i32) {
    %c0_i32 = arith.constant 0 : i32
    %c0_i32_0 = arith.constant 0 : i32
    %c0_i32_1 = arith.constant 0 : i32
    %c0_i32_2 = arith.constant 0 : i32
    return %arg0, %c0_i32, %c0_i32_0, %c0_i32_1 : i32, i32, i32, i32
  }
  func.func @transform_2(%arg0: i32) -> (i32, i32, i32, i32) {
    %c0_i32 = arith.constant 0 : i32
    %c0_i32_0 = arith.constant 0 : i32
    %c0_i32_1 = arith.constant 0 : i32
    %c0_i32_2 = arith.constant 0 : i32
    return %arg0, %c0_i32, %c0_i32_0, %c0_i32_1 : i32, i32, i32, i32
  }
  func.func @transform_3(%arg0: i32) -> (i32, i32, i32, i32) {
    %c0_i32 = arith.constant 0 : i32
    %c0_i32_0 = arith.constant 0 : i32
    %c0_i32_1 = arith.constant 0 : i32
    %c0_i32_2 = arith.constant 0 : i32
    return %arg0, %c0_i32, %c0_i32_0, %c0_i32_1 : i32, i32, i32, i32
  }
  func.func @transform_4(%arg0: i32) -> (i32, i32, i32) {
    %c0_i32 = arith.constant 0 : i32
    %c0_i32_0 = arith.constant 0 : i32
    %c0_i32_1 = arith.constant 0 : i32
    return %arg0, %c0_i32, %c0_i32_0 : i32, i32, i32
  }
  func.func @transform_5(%arg0: i32) -> (i32, i32, i32) {
    %c0_i32 = arith.constant 0 : i32
    %c0_i32_0 = arith.constant 0 : i32
    %c0_i32_1 = arith.constant 0 : i32
    return %arg0, %c0_i32, %c0_i32_0 : i32, i32, i32
  }
}

</mosaic_0001>

<llo_original>
// kernel: tpu_custom_call.1
$region0: #{tpu_custom_call.1}
  #allocation0 [shape = 'u32[]', space=smem, size = 0x4, offset = 0x4, fixed_abs, tag = 'smem constant byte address 0x4 - core index']
  #allocation1 [shape = 'u32[144,128]{1,0:T(1,128)}', space=vmem, size = 0x12000, scoped, tag = 'internal scratch']
  %s0 = inlined_call_operand.hbm [shape: f32[2,4,4,16], index: 0, kind: input, shape index: {}]
  %s1 = inlined_call_operand.hbm [shape: f32[2,4,4,16], index: 1, kind: input, shape index: {}]
  %s2 = inlined_call_operand.hbm [shape: f32[2,4,4,16], index: 2, kind: input, shape index: {}]
  %s3 = inlined_call_operand.hbm [shape: f32[2,4,4,16], index: 3, kind: input, shape index: {}]
  %s4 = inlined_call_operand.hbm [shape: f32[2,4,16], index: 4, kind: output, shape index: {0}]
  %s5 = inlined_call_operand.hbm [shape: f32[2,4,16], index: 5, kind: output, shape index: {1}]
  %6 = xla_tuple %s4, %s5
  %s7 = sld [smem:[#allocation0]]
  $region50: #{tpu_custom_call.1} parent=0
    _
  %s9 = ssub.s32 1, %s7
  %s10 = scalar_select 0, %s9, %s7
  $region1: #{tpu_custom_call.1} parent=0
    #allocation2 [shape = 'u8[16384]{0}', space=vmem, size = 0x4000, scoped, tag = 'input window, operand 0, single buffered']
    #allocation3 [shape = 's32[1]{0}', space=sflag, size = 0x4, scoped, tag = 'scoped memory for tpu_custom_call.1']
    #allocation4 [shape = 's32[1]{0}', space=sflag, size = 0x4, scoped, tag = 'scoped memory for tpu_custom_call.1']
    #allocation5 [shape = 'u8[16384]{0}', space=vmem, size = 0x4000, scoped, tag = 'input window, operand 1, single buffered']
    #allocation6 [shape = 's32[1]{0}', space=sflag, size = 0x4, scoped, tag = 'scoped memory for tpu_custom_call.1']
    #allocation7 [shape = 'u8[16384]{0}', space=vmem, size = 0x4000, scoped, tag = 'input window, operand 2, single buffered']
    #allocation8 [shape = 'u8[16384]{0}', space=vmem, size = 0x4000, scoped, tag = 'input window, operand 3, single buffered']
    #allocation9 [shape = 's32[1]{0}', space=sflag, size = 0x4, scoped, tag = 'scoped memory for tpu_custom_call.1']
    #allocation10 [shape = 'u8[4096]{0}', space=vmem, size = 0x1000, scoped, tag = 'output window, operand 0, single buffered']
    #allocation11 [shape = 'u8[4096]{0}', space=vmem, size = 0x1000, scoped, tag = 'output window, operand 1, single buffered']
    #allocation12 [shape = 's32[1]{0}', space=sflag, size = 0x4, scoped, tag = 'scoped memory for tpu_custom_call.1']
    %11 = vsyncpa [#allocation3], 0
    %12 = vsyncpa [#allocation6], 0
    %13 = vsyncpa [#allocation9], 0
    %14 = vsyncpa [#allocation4], 0
    %15 = vsyncpa [#allocation12], 0
    // Predicated region
    $region2: #{tpu_custom_call.1} parent=1 // pred_check
      _
    $region3: #{tpu_custom_call.1} parent=1 // pred_check_branch
      %17 = sbr.rel (0) target = $region5
    $region4: #{tpu_custom_call.1} parent=1 // pred_region
      %s19 = ssub.s32 512, 512
      %20 = vsyncadd [#allocation3], %s19
      %s21 = sshll.u32 [#allocation2], 4
      %s22 = int_to_ptr.vmem [resolvable:$true] %s21
      %27 = dma.hbm_to_vmem [thread:$0]  %s0, 512, %s22, [#allocation3], 64, 64, 4
    $region5: #{tpu_custom_call.1} parent=1 // pred_fallthru
      _
    // Predicated region
    $region6: #{tpu_custom_call.1} parent=1 // pred_check
      _
    $region7: #{tpu_custom_call.1} parent=1 // pred_check_branch
      %29 = sbr.rel (0) target = $region9
    $region8: #{tpu_custom_call.1} parent=1 // pred_region
      %s31 = ssub.s32 512, 512
      %32 = vsyncadd [#allocation6], %s31
      %s33 = sshll.u32 [#allocation5], 4
      %s34 = int_to_ptr.vmem [resolvable:$true] %s33
      %39 = dma.hbm_to_vmem [thread:$0]  %s1, 512, %s34, [#allocation6], 64, 64, 4
    $region9: #{tpu_custom_call.1} parent=1 // pred_fallthru
      _
    // Predicated region
    $region10: #{tpu_custom_call.1} parent=1 // pred_check
      _
    $region11: #{tpu_custom_call.1} parent=1 // pred_check_branch
      %41 = sbr.rel (0) target = $region13
    $region12: #{tpu_custom_call.1} parent=1 // pred_region
      %s43 = ssub.s32 512, 512
      %44 = vsyncadd [#allocation6], %s43
      %s45 = sshll.u32 [#allocation7], 4
      %s46 = int_to_ptr.vmem [resolvable:$true] %s45
      %51 = dma.hbm_to_vmem [thread:$0]  %s2, 512, %s46, [#allocation6], 64, 64, 4
    $region13: #{tpu_custom_call.1} parent=1 // pred_fallthru
      _
    // Predicated region
    $region14: #{tpu_custom_call.1} parent=1 // pred_check
      _
    $region15: #{tpu_custom_call.1} parent=1 // pred_check_branch
      %53 = sbr.rel (0) target = $region17
    $region16: #{tpu_custom_call.1} parent=1 // pred_region
      %s55 = ssub.s32 512, 512
      %56 = vsyncadd [#allocation9], %s55
      %s57 = sshll.u32 [#allocation8], 4
      %s58 = int_to_ptr.vmem [resolvable:$true] %s57
      %63 = dma.hbm_to_vmem [thread:$0]  %s3, 512, %s58, [#allocation9], 64, 64, 4
    $region17: #{tpu_custom_call.1} parent=1 // pred_fallthru
      _
    // Predicated region
    $region18: #{tpu_custom_call.1} parent=1 // pred_check
      _
    $region19: #{tpu_custom_call.1} parent=1 // pred_check_branch
      %65 = sbr.rel (0) target = $region21
    $region20: #{tpu_custom_call.1} parent=1 // pred_region
      %66 = dma.done [#allocation3], 512
    $region21: #{tpu_custom_call.1} parent=1 // pred_fallthru
      _
    // Predicated region
    $region22: #{tpu_custom_call.1} parent=1 // pred_check
      _
    $region23: #{tpu_custom_call.1} parent=1 // pred_check_branch
      %68 = sbr.rel (0) target = $region25
    $region24: #{tpu_custom_call.1} parent=1 // pred_region
      %69 = dma.done [#allocation6], 512
    $region25: #{tpu_custom_call.1} parent=1 // pred_fallthru
      _
    // Predicated region
    $region26: #{tpu_custom_call.1} parent=1 // pred_check
      _
    $region27: #{tpu_custom_call.1} parent=1 // pred_check_branch
      %71 = sbr.rel (0) target = $region29
    $region28: #{tpu_custom_call.1} parent=1 // pred_region
      %72 = dma.done [#allocation6], 512
    $region29: #{tpu_custom_call.1} parent=1 // pred_fallthru
      _
    // Predicated region
    $region30: #{tpu_custom_call.1} parent=1 // pred_check
      _
    $region31: #{tpu_custom_call.1} parent=1 // pred_check_branch
      %74 = sbr.rel (0) target = $region33
    $region32: #{tpu_custom_call.1} parent=1 // pred_region
      %75 = dma.done [#allocation9], 512
    $region33: #{tpu_custom_call.1} parent=1 // pred_fallthru
      _
    %v76 = vld [vmem:[#allocation2] sm:$0xf]
    %v77 = vld [vmem:[#allocation2 + $0x10] sm:$0xf]
    %v78 = vld [vmem:[#allocation7] sm:$0xf]
    %v79 = vld [vmem:[#allocation7 + $0x10] sm:$0xf]
    %v80 = vadd.f32 %v76, %v78
    %v81 = vadd.f32 %v77, %v79
    %s82 = scalar_lea.vmem [#allocation2], 4
    %v83 = vld [vmem:[%s82] sm:$0xf]
    %v84 = vld [vmem:[%s82 + $0x10] sm:$0xf]
    %s85 = scalar_lea.vmem [#allocation7], 4
    %v86 = vld [vmem:[%s85] sm:$0xf]
    %v87 = vld [vmem:[%s85 + $0x10] sm:$0xf]
    %v88 = vadd.f32 %v83, %v86
    %v89 = vadd.f32 %v84, %v87
    %s90 = scalar_lea.vmem [#allocation2], 8
    %v91 = vld [vmem:[%s90] sm:$0xf]
    %v92 = vld [vmem:[%s90 + $0x10] sm:$0xf]
    %s93 = scalar_lea.vmem [#allocation7], 8
    %v94 = vld [vmem:[%s93] sm:$0xf]
    %v95 = vld [vmem:[%s93 + $0x10] sm:$0xf]
    %v96 = vadd.f32 %v91, %v94
    %v97 = vadd.f32 %v92, %v95
    %s98 = scalar_lea.vmem [#allocation2], 12
    %v99 = vld [vmem:[%s98] sm:$0xf]
    %v100 = vld [vmem:[%s98 + $0x10] sm:$0xf]
    %s101 = scalar_lea.vmem [#allocation7], 12
    %v102 = vld [vmem:[%s101] sm:$0xf]
    %v103 = vld [vmem:[%s101 + $0x10] sm:$0xf]
    %v104 = vadd.f32 %v99, %v102
    %v105 = vadd.f32 %v100, %v103
    %v106 = vld [vmem:[#allocation5] sm:$0xf]
    %v107 = vld [vmem:[#allocation5 + $0x10] sm:$0xf]
    %v108 = vld [vmem:[#allocation8] sm:$0xf]
    %v109 = vld [vmem:[#allocation8 + $0x10] sm:$0xf]
    %v110 = vadd.f32 %v106, %v108
    %v111 = vadd.f32 %v107, %v109
    %s112 = scalar_lea.vmem [#allocation5], 4
    %v113 = vld [vmem:[%s112] sm:$0xf]
    %v114 = vld [vmem:[%s112 + $0x10] sm:$0xf]
    %s115 = scalar_lea.vmem [#allocation8], 4
    %v116 = vld [vmem:[%s115] sm:$0xf]
    %v117 = vld [vmem:[%s115 + $0x10] sm:$0xf]
    %v118 = vadd.f32 %v113, %v116
    %v119 = vadd.f32 %v114, %v117
    %s120 = scalar_lea.vmem [#allocation5], 8
    %v121 = vld [vmem:[%s120] sm:$0xf]
    %v122 = vld [vmem:[%s120 + $0x10] sm:$0xf]
    %s123 = scalar_lea.vmem [#allocation8], 8
    %v124 = vld [vmem:[%s123] sm:$0xf]
    %v125 = vld [vmem:[%s123 + $0x10] sm:$0xf]
    %v126 = vadd.f32 %v121, %v124
    %v127 = vadd.f32 %v122, %v125
    %s128 = scalar_lea.vmem [#allocation5], 12
    %v129 = vld [vmem:[%s128] sm:$0xf]
    %v130 = vld [vmem:[%s128 + $0x10] sm:$0xf]
    %s131 = scalar_lea.vmem [#allocation8], 12
    %v132 = vld [vmem:[%s131] sm:$0xf]
    %v133 = vld [vmem:[%s131 + $0x10] sm:$0xf]
    %v134 = vadd.f32 %v129, %v132
    %v135 = vadd.f32 %v130, %v133
    %v136 = vmul.f32 %v80, %v80
    %v137 = vmul.f32 %v81, %v81
    %v138 = vmul.f32 %v110, %v110
    %v139 = vmul.f32 %v111, %v111
    %v140 = vadd.f32 %v136, %v138
    %v141 = vadd.f32 %v137, %v139
    %v142 = vrcp.pop %v140
    %v143 = vmul.f32 1.0, %v142
    %v144 = vrcp.pop %v141
    %v145 = vmul.f32 1.0, %v144
    %v146 = vmul.f32 %v80, %v143
    %v147 = vmul.f32 %v81, %v145
    %v148 = vsub.f32 0.0, %v110
    %v149 = vsub.f32 0.0, %v111
    %v150 = vmul.f32 %v148, %v143
    %v151 = vmul.f32 %v149, %v145
    %v152 = vlaneseq
    %v153 = vshrl.u32 %v152, 7
    %v154 = vsub.s32 0, %v153
    %v155 = vrot.slane %v146, %v154
    %v156 = vlaneseq
    %v157 = vshrl.u32 %v156, 7
    %v158 = vsub.s32 0, %v157
    %v159 = vrot.slane %v147, %v158
    %v160 = vmul.f32 %v80, %v155
    %v161 = vmul.f32 %v81, %v159
    %v162 = vlaneseq
    %v163 = vshrl.u32 %v162, 7
    %v164 = vsub.s32 0, %v163
    %v165 = vrot.slane %v150, %v164
    %v166 = vlaneseq
    %v167 = vshrl.u32 %v166, 7
    %v168 = vsub.s32 0, %v167
    %v169 = vrot.slane %v151, %v168
    %v170 = vmul.f32 %v110, %v165
    %v171 = vmul.f32 %v111, %v169
    %v172 = vsub.f32 %v160, %v170
    %v173 = vsub.f32 %v161, %v171
    %v174 = vmul.f32 %v80, %v165
    %v175 = vmul.f32 %v81, %v169
    %v176 = vmul.f32 %v110, %v155
    %v177 = vmul.f32 %v111, %v159
    %v178 = vadd.f32 %v174, %v176
    %v179 = vadd.f32 %v175, %v177
    %v180 = vmul.f32 %v76, %v155
    %v181 = vmul.f32 %v77, %v159
    %v182 = vmul.f32 %v106, %v165
    %v183 = vmul.f32 %v107, %v169
    %v184 = vsub.f32 %v180, %v182
    %v185 = vsub.f32 %v181, %v183
    %v186 = vmul.f32 %v76, %v165
    %v187 = vmul.f32 %v77, %v169
    %v188 = vmul.f32 %v106, %v155
    %v189 = vmul.f32 %v107, %v159
    %v190 = vadd.f32 %v186, %v188
    %v191 = vadd.f32 %v187, %v189
    %v192 = vlaneseq
    %v193 = vshrl.u32 %v192, 7
    %v194 = vsub.s32 0, %v193
    %v195 = vrot.slane %v88, %v194
    %v196 = vlaneseq
    %v197 = vshrl.u32 %v196, 7
    %v198 = vsub.s32 0, %v197
    %v199 = vrot.slane %v89, %v198
    %v200 = vmul.f32 %v195, %v172
    %v201 = vmul.f32 %v199, %v173
    %v202 = vlaneseq
    %v203 = vshrl.u32 %v202, 7
    %v204 = vsub.s32 0, %v203
    %v205 = vrot.slane %v118, %v204
    %v206 = vlaneseq
    %v207 = vshrl.u32 %v206, 7
    %v208 = vsub.s32 0, %v207
    %v209 = vrot.slane %v119, %v208
    %v210 = vmul.f32 %v205, %v178
    %v211 = vmul.f32 %v209, %v179
    %v212 = vsub.f32 %v200, %v210
    %v213 = vsub.f32 %v201, %v211
    %v214 = vsub.f32 %v88, %v212
    %v215 = vsub.f32 %v89, %v213
    %v216 = vmul.f32 %v195, %v178
    %v217 = vmul.f32 %v199, %v179
    %v218 = vmul.f32 %v205, %v172
    %v219 = vmul.f32 %v209, %v173
    %v220 = vadd.f32 %v216, %v218
    %v221 = vadd.f32 %v217, %v219
    %v222 = vsub.f32 %v118, %v220
    %v223 = vsub.f32 %v119, %v221
    %v224 = vmul.f32 %v195, %v184
    %v225 = vmul.f32 %v199, %v185
    %v226 = vmul.f32 %v205, %v190
    %v227 = vmul.f32 %v209, %v191
    %v228 = vsub.f32 %v224, %v226
    %v229 = vsub.f32 %v225, %v227
    %v230 = vsub.f32 %v83, %v228
    %v231 = vsub.f32 %v84, %v229
    %v232 = vmul.f32 %v195, %v190
    %v233 = vmul.f32 %v199, %v191
    %v234 = vmul.f32 %v205, %v184
    %v235 = vmul.f32 %v209, %v185
    %v236 = vadd.f32 %v232, %v234
    %v237 = vadd.f32 %v233, %v235
    %v238 = vsub.f32 %v113, %v236
    %v239 = vsub.f32 %v114, %v237
    %v240 = vlaneseq
    %v241 = vshrl.u32 %v240, 7
    %v242 = vsub.s32 0, %v241
    %v243 = vrot.slane %v96, %v242
    %v244 = vlaneseq
    %v245 = vshrl.u32 %v244, 7
    %v246 = vsub.s32 0, %v245
    %v247 = vrot.slane %v97, %v246
    %v248 = vmul.f32 %v243, %v172
    %v249 = vmul.f32 %v247, %v173
    %v250 = vlaneseq
    %v251 = vshrl.u32 %v250, 7
    %v252 = vsub.s32 0, %v251
    %v253 = vrot.slane %v126, %v252
    %v254 = vlaneseq
    %v255 = vshrl.u32 %v254, 7
    %v256 = vsub.s32 0, %v255
    %v257 = vrot.slane %v127, %v256
    %v258 = vmul.f32 %v253, %v178
    %v259 = vmul.f32 %v257, %v179
    %v260 = vsub.f32 %v248, %v258
    %v261 = vsub.f32 %v249, %v259
    %v262 = vsub.f32 %v96, %v260
    %v263 = vsub.f32 %v97, %v261
    %v264 = vmul.f32 %v243, %v178
    %v265 = vmul.f32 %v247, %v179
    %v266 = vmul.f32 %v253, %v172
    %v267 = vmul.f32 %v257, %v173
    %v268 = vadd.f32 %v264, %v266
    %v269 = vadd.f32 %v265, %v267
    %v270 = vsub.f32 %v126, %v268
    %v271 = vsub.f32 %v127, %v269
    %v272 = vmul.f32 %v243, %v184
    %v273 = vmul.f32 %v247, %v185
    %v274 = vmul.f32 %v253, %v190
    %v275 = vmul.f32 %v257, %v191
    %v276 = vsub.f32 %v272, %v274
    %v277 = vsub.f32 %v273, %v275
    %v278 = vsub.f32 %v91, %v276
    %v279 = vsub.f32 %v92, %v277
    %v280 = vmul.f32 %v243, %v190
    %v281 = vmul.f32 %v247, %v191
    %v282 = vmul.f32 %v253, %v184
    %v283 = vmul.f32 %v257, %v185
    %v284 = vadd.f32 %v280, %v282
    %v285 = vadd.f32 %v281, %v283
    %v286 = vsub.f32 %v121, %v284
    %v287 = vsub.f32 %v122, %v285
    %v288 = vlaneseq
    %v289 = vshrl.u32 %v288, 7
    %v290 = vsub.s32 0, %v289
    %v291 = vrot.slane %v104, %v290
    %v292 = vlaneseq
    %v293 = vshrl.u32 %v292, 7
    %v294 = vsub.s32 0, %v293
    %v295 = vrot.slane %v105, %v294
    %v296 = vmul.f32 %v291, %v172
    %v297 = vmul.f32 %v295, %v173
    %v298 = vlaneseq
    %v299 = vshrl.u32 %v298, 7
    %v300 = vsub.s32 0, %v299
    %v301 = vrot.slane %v134, %v300
    %v302 = vlaneseq
    %v303 = vshrl.u32 %v302, 7
    %v304 = vsub.s32 0, %v303
    %v305 = vrot.slane %v135, %v304
    %v306 = vmul.f32 %v301, %v178
    %v307 = vmul.f32 %v305, %v179
    %v308 = vsub.f32 %v296, %v306
    %v309 = vsub.f32 %v297, %v307
    %v310 = vsub.f32 %v104, %v308
    %v311 = vsub.f32 %v105, %v309
    %v312 = vmul.f32 %v291, %v178
    %v313 = vmul.f32 %v295, %v179
    %v314 = vmul.f32 %v301, %v172
    %v315 = vmul.f32 %v305, %v173
    %v316 = vadd.f32 %v312, %v314
    %v317 = vadd.f32 %v313, %v315
    %v318 = vsub.f32 %v134, %v316
    %v319 = vsub.f32 %v135, %v317
    %v320 = vmul.f32 %v291, %v184
    %v321 = vmul.f32 %v295, %v185
    %v322 = vmul.f32 %v301, %v190
    %v323 = vmul.f32 %v305, %v191
    %v324 = vsub.f32 %v320, %v322
    %v325 = vsub.f32 %v321, %v323
    %v326 = vsub.f32 %v99, %v324
    %v327 = vsub.f32 %v100, %v325
    %v328 = vmul.f32 %v291, %v190
    %v329 = vmul.f32 %v295, %v191
    %v330 = vmul.f32 %v301, %v184
    %v331 = vmul.f32 %v305, %v185
    %v332 = vadd.f32 %v328, %v330
    %v333 = vadd.f32 %v329, %v331
    %v334 = vsub.f32 %v129, %v332
    %v335 = vsub.f32 %v130, %v333
    %v336 = vmul.f32 %v214, %v214
    %v337 = vmul.f32 %v215, %v215
    %v338 = vmul.f32 %v222, %v222
    %v339 = vmul.f32 %v223, %v223
    %v340 = vadd.f32 %v336, %v338
    %v341 = vadd.f32 %v337, %v339
    %v342 = vrcp.pop %v340
    %v343 = vmul.f32 1.0, %v342
    %v344 = vrcp.pop %v341
    %v345 = vmul.f32 1.0, %v344
    %v346 = vmul.f32 %v214, %v343
    %v347 = vmul.f32 %v215, %v345
    %v348 = vsub.f32 0.0, %v222
    %v349 = vsub.f32 0.0, %v223
    %v350 = vmul.f32 %v348, %v343
    %v351 = vmul.f32 %v349, %v345
    %v352 = vlaneseq
    %v353 = vshrl.u32 %v352, 7
    %v354 = vsub.s32 1, %v353
    %v355 = vrot.slane %v346, %v354
    %v356 = vlaneseq
    %v357 = vshrl.u32 %v356, 7
    %v358 = vsub.s32 1, %v357
    %v359 = vrot.slane %v347, %v358
    %v360 = vmul.f32 %v214, %v355
    %v361 = vmul.f32 %v215, %v359
    %v362 = vlaneseq
    %v363 = vshrl.u32 %v362, 7
    %v364 = vsub.s32 1, %v363
    %v365 = vrot.slane %v350, %v364
    %v366 = vlaneseq
    %v367 = vshrl.u32 %v366, 7
    %v368 = vsub.s32 1, %v367
    %v369 = vrot.slane %v351, %v368
    %v370 = vmul.f32 %v222, %v365
    %v371 = vmul.f32 %v223, %v369
    %v372 = vsub.f32 %v360, %v370
    %v373 = vsub.f32 %v361, %v371
    %v374 = vmul.f32 %v214, %v365
    %v375 = vmul.f32 %v215, %v369
    %v376 = vmul.f32 %v222, %v355
    %v377 = vmul.f32 %v223, %v359
    %v378 = vadd.f32 %v374, %v376
    %v379 = vadd.f32 %v375, %v377
    %v380 = vmul.f32 %v230, %v355
    %v381 = vmul.f32 %v231, %v359
    %v382 = vmul.f32 %v238, %v365
    %v383 = vmul.f32 %v239, %v369
    %v384 = vsub.f32 %v380, %v382
    %v385 = vsub.f32 %v381, %v383
    %v386 = vmul.f32 %v230, %v365
    %v387 = vmul.f32 %v231, %v369
    %v388 = vmul.f32 %v238, %v355
    %v389 = vmul.f32 %v239, %v359
    %v390 = vadd.f32 %v386, %v388
    %v391 = vadd.f32 %v387, %v389
    %v392 = vlaneseq
    %v393 = vshrl.u32 %v392, 7
    %v394 = vsub.s32 1, %v393
    %v395 = vrot.slane %v172, %v394
    %v396 = vlaneseq
    %v397 = vshrl.u32 %v396, 7
    %v398 = vsub.s32 1, %v397
    %v399 = vrot.slane %v173, %v398
    %v400 = vmul.f32 %v395, %v372
    %v401 = vmul.f32 %v399, %v373
    %v402 = vlaneseq
    %v403 = vshrl.u32 %v402, 7
    %v404 = vsub.s32 1, %v403
    %v405 = vrot.slane %v178, %v404
    %v406 = vlaneseq
    %v407 = vshrl.u32 %v406, 7
    %v408 = vsub.s32 1, %v407
    %v409 = vrot.slane %v179, %v408
    %v410 = vmul.f32 %v405, %v378
    %v411 = vmul.f32 %v409, %v379
    %v412 = vsub.f32 %v400, %v410
    %v413 = vsub.f32 %v401, %v411
    %v414 = vsub.f32 %v172, %v412
    %v415 = vsub.f32 %v173, %v413
    %v416 = vmul.f32 %v395, %v378
    %v417 = vmul.f32 %v399, %v379
    %v418 = vmul.f32 %v405, %v372
    %v419 = vmul.f32 %v409, %v373
    %v420 = vadd.f32 %v416, %v418
    %v421 = vadd.f32 %v417, %v419
    %v422 = vsub.f32 %v178, %v420
    %v423 = vsub.f32 %v179, %v421
    %v424 = vmul.f32 %v395, %v384
    %v425 = vmul.f32 %v399, %v385
    %v426 = vmul.f32 %v405, %v390
    %v427 = vmul.f32 %v409, %v391
    %v428 = vsub.f32 %v424, %v426
    %v429 = vsub.f32 %v425, %v427
    %v430 = vsub.f32 %v184, %v428
    %v431 = vsub.f32 %v185, %v429
    %v432 = vmul.f32 %v395, %v390
    %v433 = vmul.f32 %v399, %v391
    %v434 = vmul.f32 %v405, %v384
    %v435 = vmul.f32 %v409, %v385
    %v436 = vadd.f32 %v432, %v434
    %v437 = vadd.f32 %v433, %v435
    %v438 = vsub.f32 %v190, %v436
    %v439 = vsub.f32 %v191, %v437
    %v440 = vlaneseq
    %v441 = vshrl.u32 %v440, 7
    %v442 = vsub.s32 1, %v441
    %v443 = vrot.slane %v262, %v442
    %v444 = vlaneseq
    %v445 = vshrl.u32 %v444, 7
    %v446 = vsub.s32 1, %v445
    %v447 = vrot.slane %v263, %v446
    %v448 = vmul.f32 %v443, %v372
    %v449 = vmul.f32 %v447, %v373
    %v450 = vlaneseq
    %v451 = vshrl.u32 %v450, 7
    %v452 = vsub.s32 1, %v451
    %v453 = vrot.slane %v270, %v452
    %v454 = vlaneseq
    %v455 = vshrl.u32 %v454, 7
    %v456 = vsub.s32 1, %v455
    %v457 = vrot.slane %v271, %v456
    %v458 = vmul.f32 %v453, %v378
    %v459 = vmul.f32 %v457, %v379
    %v460 = vsub.f32 %v448, %v458
    %v461 = vsub.f32 %v449, %v459
    %v462 = vsub.f32 %v262, %v460
    %v463 = vsub.f32 %v263, %v461
    %v464 = vmul.f32 %v443, %v378
    %v465 = vmul.f32 %v447, %v379
    %v466 = vmul.f32 %v453, %v372
    %v467 = vmul.f32 %v457, %v373
    %v468 = vadd.f32 %v464, %v466
    %v469 = vadd.f32 %v465, %v467
    %v470 = vsub.f32 %v270, %v468
    %v471 = vsub.f32 %v271, %v469
    %v472 = vmul.f32 %v443, %v384
    %v473 = vmul.f32 %v447, %v385
    %v474 = vmul.f32 %v453, %v390
    %v475 = vmul.f32 %v457, %v391
    %v476 = vsub.f32 %v472, %v474
    %v477 = vsub.f32 %v473, %v475
    %v478 = vsub.f32 %v278, %v476
    %v479 = vsub.f32 %v279, %v477
    %v480 = vmul.f32 %v443, %v390
    %v481 = vmul.f32 %v447, %v391
    %v482 = vmul.f32 %v453, %v384
    %v483 = vmul.f32 %v457, %v385
    %v484 = vadd.f32 %v480, %v482
    %v485 = vadd.f32 %v481, %v483
    %v486 = vsub.f32 %v286, %v484
    %v487 = vsub.f32 %v287, %v485
    %v488 = vlaneseq
    %v489 = vshrl.u32 %v488, 7
    %v490 = vsub.s32 1, %v489
    %v491 = vrot.slane %v310, %v490
    %v492 = vlaneseq
    %v493 = vshrl.u32 %v492, 7
    %v494 = vsub.s32 1, %v493
    %v495 = vrot.slane %v311, %v494
    %v496 = vmul.f32 %v491, %v372
    %v497 = vmul.f32 %v495, %v373
    %v498 = vlaneseq
    %v499 = vshrl.u32 %v498, 7
    %v500 = vsub.s32 1, %v499
    %v501 = vrot.slane %v318, %v500
    %v502 = vlaneseq
    %v503 = vshrl.u32 %v502, 7
    %v504 = vsub.s32 1, %v503
    %v505 = vrot.slane %v319, %v504
    %v506 = vmul.f32 %v501, %v378
    %v507 = vmul.f32 %v505, %v379
    %v508 = vsub.f32 %v496, %v506
    %v509 = vsub.f32 %v497, %v507
    %v510 = vsub.f32 %v310, %v508
    %v511 = vsub.f32 %v311, %v509
    %v512 = vmul.f32 %v491, %v378
    %v513 = vmul.f32 %v495, %v379
    %v514 = vmul.f32 %v501, %v372
    %v515 = vmul.f32 %v505, %v373
    %v516 = vadd.f32 %v512, %v514
    %v517 = vadd.f32 %v513, %v515
    %v518 = vsub.f32 %v318, %v516
    %v519 = vsub.f32 %v319, %v517
    %v520 = vmul.f32 %v491, %v384
    %v521 = vmul.f32 %v495, %v385
    %v522 = vmul.f32 %v501, %v390
    %v523 = vmul.f32 %v505, %v391
    %v524 = vsub.f32 %v520, %v522
    %v525 = vsub.f32 %v521, %v523
    %v526 = vsub.f32 %v326, %v524
    %v527 = vsub.f32 %v327, %v525
    %v528 = vmul.f32 %v491, %v390
    %v529 = vmul.f32 %v495, %v391
    %v530 = vmul.f32 %v501, %v384
    %v531 = vmul.f32 %v505, %v385
    %v532 = vadd.f32 %v528, %v530
    %v533 = vadd.f32 %v529, %v531
    %v534 = vsub.f32 %v334, %v532
    %v535 = vsub.f32 %v335, %v533
    %v536 = vmul.f32 %v462, %v462
    %v537 = vmul.f32 %v463, %v463
    %v538 = vmul.f32 %v470, %v470
    %v539 = vmul.f32 %v471, %v471
    %v540 = vadd.f32 %v536, %v538
    %v541 = vadd.f32 %v537, %v539
    %v542 = vrcp.pop %v540
    %v543 = vmul.f32 1.0, %v542
    %v544 = vrcp.pop %v541
    %v545 = vmul.f32 1.0, %v544
    %v546 = vmul.f32 %v462, %v543
    %v547 = vmul.f32 %v463, %v545
    %v548 = vsub.f32 0.0, %v470
    %v549 = vsub.f32 0.0, %v471
    %v550 = vmul.f32 %v548, %v543
    %v551 = vmul.f32 %v549, %v545
    %v552 = vlaneseq
    %v553 = vshrl.u32 %v552, 7
    %v554 = vsub.s32 2, %v553
    %v555 = vrot.slane %v546, %v554
    %v556 = vlaneseq
    %v557 = vshrl.u32 %v556, 7
    %v558 = vsub.s32 2, %v557
    %v559 = vrot.slane %v547, %v558
    %v560 = vmul.f32 %v462, %v555
    %v561 = vmul.f32 %v463, %v559
    %v562 = vlaneseq
    %v563 = vshrl.u32 %v562, 7
    %v564 = vsub.s32 2, %v563
    %v565 = vrot.slane %v550, %v564
    %v566 = vlaneseq
    %v567 = vshrl.u32 %v566, 7
    %v568 = vsub.s32 2, %v567
    %v569 = vrot.slane %v551, %v568
    %v570 = vmul.f32 %v470, %v565
    %v571 = vmul.f32 %v471, %v569
    %v572 = vsub.f32 %v560, %v570
    %v573 = vsub.f32 %v561, %v571
    %v574 = vmul.f32 %v462, %v565
    %v575 = vmul.f32 %v463, %v569
    %v576 = vmul.f32 %v470, %v555
    %v577 = vmul.f32 %v471, %v559
    %v578 = vadd.f32 %v574, %v576
    %v579 = vadd.f32 %v575, %v577
    %v580 = vmul.f32 %v478, %v555
    %v581 = vmul.f32 %v479, %v559
    %v582 = vmul.f32 %v486, %v565
    %v583 = vmul.f32 %v487, %v569
    %v584 = vsub.f32 %v580, %v582
    %v585 = vsub.f32 %v581, %v583
    %v586 = vmul.f32 %v478, %v565
    %v587 = vmul.f32 %v479, %v569
    %v588 = vmul.f32 %v486, %v555
    %v589 = vmul.f32 %v487, %v559
    %v590 = vadd.f32 %v586, %v588
    %v591 = vadd.f32 %v587, %v589
    %v592 = vlaneseq
    %v593 = vshrl.u32 %v592, 7
    %v594 = vsub.s32 2, %v593
    %v595 = vrot.slane %v414, %v594
    %v596 = vlaneseq
    %v597 = vshrl.u32 %v596, 7
    %v598 = vsub.s32 2, %v597
    %v599 = vrot.slane %v415, %v598
    %v600 = vmul.f32 %v595, %v572
    %v601 = vmul.f32 %v599, %v573
    %v602 = vlaneseq
    %v603 = vshrl.u32 %v602, 7
    %v604 = vsub.s32 2, %v603
    %v605 = vrot.slane %v422, %v604
    %v606 = vlaneseq
    %v607 = vshrl.u32 %v606, 7
    %v608 = vsub.s32 2, %v607
    %v609 = vrot.slane %v423, %v608
    %v610 = vmul.f32 %v605, %v578
    %v611 = vmul.f32 %v609, %v579
    %v612 = vsub.f32 %v600, %v610
    %v613 = vsub.f32 %v601, %v611
    %v614 = vsub.f32 %v414, %v612
    %v615 = vsub.f32 %v415, %v613
    %v616 = vmul.f32 %v595, %v578
    %v617 = vmul.f32 %v599, %v579
    %v618 = vmul.f32 %v605, %v572
    %v619 = vmul.f32 %v609, %v573
    %v620 = vadd.f32 %v616, %v618
    %v621 = vadd.f32 %v617, %v619
    %v622 = vsub.f32 %v422, %v620
    %v623 = vsub.f32 %v423, %v621
    %v624 = vmul.f32 %v595, %v584
    %v625 = vmul.f32 %v599, %v585
    %v626 = vmul.f32 %v605, %v590
    %v627 = vmul.f32 %v609, %v591
    %v628 = vsub.f32 %v624, %v626
    %v629 = vsub.f32 %v625, %v627
    %v630 = vsub.f32 %v430, %v628
    %v631 = vsub.f32 %v431, %v629
    %v632 = vmul.f32 %v595, %v590
    %v633 = vmul.f32 %v599, %v591
    %v634 = vmul.f32 %v605, %v584
    %v635 = vmul.f32 %v609, %v585
    %v636 = vadd.f32 %v632, %v634
    %v637 = vadd.f32 %v633, %v635
    %v638 = vsub.f32 %v438, %v636
    %v639 = vsub.f32 %v439, %v637
    %v640 = vlaneseq
    %v641 = vshrl.u32 %v640, 7
    %v642 = vsub.s32 2, %v641
    %v643 = vrot.slane %v372, %v642
    %v644 = vlaneseq
    %v645 = vshrl.u32 %v644, 7
    %v646 = vsub.s32 2, %v645
    %v647 = vrot.slane %v373, %v646
    %v648 = vmul.f32 %v643, %v572
    %v649 = vmul.f32 %v647, %v573
    %v650 = vlaneseq
    %v651 = vshrl.u32 %v650, 7
    %v652 = vsub.s32 2, %v651
    %v653 = vrot.slane %v378, %v652
    %v654 = vlaneseq
    %v655 = vshrl.u32 %v654, 7
    %v656 = vsub.s32 2, %v655
    %v657 = vrot.slane %v379, %v656
    %v658 = vmul.f32 %v653, %v578
    %v659 = vmul.f32 %v657, %v579
    %v660 = vsub.f32 %v648, %v658
    %v661 = vsub.f32 %v649, %v659
    %v662 = vsub.f32 %v372, %v660
    %v663 = vsub.f32 %v373, %v661
    %v664 = vmul.f32 %v643, %v578
    %v665 = vmul.f32 %v647, %v579
    %v666 = vmul.f32 %v653, %v572
    %v667 = vmul.f32 %v657, %v573
    %v668 = vadd.f32 %v664, %v666
    %v669 = vadd.f32 %v665, %v667
    %v670 = vsub.f32 %v378, %v668
    %v671 = vsub.f32 %v379, %v669
    %v672 = vmul.f32 %v643, %v584
    %v673 = vmul.f32 %v647, %v585
    %v674 = vmul.f32 %v653, %v590
    %v675 = vmul.f32 %v657, %v591
    %v676 = vsub.f32 %v672, %v674
    %v677 = vsub.f32 %v673, %v675
    %v678 = vsub.f32 %v384, %v676
    %v679 = vsub.f32 %v385, %v677
    %v680 = vmul.f32 %v643, %v590
    %v681 = vmul.f32 %v647, %v591
    %v682 = vmul.f32 %v653, %v584
    %v683 = vmul.f32 %v657, %v585
    %v684 = vadd.f32 %v680, %v682
    %v685 = vadd.f32 %v681, %v683
    %v686 = vsub.f32 %v390, %v684
    %v687 = vsub.f32 %v391, %v685
    %v688 = vlaneseq
    %v689 = vshrl.u32 %v688, 7
    %v690 = vsub.s32 2, %v689
    %v691 = vrot.slane %v510, %v690
    %v692 = vlaneseq
    %v693 = vshrl.u32 %v692, 7
    %v694 = vsub.s32 2, %v693
    %v695 = vrot.slane %v511, %v694
    %v696 = vmul.f32 %v691, %v572
    %v697 = vmul.f32 %v695, %v573
    %v698 = vlaneseq
    %v699 = vshrl.u32 %v698, 7
    %v700 = vsub.s32 2, %v699
    %v701 = vrot.slane %v518, %v700
    %v702 = vlaneseq
    %v703 = vshrl.u32 %v702, 7
    %v704 = vsub.s32 2, %v703
    %v705 = vrot.slane %v519, %v704
    %v706 = vmul.f32 %v701, %v578
    %v707 = vmul.f32 %v705, %v579
    %v708 = vsub.f32 %v696, %v706
    %v709 = vsub.f32 %v697, %v707
    %v710 = vsub.f32 %v510, %v708
    %v711 = vsub.f32 %v511, %v709
    %v712 = vmul.f32 %v691, %v578
    %v713 = vmul.f32 %v695, %v579
    %v714 = vmul.f32 %v701, %v572
    %v715 = vmul.f32 %v705, %v573
    %v716 = vadd.f32 %v712, %v714
    %v717 = vadd.f32 %v713, %v715
    %v718 = vsub.f32 %v518, %v716
    %v719 = vsub.f32 %v519, %v717
    %v720 = vmul.f32 %v691, %v584
    %v721 = vmul.f32 %v695, %v585
    %v722 = vmul.f32 %v701, %v590
    %v723 = vmul.f32 %v705, %v591
    %v724 = vsub.f32 %v720, %v722
    %v725 = vsub.f32 %v721, %v723
    %v726 = vsub.f32 %v526, %v724
    %v727 = vsub.f32 %v527, %v725
    %v728 = vmul.f32 %v691, %v590
    %v729 = vmul.f32 %v695, %v591
    %v730 = vmul.f32 %v701, %v584
    %v731 = vmul.f32 %v705, %v585
    %v732 = vadd.f32 %v728, %v730
    %v733 = vadd.f32 %v729, %v731
    %v734 = vsub.f32 %v534, %v732
    %v735 = vsub.f32 %v535, %v733
    %v736 = vmul.f32 %v710, %v710
    %v737 = vmul.f32 %v711, %v711
    %v738 = vmul.f32 %v718, %v718
    %v739 = vmul.f32 %v719, %v719
    %v740 = vadd.f32 %v736, %v738
    %v741 = vadd.f32 %v737, %v739
    %v742 = vrcp.pop %v740
    %v743 = vmul.f32 1.0, %v742
    %v744 = vrcp.pop %v741
    %v745 = vmul.f32 1.0, %v744
    %v746 = vmul.f32 %v710, %v743
    %v747 = vmul.f32 %v711, %v745
    %v748 = vsub.f32 0.0, %v718
    %v749 = vsub.f32 0.0, %v719
    %v750 = vmul.f32 %v748, %v743
    %v751 = vmul.f32 %v749, %v745
    %v752 = vlaneseq
    %v753 = vshrl.u32 %v752, 7
    %v754 = vsub.s32 3, %v753
    %v755 = vrot.slane %v746, %v754
    %v756 = vlaneseq
    %v757 = vshrl.u32 %v756, 7
    %v758 = vsub.s32 3, %v757
    %v759 = vrot.slane %v747, %v758
    %v760 = vmul.f32 %v726, %v755
    %v761 = vmul.f32 %v727, %v759
    %v762 = vlaneseq
    %v763 = vshrl.u32 %v762, 7
    %v764 = vsub.s32 3, %v763
    %v765 = vrot.slane %v750, %v764
    %v766 = vlaneseq
    %v767 = vshrl.u32 %v766, 7
    %v768 = vsub.s32 3, %v767
    %v769 = vrot.slane %v751, %v768
    %v770 = vmul.f32 %v734, %v765
    %v771 = vmul.f32 %v735, %v769
    %v772 = vsub.f32 %v760, %v770
    %v773 = vsub.f32 %v761, %v771
    %v774 = vmul.f32 %v726, %v765
    %v775 = vmul.f32 %v727, %v769
    %v776 = vmul.f32 %v734, %v755
    %v777 = vmul.f32 %v735, %v759
    %v778 = vadd.f32 %v774, %v776
    %v779 = vadd.f32 %v775, %v777
    %v780 = vlaneseq
    %v781 = vshrl.u32 %v780, 7
    %v782 = vsub.s32 3, %v781
    %v783 = vrot.slane %v614, %v782
    %v784 = vlaneseq
    %v785 = vshrl.u32 %v784, 7
    %v786 = vsub.s32 3, %v785
    %v787 = vrot.slane %v615, %v786
    %v788 = vmul.f32 %v783, %v772
    %v789 = vmul.f32 %v787, %v773
    %v790 = vlaneseq
    %v791 = vshrl.u32 %v790, 7
    %v792 = vsub.s32 3, %v791
    %v793 = vrot.slane %v622, %v792
    %v794 = vlaneseq
    %v795 = vshrl.u32 %v794, 7
    %v796 = vsub.s32 3, %v795
    %v797 = vrot.slane %v623, %v796
    %v798 = vmul.f32 %v793, %v778
    %v799 = vmul.f32 %v797, %v779
    %v800 = vsub.f32 %v788, %v798
    %v801 = vsub.f32 %v789, %v799
    %v802 = vsub.f32 %v630, %v800
    %v803 = vsub.f32 %v631, %v801
    %v804 = vmul.f32 %v783, %v778
    %v805 = vmul.f32 %v787, %v779
    %v806 = vmul.f32 %v793, %v772
    %v807 = vmul.f32 %v797, %v773
    %v808 = vadd.f32 %v804, %v806
    %v809 = vadd.f32 %v805, %v807
    %v810 = vsub.f32 %v638, %v808
    %v811 = vsub.f32 %v639, %v809
    %v812 = vlaneseq
    %v813 = vshrl.u32 %v812, 7
    %v814 = vsub.s32 3, %v813
    %v815 = vrot.slane %v662, %v814
    %v816 = vlaneseq
    %v817 = vshrl.u32 %v816, 7
    %v818 = vsub.s32 3, %v817
    %v819 = vrot.slane %v663, %v818
    %v820 = vmul.f32 %v815, %v772
    %v821 = vmul.f32 %v819, %v773
    %v822 = vlaneseq
    %v823 = vshrl.u32 %v822, 7
    %v824 = vsub.s32 3, %v823
    %v825 = vrot.slane %v670, %v824
    %v826 = vlaneseq
    %v827 = vshrl.u32 %v826, 7
    %v828 = vsub.s32 3, %v827
    %v829 = vrot.slane %v671, %v828
    %v830 = vmul.f32 %v825, %v778
    %v831 = vmul.f32 %v829, %v779
    %v832 = vsub.f32 %v820, %v830
    %v833 = vsub.f32 %v821, %v831
    %v834 = vsub.f32 %v678, %v832
    %v835 = vsub.f32 %v679, %v833
    %v836 = vmul.f32 %v815, %v778
    %v837 = vmul.f32 %v819, %v779
    %v838 = vmul.f32 %v825, %v772
    %v839 = vmul.f32 %v829, %v773
    %v840 = vadd.f32 %v836, %v838
    %v841 = vadd.f32 %v837, %v839
    %v842 = vsub.f32 %v686, %v840
    %v843 = vsub.f32 %v687, %v841
    %v844 = vlaneseq
    %v845 = vshrl.u32 %v844, 7
    %v846 = vsub.s32 3, %v845
    %v847 = vrot.slane %v572, %v846
    %v848 = vlaneseq
    %v849 = vshrl.u32 %v848, 7
    %v850 = vsub.s32 3, %v849
    %v851 = vrot.slane %v573, %v850
    %v852 = vmul.f32 %v847, %v772
    %v853 = vmul.f32 %v851, %v773
    %v854 = vlaneseq
    %v855 = vshrl.u32 %v854, 7
    %v856 = vsub.s32 3, %v855
    %v857 = vrot.slane %v578, %v856
    %v858 = vlaneseq
    %v859 = vshrl.u32 %v858, 7
    %v860 = vsub.s32 3, %v859
    %v861 = vrot.slane %v579, %v860
    %v862 = vmul.f32 %v857, %v778
    %v863 = vmul.f32 %v861, %v779
    %v864 = vsub.f32 %v852, %v862
    %v865 = vsub.f32 %v853, %v863
    %v866 = vsub.f32 %v584, %v864
    %v867 = vsub.f32 %v585, %v865
    %v868 = vmul.f32 %v847, %v778
    %v869 = vmul.f32 %v851, %v779
    %v870 = vmul.f32 %v857, %v772
    %v871 = vmul.f32 %v861, %v773
    %v872 = vadd.f32 %v868, %v870
    %v873 = vadd.f32 %v869, %v871
    %v874 = vsub.f32 %v590, %v872
    %v875 = vsub.f32 %v591, %v873
    %v876 = vmul.f32 %v802, %v802
    %v877 = vmul.f32 %v803, %v803
    %v878 = vmul.f32 %v810, %v810
    %v879 = vmul.f32 %v811, %v811
    %v880 = vadd.f32 %v876, %v878
    %v881 = vadd.f32 %v877, %v879
    %v882 = vld [vmem:[#allocation2] sm:$0x1]
    %v883 = vld [vmem:[#allocation2 + $0x10] sm:$0x1]
    %v884 = vlaneseq
    %v885 = vshrl.u32 %v884, 7
    %v886 = vsub.s32 0, %v885
    %v887 = vrot.slane %v882, %v886
    %v888 = vlaneseq
    %v889 = vshrl.u32 %v888, 7
    %v890 = vsub.s32 0, %v889
    %v891 = vrot.slane %v883, %v890
    %v892 = vmul.f32 %v887, %v880
    %v893 = vmul.f32 %v891, %v881
    %v894 = vadd.f32 %v892, 0.0
    %v895 = vadd.f32 %v893, 0.0
    %v896 = vld [vmem:[#allocation7] sm:$0x1]
    %v897 = vld [vmem:[#allocation7 + $0x10] sm:$0x1]
    %v898 = vlaneseq
    %v899 = vshrl.u32 %v898, 7
    %v900 = vsub.s32 0, %v899
    %v901 = vrot.slane %v896, %v900
    %v902 = vlaneseq
    %v903 = vshrl.u32 %v902, 7
    %v904 = vsub.s32 0, %v903
    %v905 = vrot.slane %v897, %v904
    %v906 = vmul.f32 %v901, %v880
    %v907 = vmul.f32 %v905, %v881
    %v908 = vadd.f32 %v906, 0.0
    %v909 = vadd.f32 %v907, 0.0
    %v910 = vmul.f32 %v802, %v834
    %v911 = vmul.f32 %v803, %v835
    %v912 = vmul.f32 %v810, %v842
    %v913 = vmul.f32 %v811, %v843
    %v914 = vadd.f32 %v910, %v912
    %v915 = vadd.f32 %v911, %v913
    %v916 = vmul.f32 %v810, %v834
    %v917 = vmul.f32 %v811, %v835
    %v918 = vmul.f32 %v802, %v842
    %v919 = vmul.f32 %v803, %v843
    %v920 = vsub.f32 %v916, %v918
    %v921 = vsub.f32 %v917, %v919
    %v922 = vld [vmem:[#allocation2 + $0x1] sm:$0x1]
    %v923 = vld [vmem:[#allocation2 + $0x11] sm:$0x1]
    %v924 = vld [vmem:[%s82] sm:$0x1]
    %v925 = vld [vmem:[%s82 + $0x10] sm:$0x1]
    %v926 = vadd.f32 %v922, %v924
    %v927 = vadd.f32 %v923, %v925
    %v928 = vlaneseq
    %v929 = vshrl.u32 %v928, 7
    %v930 = vsub.s32 0, %v929
    %v931 = vrot.slane %v926, %v930
    %v932 = vlaneseq
    %v933 = vshrl.u32 %v932, 7
    %v934 = vsub.s32 0, %v933
    %v935 = vrot.slane %v927, %v934
    %v936 = vmul.f32 %v931, %v914
    %v937 = vmul.f32 %v935, %v915
    %v938 = vadd.f32 %v894, %v936
    %v939 = vadd.f32 %v895, %v937
    %v940 = vld [vmem:[#allocation5 + $0x1] sm:$0x1]
    %v941 = vld [vmem:[#allocation5 + $0x11] sm:$0x1]
    %v942 = vld [vmem:[%s112] sm:$0x1]
    %v943 = vld [vmem:[%s112 + $0x10] sm:$0x1]
    %v944 = vsub.f32 %v940, %v942
    %v945 = vsub.f32 %v941, %v943
    %v946 = vlaneseq
    %v947 = vshrl.u32 %v946, 7
    %v948 = vsub.s32 0, %v947
    %v949 = vrot.slane %v944, %v948
    %v950 = vlaneseq
    %v951 = vshrl.u32 %v950, 7
    %v952 = vsub.s32 0, %v951
    %v953 = vrot.slane %v945, %v952
    %v954 = vmul.f32 %v949, %v920
    %v955 = vmul.f32 %v953, %v921
    %v956 = vadd.f32 %v938, %v954
    %v957 = vadd.f32 %v939, %v955
    %v958 = vld [vmem:[#allocation7 + $0x1] sm:$0x1]
    %v959 = vld [vmem:[#allocation7 + $0x11] sm:$0x1]
    %v960 = vld [vmem:[%s85] sm:$0x1]
    %v961 = vld [vmem:[%s85 + $0x10] sm:$0x1]
    %v962 = vadd.f32 %v958, %v960
    %v963 = vadd.f32 %v959, %v961
    %v964 = vlaneseq
    %v965 = vshrl.u32 %v964, 7
    %v966 = vsub.s32 0, %v965
    %v967 = vrot.slane %v962, %v966
    %v968 = vlaneseq
    %v969 = vshrl.u32 %v968, 7
    %v970 = vsub.s32 0, %v969
    %v971 = vrot.slane %v963, %v970
    %v972 = vmul.f32 %v967, %v914
    %v973 = vmul.f32 %v971, %v915
    %v974 = vadd.f32 %v908, %v972
    %v975 = vadd.f32 %v909, %v973
    %v976 = vld [vmem:[#allocation8 + $0x1] sm:$0x1]
    %v977 = vld [vmem:[#allocation8 + $0x11] sm:$0x1]
    %v978 = vld [vmem:[%s115] sm:$0x1]
    %v979 = vld [vmem:[%s115 + $0x10] sm:$0x1]
    %v980 = vsub.f32 %v976, %v978
    %v981 = vsub.f32 %v977, %v979
    %v982 = vlaneseq
    %v983 = vshrl.u32 %v982, 7
    %v984 = vsub.s32 0, %v983
    %v985 = vrot.slane %v980, %v984
    %v986 = vlaneseq
    %v987 = vshrl.u32 %v986, 7
    %v988 = vsub.s32 0, %v987
    %v989 = vrot.slane %v981, %v988
    %v990 = vmul.f32 %v985, %v920
    %v991 = vmul.f32 %v989, %v921
    %v992 = vadd.f32 %v974, %v990
    %v993 = vadd.f32 %v975, %v991
    %v994 = vmul.f32 %v802, %v866
    %v995 = vmul.f32 %v803, %v867
    %v996 = vmul.f32 %v810, %v874
    %v997 = vmul.f32 %v811, %v875
    %v998 = vadd.f32 %v994, %v996
    %v999 = vadd.f32 %v995, %v997
    %v1000 = vmul.f32 %v810, %v866
    %v1001 = vmul.f32 %v811, %v867
    %v1002 = vmul.f32 %v802, %v874
    %v1003 = vmul.f32 %v803, %v875
    %v1004 = vsub.f32 %v1000, %v1002
    %v1005 = vsub.f32 %v1001, %v1003
    %v1006 = vld [vmem:[#allocation2 + $0x2] sm:$0x1]
    %v1007 = vld [vmem:[#allocation2 + $0x12] sm:$0x1]
    %v1008 = vld [vmem:[%s90] sm:$0x1]
    %v1009 = vld [vmem:[%s90 + $0x10] sm:$0x1]
    %v1010 = vadd.f32 %v1006, %v1008
    %v1011 = vadd.f32 %v1007, %v1009
    %v1012 = vlaneseq
    %v1013 = vshrl.u32 %v1012, 7
    %v1014 = vsub.s32 0, %v1013
    %v1015 = vrot.slane %v1010, %v1014
    %v1016 = vlaneseq
    %v1017 = vshrl.u32 %v1016, 7
    %v1018 = vsub.s32 0, %v1017
    %v1019 = vrot.slane %v1011, %v1018
    %v1020 = vmul.f32 %v1015, %v998
    %v1021 = vmul.f32 %v1019, %v999
    %v1022 = vadd.f32 %v956, %v1020
    %v1023 = vadd.f32 %v957, %v1021
    %v1024 = vld [vmem:[#allocation5 + $0x2] sm:$0x1]
    %v1025 = vld [vmem:[#allocation5 + $0x12] sm:$0x1]
    %v1026 = vld [vmem:[%s120] sm:$0x1]
    %v1027 = vld [vmem:[%s120 + $0x10] sm:$0x1]
    %v1028 = vsub.f32 %v1024, %v1026
    %v1029 = vsub.f32 %v1025, %v1027
    %v1030 = vlaneseq
    %v1031 = vshrl.u32 %v1030, 7
    %v1032 = vsub.s32 0, %v1031
    %v1033 = vrot.slane %v1028, %v1032
    %v1034 = vlaneseq
    %v1035 = vshrl.u32 %v1034, 7
    %v1036 = vsub.s32 0, %v1035
    %v1037 = vrot.slane %v1029, %v1036
    %v1038 = vmul.f32 %v1033, %v1004
    %v1039 = vmul.f32 %v1037, %v1005
    %v1040 = vadd.f32 %v1022, %v1038
    %v1041 = vadd.f32 %v1023, %v1039
    %v1042 = vld [vmem:[#allocation7 + $0x2] sm:$0x1]
    %v1043 = vld [vmem:[#allocation7 + $0x12] sm:$0x1]
    %v1044 = vld [vmem:[%s93] sm:$0x1]
    %v1045 = vld [vmem:[%s93 + $0x10] sm:$0x1]
    %v1046 = vadd.f32 %v1042, %v1044
    %v1047 = vadd.f32 %v1043, %v1045
    %v1048 = vlaneseq
    %v1049 = vshrl.u32 %v1048, 7
    %v1050 = vsub.s32 0, %v1049
    %v1051 = vrot.slane %v1046, %v1050
    %v1052 = vlaneseq
    %v1053 = vshrl.u32 %v1052, 7
    %v1054 = vsub.s32 0, %v1053
    %v1055 = vrot.slane %v1047, %v1054
    %v1056 = vmul.f32 %v1051, %v998
    %v1057 = vmul.f32 %v1055, %v999
    %v1058 = vadd.f32 %v992, %v1056
    %v1059 = vadd.f32 %v993, %v1057
    %v1060 = vld [vmem:[#allocation8 + $0x2] sm:$0x1]
    %v1061 = vld [vmem:[#allocation8 + $0x12] sm:$0x1]
    %v1062 = vld [vmem:[%s123] sm:$0x1]
    %v1063 = vld [vmem:[%s123 + $0x10] sm:$0x1]
    %v1064 = vsub.f32 %v1060, %v1062
    %v1065 = vsub.f32 %v1061, %v1063
    %v1066 = vlaneseq
    %v1067 = vshrl.u32 %v1066, 7
    %v1068 = vsub.s32 0, %v1067
    %v1069 = vrot.slane %v1064, %v1068
    %v1070 = vlaneseq
    %v1071 = vshrl.u32 %v1070, 7
    %v1072 = vsub.s32 0, %v1071
    %v1073 = vrot.slane %v1065, %v1072
    %v1074 = vmul.f32 %v1069, %v1004
    %v1075 = vmul.f32 %v1073, %v1005
    %v1076 = vadd.f32 %v1058, %v1074
    %v1077 = vadd.f32 %v1059, %v1075
    %v1078 = vmul.f32 %v802, %v772
    %v1079 = vmul.f32 %v803, %v773
    %v1080 = vmul.f32 %v810, %v778
    %v1081 = vmul.f32 %v811, %v779
    %v1082 = vadd.f32 %v1078, %v1080
    %v1083 = vadd.f32 %v1079, %v1081
    %v1084 = vmul.f32 %v810, %v772
    %v1085 = vmul.f32 %v811, %v773
    %v1086 = vmul.f32 %v802, %v778
    %v1087 = vmul.f32 %v803, %v779
    %v1088 = vsub.f32 %v1084, %v1086
    %v1089 = vsub.f32 %v1085, %v1087
    %v1090 = vld [vmem:[#allocation2 + $0x3] sm:$0x1]
    %v1091 = vld [vmem:[#allocation2 + $0x13] sm:$0x1]
    %v1092 = vld [vmem:[%s98] sm:$0x1]
    %v1093 = vld [vmem:[%s98 + $0x10] sm:$0x1]
    %v1094 = vadd.f32 %v1090, %v1092
    %v1095 = vadd.f32 %v1091, %v1093
    %v1096 = vlaneseq
    %v1097 = vshrl.u32 %v1096, 7
    %v1098 = vsub.s32 0, %v1097
    %v1099 = vrot.slane %v1094, %v1098
    %v1100 = vlaneseq
    %v1101 = vshrl.u32 %v1100, 7
    %v1102 = vsub.s32 0, %v1101
    %v1103 = vrot.slane %v1095, %v1102
    %v1104 = vmul.f32 %v1099, %v1082
    %v1105 = vmul.f32 %v1103, %v1083
    %v1106 = vadd.f32 %v1040, %v1104
    %v1107 = vadd.f32 %v1041, %v1105
    %v1108 = vld [vmem:[#allocation5 + $0x3] sm:$0x1]
    %v1109 = vld [vmem:[#allocation5 + $0x13] sm:$0x1]
    %v1110 = vld [vmem:[%s128] sm:$0x1]
    %v1111 = vld [vmem:[%s128 + $0x10] sm:$0x1]
    %v1112 = vsub.f32 %v1108, %v1110
    %v1113 = vsub.f32 %v1109, %v1111
    %v1114 = vlaneseq
    %v1115 = vshrl.u32 %v1114, 7
    %v1116 = vsub.s32 0, %v1115
    %v1117 = vrot.slane %v1112, %v1116
    %v1118 = vlaneseq
    %v1119 = vshrl.u32 %v1118, 7
    %v1120 = vsub.s32 0, %v1119
    %v1121 = vrot.slane %v1113, %v1120
    %v1122 = vmul.f32 %v1117, %v1088
    %v1123 = vmul.f32 %v1121, %v1089
    %v1124 = vadd.f32 %v1106, %v1122
    %v1125 = vadd.f32 %v1107, %v1123
    %v1126 = vld [vmem:[#allocation7 + $0x3] sm:$0x1]
    %v1127 = vld [vmem:[#allocation7 + $0x13] sm:$0x1]
    %v1128 = vld [vmem:[%s101] sm:$0x1]
    %v1129 = vld [vmem:[%s101 + $0x10] sm:$0x1]
    %v1130 = vadd.f32 %v1126, %v1128
    %v1131 = vadd.f32 %v1127, %v1129
    %v1132 = vlaneseq
    %v1133 = vshrl.u32 %v1132, 7
    %v1134 = vsub.s32 0, %v1133
    %v1135 = vrot.slane %v1130, %v1134
    %v1136 = vlaneseq
    %v1137 = vshrl.u32 %v1136, 7
    %v1138 = vsub.s32 0, %v1137
    %v1139 = vrot.slane %v1131, %v1138
    %v1140 = vmul.f32 %v1135, %v1082
    %v1141 = vmul.f32 %v1139, %v1083
    %v1142 = vadd.f32 %v1076, %v1140
    %v1143 = vadd.f32 %v1077, %v1141
    %v1144 = vld [vmem:[#allocation8 + $0x3] sm:$0x1]
    %v1145 = vld [vmem:[#allocation8 + $0x13] sm:$0x1]
    %v1146 = vld [vmem:[%s131] sm:$0x1]
    %v1147 = vld [vmem:[%s131 + $0x10] sm:$0x1]
    %v1148 = vsub.f32 %v1144, %v1146
    %v1149 = vsub.f32 %v1145, %v1147
    %v1150 = vlaneseq
    %v1151 = vshrl.u32 %v1150, 7
    %v1152 = vsub.s32 0, %v1151
    %v1153 = vrot.slane %v1148, %v1152
    %v1154 = vlaneseq
    %v1155 = vshrl.u32 %v1154, 7
    %v1156 = vsub.s32 0, %v1155
    %v1157 = vrot.slane %v1149, %v1156
    %v1158 = vmul.f32 %v1153, %v1088
    %v1159 = vmul.f32 %v1157, %v1089
    %v1160 = vadd.f32 %v1142, %v1158
    %v1161 = vadd.f32 %v1143, %v1159
    %v1162 = vmul.f32 %v834, %v834
    %v1163 = vmul.f32 %v835, %v835
    %v1164 = vmul.f32 %v842, %v842
    %v1165 = vmul.f32 %v843, %v843
    %v1166 = vadd.f32 %v1162, %v1164
    %v1167 = vadd.f32 %v1163, %v1165
    %v1168 = vld [vmem:[%s82 + $0x1] sm:$0x1]
    %v1169 = vld [vmem:[%s82 + $0x11] sm:$0x1]
    %v1170 = vlaneseq
    %v1171 = vshrl.u32 %v1170, 7
    %v1172 = vsub.s32 0, %v1171
    %v1173 = vrot.slane %v1168, %v1172
    %v1174 = vlaneseq
    %v1175 = vshrl.u32 %v1174, 7
    %v1176 = vsub.s32 0, %v1175
    %v1177 = vrot.slane %v1169, %v1176
    %v1178 = vmul.f32 %v1173, %v1166
    %v1179 = vmul.f32 %v1177, %v1167
    %v1180 = vadd.f32 %v1124, %v1178
    %v1181 = vadd.f32 %v1125, %v1179
    %v1182 = vld [vmem:[%s85 + $0x1] sm:$0x1]
    %v1183 = vld [vmem:[%s85 + $0x11] sm:$0x1]
    %v1184 = vlaneseq
    %v1185 = vshrl.u32 %v1184, 7
    %v1186 = vsub.s32 0, %v1185
    %v1187 = vrot.slane %v1182, %v1186
    %v1188 = vlaneseq
    %v1189 = vshrl.u32 %v1188, 7
    %v1190 = vsub.s32 0, %v1189
    %v1191 = vrot.slane %v1183, %v1190
    %v1192 = vmul.f32 %v1187, %v1166
    %v1193 = vmul.f32 %v1191, %v1167
    %v1194 = vadd.f32 %v1160, %v1192
    %v1195 = vadd.f32 %v1161, %v1193
    %v1196 = vmul.f32 %v834, %v866
    %v1197 = vmul.f32 %v835, %v867
    %v1198 = vmul.f32 %v842, %v874
    %v1199 = vmul.f32 %v843, %v875
    %v1200 = vadd.f32 %v1196, %v1198
    %v1201 = vadd.f32 %v1197, %v1199
    %v1202 = vmul.f32 %v842, %v866
    %v1203 = vmul.f32 %v843, %v867
    %v1204 = vmul.f32 %v834, %v874
    %v1205 = vmul.f32 %v835, %v875
    %v1206 = vsub.f32 %v1202, %v1204
    %v1207 = vsub.f32 %v1203, %v1205
    %v1208 = vld [vmem:[%s82 + $0x2] sm:$0x1]
    %v1209 = vld [vmem:[%s82 + $0x12] sm:$0x1]
    %v1210 = vld [vmem:[%s90 + $0x1] sm:$0x1]
    %v1211 = vld [vmem:[%s90 + $0x11] sm:$0x1]
    %v1212 = vadd.f32 %v1208, %v1210
    %v1213 = vadd.f32 %v1209, %v1211
    %v1214 = vlaneseq
    %v1215 = vshrl.u32 %v1214, 7
    %v1216 = vsub.s32 0, %v1215
    %v1217 = vrot.slane %v1212, %v1216
    %v1218 = vlaneseq
    %v1219 = vshrl.u32 %v1218, 7
    %v1220 = vsub.s32 0, %v1219
    %v1221 = vrot.slane %v1213, %v1220
    %v1222 = vmul.f32 %v1217, %v1200
    %v1223 = vmul.f32 %v1221, %v1201
    %v1224 = vadd.f32 %v1180, %v1222
    %v1225 = vadd.f32 %v1181, %v1223
    %v1226 = vld [vmem:[%s112 + $0x2] sm:$0x1]
    %v1227 = vld [vmem:[%s112 + $0x12] sm:$0x1]
    %v1228 = vld [vmem:[%s120 + $0x1] sm:$0x1]
    %v1229 = vld [vmem:[%s120 + $0x11] sm:$0x1]
    %v1230 = vsub.f32 %v1226, %v1228
    %v1231 = vsub.f32 %v1227, %v1229
    %v1232 = vlaneseq
    %v1233 = vshrl.u32 %v1232, 7
    %v1234 = vsub.s32 0, %v1233
    %v1235 = vrot.slane %v1230, %v1234
    %v1236 = vlaneseq
    %v1237 = vshrl.u32 %v1236, 7
    %v1238 = vsub.s32 0, %v1237
    %v1239 = vrot.slane %v1231, %v1238
    %v1240 = vmul.f32 %v1235, %v1206
    %v1241 = vmul.f32 %v1239, %v1207
    %v1242 = vadd.f32 %v1224, %v1240
    %v1243 = vadd.f32 %v1225, %v1241
    %v1244 = vld [vmem:[%s85 + $0x2] sm:$0x1]
    %v1245 = vld [vmem:[%s85 + $0x12] sm:$0x1]
    %v1246 = vld [vmem:[%s93 + $0x1] sm:$0x1]
    %v1247 = vld [vmem:[%s93 + $0x11] sm:$0x1]
    %v1248 = vadd.f32 %v1244, %v1246
    %v1249 = vadd.f32 %v1245, %v1247
    %v1250 = vlaneseq
    %v1251 = vshrl.u32 %v1250, 7
    %v1252 = vsub.s32 0, %v1251
    %v1253 = vrot.slane %v1248, %v1252
    %v1254 = vlaneseq
    %v1255 = vshrl.u32 %v1254, 7
    %v1256 = vsub.s32 0, %v1255
    %v1257 = vrot.slane %v1249, %v1256
    %v1258 = vmul.f32 %v1253, %v1200
    %v1259 = vmul.f32 %v1257, %v1201
    %v1260 = vadd.f32 %v1194, %v1258
    %v1261 = vadd.f32 %v1195, %v1259
    %v1262 = vld [vmem:[%s115 + $0x2] sm:$0x1]
    %v1263 = vld [vmem:[%s115 + $0x12] sm:$0x1]
    %v1264 = vld [vmem:[%s123 + $0x1] sm:$0x1]
    %v1265 = vld [vmem:[%s123 + $0x11] sm:$0x1]
    %v1266 = vsub.f32 %v1262, %v1264
    %v1267 = vsub.f32 %v1263, %v1265
    %v1268 = vlaneseq
    %v1269 = vshrl.u32 %v1268, 7
    %v1270 = vsub.s32 0, %v1269
    %v1271 = vrot.slane %v1266, %v1270
    %v1272 = vlaneseq
    %v1273 = vshrl.u32 %v1272, 7
    %v1274 = vsub.s32 0, %v1273
    %v1275 = vrot.slane %v1267, %v1274
    %v1276 = vmul.f32 %v1271, %v1206
    %v1277 = vmul.f32 %v1275, %v1207
    %v1278 = vadd.f32 %v1260, %v1276
    %v1279 = vadd.f32 %v1261, %v1277
    %v1280 = vmul.f32 %v834, %v772
    %v1281 = vmul.f32 %v835, %v773
    %v1282 = vmul.f32 %v842, %v778
    %v1283 = vmul.f32 %v843, %v779
    %v1284 = vadd.f32 %v1280, %v1282
    %v1285 = vadd.f32 %v1281, %v1283
    %v1286 = vmul.f32 %v842, %v772
    %v1287 = vmul.f32 %v843, %v773
    %v1288 = vmul.f32 %v834, %v778
    %v1289 = vmul.f32 %v835, %v779
    %v1290 = vsub.f32 %v1286, %v1288
    %v1291 = vsub.f32 %v1287, %v1289
    %v1292 = vld [vmem:[%s82 + $0x3] sm:$0x1]
    %v1293 = vld [vmem:[%s82 + $0x13] sm:$0x1]
    %v1294 = vld [vmem:[%s98 + $0x1] sm:$0x1]
    %v1295 = vld [vmem:[%s98 + $0x11] sm:$0x1]
    %v1296 = vadd.f32 %v1292, %v1294
    %v1297 = vadd.f32 %v1293, %v1295
    %v1298 = vlaneseq
    %v1299 = vshrl.u32 %v1298, 7
    %v1300 = vsub.s32 0, %v1299
    %v1301 = vrot.slane %v1296, %v1300
    %v1302 = vlaneseq
    %v1303 = vshrl.u32 %v1302, 7
    %v1304 = vsub.s32 0, %v1303
    %v1305 = vrot.slane %v1297, %v1304
    %v1306 = vmul.f32 %v1301, %v1284
    %v1307 = vmul.f32 %v1305, %v1285
    %v1308 = vadd.f32 %v1242, %v1306
    %v1309 = vadd.f32 %v1243, %v1307
    %v1310 = vld [vmem:[%s112 + $0x3] sm:$0x1]
    %v1311 = vld [vmem:[%s112 + $0x13] sm:$0x1]
    %v1312 = vld [vmem:[%s128 + $0x1] sm:$0x1]
    %v1313 = vld [vmem:[%s128 + $0x11] sm:$0x1]
    %v1314 = vsub.f32 %v1310, %v1312
    %v1315 = vsub.f32 %v1311, %v1313
    %v1316 = vlaneseq
    %v1317 = vshrl.u32 %v1316, 7
    %v1318 = vsub.s32 0, %v1317
    %v1319 = vrot.slane %v1314, %v1318
    %v1320 = vlaneseq
    %v1321 = vshrl.u32 %v1320, 7
    %v1322 = vsub.s32 0, %v1321
    %v1323 = vrot.slane %v1315, %v1322
    %v1324 = vmul.f32 %v1319, %v1290
    %v1325 = vmul.f32 %v1323, %v1291
    %v1326 = vadd.f32 %v1308, %v1324
    %v1327 = vadd.f32 %v1309, %v1325
    %v1328 = vld [vmem:[%s85 + $0x3] sm:$0x1]
    %v1329 = vld [vmem:[%s85 + $0x13] sm:$0x1]
    %v1330 = vld [vmem:[%s101 + $0x1] sm:$0x1]
    %v1331 = vld [vmem:[%s101 + $0x11] sm:$0x1]
    %v1332 = vadd.f32 %v1328, %v1330
    %v1333 = vadd.f32 %v1329, %v1331
    %v1334 = vlaneseq
    %v1335 = vshrl.u32 %v1334, 7
    %v1336 = vsub.s32 0, %v1335
    %v1337 = vrot.slane %v1332, %v1336
    %v1338 = vlaneseq
    %v1339 = vshrl.u32 %v1338, 7
    %v1340 = vsub.s32 0, %v1339
    %v1341 = vrot.slane %v1333, %v1340
    %v1342 = vmul.f32 %v1337, %v1284
    %v1343 = vmul.f32 %v1341, %v1285
    %v1344 = vadd.f32 %v1278, %v1342
    %v1345 = vadd.f32 %v1279, %v1343
    %v1346 = vld [vmem:[%s115 + $0x3] sm:$0x1]
    %v1347 = vld [vmem:[%s115 + $0x13] sm:$0x1]
    %v1348 = vld [vmem:[%s131 + $0x1] sm:$0x1]
    %v1349 = vld [vmem:[%s131 + $0x11] sm:$0x1]
    %v1350 = vsub.f32 %v1346, %v1348
    %v1351 = vsub.f32 %v1347, %v1349
    %v1352 = vlaneseq
    %v1353 = vshrl.u32 %v1352, 7
    %v1354 = vsub.s32 0, %v1353
    %v1355 = vrot.slane %v1350, %v1354
    %v1356 = vlaneseq
    %v1357 = vshrl.u32 %v1356, 7
    %v1358 = vsub.s32 0, %v1357
    %v1359 = vrot.slane %v1351, %v1358
    %v1360 = vmul.f32 %v1355, %v1290
    %v1361 = vmul.f32 %v1359, %v1291
    %v1362 = vadd.f32 %v1344, %v1360
    %v1363 = vadd.f32 %v1345, %v1361
    %v1364 = vmul.f32 %v866, %v866
    %v1365 = vmul.f32 %v867, %v867
    %v1366 = vmul.f32 %v874, %v874
    %v1367 = vmul.f32 %v875, %v875
    %v1368 = vadd.f32 %v1364, %v1366
    %v1369 = vadd.f32 %v1365, %v1367
    %v1370 = vld [vmem:[%s90 + $0x2] sm:$0x1]
    %v1371 = vld [vmem:[%s90 + $0x12] sm:$0x1]
    %v1372 = vlaneseq
    %v1373 = vshrl.u32 %v1372, 7
    %v1374 = vsub.s32 0, %v1373
    %v1375 = vrot.slane %v1370, %v1374
    %v1376 = vlaneseq
    %v1377 = vshrl.u32 %v1376, 7
    %v1378 = vsub.s32 0, %v1377
    %v1379 = vrot.slane %v1371, %v1378
    %v1380 = vmul.f32 %v1375, %v1368
    %v1381 = vmul.f32 %v1379, %v1369
    %v1382 = vadd.f32 %v1326, %v1380
    %v1383 = vadd.f32 %v1327, %v1381
    %v1384 = vld [vmem:[%s93 + $0x2] sm:$0x1]
    %v1385 = vld [vmem:[%s93 + $0x12] sm:$0x1]
    %v1386 = vlaneseq
    %v1387 = vshrl.u32 %v1386, 7
    %v1388 = vsub.s32 0, %v1387
    %v1389 = vrot.slane %v1384, %v1388
    %v1390 = vlaneseq
    %v1391 = vshrl.u32 %v1390, 7
    %v1392 = vsub.s32 0, %v1391
    %v1393 = vrot.slane %v1385, %v1392
    %v1394 = vmul.f32 %v1389, %v1368
    %v1395 = vmul.f32 %v1393, %v1369
    %v1396 = vadd.f32 %v1362, %v1394
    %v1397 = vadd.f32 %v1363, %v1395
    %v1398 = vmul.f32 %v866, %v772
    %v1399 = vmul.f32 %v867, %v773
    %v1400 = vmul.f32 %v874, %v778
    %v1401 = vmul.f32 %v875, %v779
    %v1402 = vadd.f32 %v1398, %v1400
    %v1403 = vadd.f32 %v1399, %v1401
    %v1404 = vmul.f32 %v874, %v772
    %v1405 = vmul.f32 %v875, %v773
    %v1406 = vmul.f32 %v866, %v778
    %v1407 = vmul.f32 %v867, %v779
    %v1408 = vsub.f32 %v1404, %v1406
    %v1409 = vsub.f32 %v1405, %v1407
    %v1410 = vld [vmem:[%s90 + $0x3] sm:$0x1]
    %v1411 = vld [vmem:[%s90 + $0x13] sm:$0x1]
    %v1412 = vld [vmem:[%s98 + $0x2] sm:$0x1]
    %v1413 = vld [vmem:[%s98 + $0x12] sm:$0x1]
    %v1414 = vadd.f32 %v1410, %v1412
    %v1415 = vadd.f32 %v1411, %v1413
    %v1416 = vlaneseq
    %v1417 = vshrl.u32 %v1416, 7
    %v1418 = vsub.s32 0, %v1417
    %v1419 = vrot.slane %v1414, %v1418
    %v1420 = vlaneseq
    %v1421 = vshrl.u32 %v1420, 7
    %v1422 = vsub.s32 0, %v1421
    %v1423 = vrot.slane %v1415, %v1422
    %v1424 = vmul.f32 %v1419, %v1402
    %v1425 = vmul.f32 %v1423, %v1403
    %v1426 = vadd.f32 %v1382, %v1424
    %v1427 = vadd.f32 %v1383, %v1425
    %v1428 = vld [vmem:[%s120 + $0x3] sm:$0x1]
    %v1429 = vld [vmem:[%s120 + $0x13] sm:$0x1]
    %v1430 = vld [vmem:[%s128 + $0x2] sm:$0x1]
    %v1431 = vld [vmem:[%s128 + $0x12] sm:$0x1]
    %v1432 = vsub.f32 %v1428, %v1430
    %v1433 = vsub.f32 %v1429, %v1431
    %v1434 = vlaneseq
    %v1435 = vshrl.u32 %v1434, 7
    %v1436 = vsub.s32 0, %v1435
    %v1437 = vrot.slane %v1432, %v1436
    %v1438 = vlaneseq
    %v1439 = vshrl.u32 %v1438, 7
    %v1440 = vsub.s32 0, %v1439
    %v1441 = vrot.slane %v1433, %v1440
    %v1442 = vmul.f32 %v1437, %v1408
    %v1443 = vmul.f32 %v1441, %v1409
    %v1444 = vadd.f32 %v1426, %v1442
    %v1445 = vadd.f32 %v1427, %v1443
    %v1446 = vld [vmem:[%s93 + $0x3] sm:$0x1]
    %v1447 = vld [vmem:[%s93 + $0x13] sm:$0x1]
    %v1448 = vld [vmem:[%s101 + $0x2] sm:$0x1]
    %v1449 = vld [vmem:[%s101 + $0x12] sm:$0x1]
    %v1450 = vadd.f32 %v1446, %v1448
    %v1451 = vadd.f32 %v1447, %v1449
    %v1452 = vlaneseq
    %v1453 = vshrl.u32 %v1452, 7
    %v1454 = vsub.s32 0, %v1453
    %v1455 = vrot.slane %v1450, %v1454
    %v1456 = vlaneseq
    %v1457 = vshrl.u32 %v1456, 7
    %v1458 = vsub.s32 0, %v1457
    %v1459 = vrot.slane %v1451, %v1458
    %v1460 = vmul.f32 %v1455, %v1402
    %v1461 = vmul.f32 %v1459, %v1403
    %v1462 = vadd.f32 %v1396, %v1460
    %v1463 = vadd.f32 %v1397, %v1461
    %v1464 = vld [vmem:[%s123 + $0x3] sm:$0x1]
    %v1465 = vld [vmem:[%s123 + $0x13] sm:$0x1]
    %v1466 = vld [vmem:[%s131 + $0x2] sm:$0x1]
    %v1467 = vld [vmem:[%s131 + $0x12] sm:$0x1]
    %v1468 = vsub.f32 %v1464, %v1466
    %v1469 = vsub.f32 %v1465, %v1467
    %v1470 = vlaneseq
    %v1471 = vshrl.u32 %v1470, 7
    %v1472 = vsub.s32 0, %v1471
    %v1473 = vrot.slane %v1468, %v1472
    %v1474 = vlaneseq
    %v1475 = vshrl.u32 %v1474, 7
    %v1476 = vsub.s32 0, %v1475
    %v1477 = vrot.slane %v1469, %v1476
    %v1478 = vmul.f32 %v1473, %v1408
    %v1479 = vmul.f32 %v1477, %v1409
    %v1480 = vadd.f32 %v1462, %v1478
    %v1481 = vadd.f32 %v1463, %v1479
    %v1482 = vmul.f32 %v772, %v772
    %v1483 = vmul.f32 %v773, %v773
    %v1484 = vmul.f32 %v778, %v778
    %v1485 = vmul.f32 %v779, %v779
    %v1486 = vadd.f32 %v1482, %v1484
    %v1487 = vadd.f32 %v1483, %v1485
    %v1488 = vld [vmem:[%s98 + $0x3] sm:$0x1]
    %v1489 = vld [vmem:[%s98 + $0x13] sm:$0x1]
    %v1490 = vlaneseq
    %v1491 = vshrl.u32 %v1490, 7
    %v1492 = vsub.s32 0, %v1491
    %v1493 = vrot.slane %v1488, %v1492
    %v1494 = vlaneseq
    %v1495 = vshrl.u32 %v1494, 7
    %v1496 = vsub.s32 0, %v1495
    %v1497 = vrot.slane %v1489, %v1496
    %v1498 = vmul.f32 %v1493, %v1486
    %v1499 = vmul.f32 %v1497, %v1487
    %v1500 = vadd.f32 %v1444, %v1498
    %v1501 = vadd.f32 %v1445, %v1499
    %v1502 = vld [vmem:[%s101 + $0x3] sm:$0x1]
    %v1503 = vld [vmem:[%s101 + $0x13] sm:$0x1]
    %v1504 = vlaneseq
    %v1505 = vshrl.u32 %v1504, 7
    %v1506 = vsub.s32 0, %v1505
    %v1507 = vrot.slane %v1502, %v1506
    %v1508 = vlaneseq
    %v1509 = vshrl.u32 %v1508, 7
    %v1510 = vsub.s32 0, %v1509
    %v1511 = vrot.slane %v1503, %v1510
    %v1512 = vmul.f32 %v1507, %v1486
    %v1513 = vmul.f32 %v1511, %v1487
    %v1514 = vadd.f32 %v1480, %v1512
    %v1515 = vadd.f32 %v1481, %v1513
    %vm1516 = vcmask 125952
    %v1517 = vsel %vm1516, %v1500, 0.0
    %1518 = vadd.xlane.f32.xlu0 %v1517
    %v1519 = vpop.xlane.xlu0 %1518
    %v1520 = vsel %vm1516, %v1501, 0.0
    %1521 = vadd.xlane.f32.xlu0 %v1520
    %v1522 = vpop.xlane.xlu0 %1521
    %v1523 = vsel %vm1516, %v1514, 0.0
    %1524 = vadd.xlane.f32.xlu0 %v1523
    %v1525 = vpop.xlane.xlu0 %1524
    %v1526 = vsel %vm1516, %v1515, 0.0
    %1527 = vadd.xlane.f32.xlu0 %v1526
    %v1528 = vpop.xlane.xlu0 %1527
    %v1529 = vmax.f32 %v1525, 1e-06
    %v1530 = vmax.f32 %v1528, 1e-06
    %v1531 = vrcp.pop %v1529
    %v1532 = vmul.f32 %v1519, %v1531
    %v1533 = vrcp.pop %v1530
    %v1534 = vmul.f32 %v1522, %v1533
    %v1535 = vlaneseq
    %v1536 = vshrl.u32 %v1535, 7
    %vm1537 = vcmask 1043456
    %v1538 = vsel %vm1537, %v1532, -inf
    %v1539 = vrot.slane %v1538, 4
    %v1540 = vmax.f32 %v1538, %v1539
    %v1541 = vrot.slane %v1540, 2
    %v1542 = vmax.f32 %v1540, %v1541
    %v1543 = vrot.slane %v1542, 1
    %v1544 = vmax.f32 %v1542, %v1543
    %v1545 = vsel %vm1537, %v1534, -inf
    %v1546 = vrot.slane %v1545, 4
    %v1547 = vmax.f32 %v1545, %v1546
    %v1548 = vrot.slane %v1547, 2
    %v1549 = vmax.f32 %v1547, %v1548
    %v1550 = vrot.slane %v1549, 1
    %v1551 = vmax.f32 %v1549, %v1550
    %vm1552 = vcmp.ge.f32.partialorder %v1532, %v1544
    %vm1553 = vcmp.ge.f32.partialorder %v1534, %v1551
    %v1554 = vsel %vm1552, %v1536, 4
    %v1555 = vsel %vm1553, %v1536, 4
    %v1556 = vsel %vm1537, %v1554, 2147483647
    %v1557 = vrot.slane %v1556, 4
    %vm1558 = vcmp.lt.s32.totalorder %v1556, %v1557
    %v1559 = vsel %vm1558, %v1556, %v1557
    %v1560 = vrot.slane %v1559, 2
    %vm1561 = vcmp.lt.s32.totalorder %v1559, %v1560
    %v1562 = vsel %vm1561, %v1559, %v1560
    %v1563 = vrot.slane %v1562, 1
    %vm1564 = vcmp.lt.s32.totalorder %v1562, %v1563
    %v1565 = vsel %vm1564, %v1562, %v1563
    %v1566 = vsel %vm1537, %v1555, 2147483647
    %v1567 = vrot.slane %v1566, 4
    %vm1568 = vcmp.lt.s32.totalorder %v1566, %v1567
    %v1569 = vsel %vm1568, %v1566, %v1567
    %v1570 = vrot.slane %v1569, 2
    %vm1571 = vcmp.lt.s32.totalorder %v1569, %v1570
    %v1572 = vsel %vm1571, %v1569, %v1570
    %v1573 = vrot.slane %v1572, 1
    %vm1574 = vcmp.lt.s32.totalorder %v1572, %v1573
    %v1575 = vsel %vm1574, %v1572, %v1573
    %vm1576 = vcmp.eq.s32.totalorder %v1536, %v1565
    %vm1577 = vcmp.eq.s32.totalorder %v1536, %v1575
    %v1578 = vsel %vm1576, 1, 0
    %v1579 = vsel %vm1577, 1, 0
    %v1580 = vcvt.s32.f32 %v1578
    %v1581 = vcvt.s32.f32 %v1579
    %v1582 = vmul.f32 %v802, %v1580
    %v1583 = vmul.f32 %v834, %v1580
    %v1584 = vmul.f32 %v866, %v1580
    %v1585 = vmul.f32 %v772, %v1580
    %v1586 = vmul.f32 %v803, %v1581
    %v1587 = vmul.f32 %v835, %v1581
    %v1588 = vmul.f32 %v867, %v1581
    %v1589 = vmul.f32 %v773, %v1581
    %v1590 = vsel %vm1516, %v1582, 0.0
    %v1591 = vrot.slane %v1590, 4
    %v1592 = vadd.f32 %v1590, %v1591
    %v1593 = vrot.slane %v1592, 2
    %v1594 = vadd.f32 %v1592, %v1593
    %v1595 = vrot.slane %v1594, 1
    %v1596 = vadd.f32 %v1594, %v1595
    %v1597 = vsel %vm1516, %v1583, 0.0
    %v1598 = vrot.slane %v1597, 4
    %v1599 = vadd.f32 %v1597, %v1598
    %v1600 = vrot.slane %v1599, 2
    %v1601 = vadd.f32 %v1599, %v1600
    %v1602 = vrot.slane %v1601, 1
    %v1603 = vadd.f32 %v1601, %v1602
    %v1604 = vsel %vm1516, %v1584, 0.0
    %v1605 = vrot.slane %v1604, 4
    %v1606 = vadd.f32 %v1604, %v1605
    %v1607 = vrot.slane %v1606, 2
    %v1608 = vadd.f32 %v1606, %v1607
    %v1609 = vrot.slane %v1608, 1
    %v1610 = vadd.f32 %v1608, %v1609
    %v1611 = vsel %vm1516, %v1585, 0.0
    %v1612 = vrot.slane %v1611, 4
    %v1613 = vadd.f32 %v1611, %v1612
    %v1614 = vrot.slane %v1613, 2
    %v1615 = vadd.f32 %v1613, %v1614
    %v1616 = vrot.slane %v1615, 1
    %v1617 = vadd.f32 %v1615, %v1616
    %v1618 = vsel %vm1516, %v1586, 0.0
    %v1619 = vrot.slane %v1618, 4
    %v1620 = vadd.f32 %v1618, %v1619
    %v1621 = vrot.slane %v1620, 2
    %v1622 = vadd.f32 %v1620, %v1621
    %v1623 = vrot.slane %v1622, 1
    %v1624 = vadd.f32 %v1622, %v1623
    %v1625 = vsel %vm1516, %v1587, 0.0
    %v1626 = vrot.slane %v1625, 4
    %v1627 = vadd.f32 %v1625, %v1626
    %v1628 = vrot.slane %v1627, 2
    %v1629 = vadd.f32 %v1627, %v1628
    %v1630 = vrot.slane %v1629, 1
    %v1631 = vadd.f32 %v1629, %v1630
    %v1632 = vsel %vm1516, %v1588, 0.0
    %v1633 = vrot.slane %v1632, 4
    %v1634 = vadd.f32 %v1632, %v1633
    %v1635 = vrot.slane %v1634, 2
    %v1636 = vadd.f32 %v1634, %v1635
    %v1637 = vrot.slane %v1636, 1
    %v1638 = vadd.f32 %v1636, %v1637
    %v1639 = vsel %vm1516, %v1589, 0.0
    %v1640 = vrot.slane %v1639, 4
    %v1641 = vadd.f32 %v1639, %v1640
    %v1642 = vrot.slane %v1641, 2
    %v1643 = vadd.f32 %v1641, %v1642
    %v1644 = vrot.slane %v1643, 1
    %v1645 = vadd.f32 %v1643, %v1644
    %vm1654 = vcmask 1041409
    %v1655 = vsel %vm1654, %v1603, %v1596
    %vm1656 = vcmask 1042434
    %v1657 = vsel %vm1656, %v1610, %v1655
    %vm1658 = vcmask 1043459
    %v1659 = vsel %vm1658, %v1617, %v1657
    %v1660 = vsel %vm1654, %v1631, %v1624
    %v1661 = vsel %vm1656, %v1638, %v1660
    %v1662 = vsel %vm1658, %v1645, %v1661
    %1665 = vst.msk [vmem:[#allocation10] sm:$0xf] %vm1516, %v1659
    %1666 = vst.msk [vmem:[#allocation10 + $0x4] sm:$0xf] %vm1516, %v1662
    %v1667 = vmul.f32 %v810, %v1580
    %v1668 = vmul.f32 %v842, %v1580
    %v1669 = vmul.f32 %v874, %v1580
    %v1670 = vmul.f32 %v778, %v1580
    %v1671 = vmul.f32 %v811, %v1581
    %v1672 = vmul.f32 %v843, %v1581
    %v1673 = vmul.f32 %v875, %v1581
    %v1674 = vmul.f32 %v779, %v1581
    %v1675 = vsel %vm1516, %v1667, 0.0
    %v1676 = vrot.slane %v1675, 4
    %v1677 = vadd.f32 %v1675, %v1676
    %v1678 = vrot.slane %v1677, 2
    %v1679 = vadd.f32 %v1677, %v1678
    %v1680 = vrot.slane %v1679, 1
    %v1681 = vadd.f32 %v1679, %v1680
    %v1682 = vsel %vm1516, %v1668, 0.0
    %v1683 = vrot.slane %v1682, 4
    %v1684 = vadd.f32 %v1682, %v1683
    %v1685 = vrot.slane %v1684, 2
    %v1686 = vadd.f32 %v1684, %v1685
    %v1687 = vrot.slane %v1686, 1
    %v1688 = vadd.f32 %v1686, %v1687
    %v1689 = vsel %vm1516, %v1669, 0.0
    %v1690 = vrot.slane %v1689, 4
    %v1691 = vadd.f32 %v1689, %v1690
    %v1692 = vrot.slane %v1691, 2
    %v1693 = vadd.f32 %v1691, %v1692
    %v1694 = vrot.slane %v1693, 1
    %v1695 = vadd.f32 %v1693, %v1694
    %v1696 = vsel %vm1516, %v1670, 0.0
    %v1697 = vrot.slane %v1696, 4
    %v1698 = vadd.f32 %v1696, %v1697
    %v1699 = vrot.slane %v1698, 2
    %v1700 = vadd.f32 %v1698, %v1699
    %v1701 = vrot.slane %v1700, 1
    %v1702 = vadd.f32 %v1700, %v1701
    %v1703 = vsel %vm1516, %v1671, 0.0
    %v1704 = vrot.slane %v1703, 4
    %v1705 = vadd.f32 %v1703, %v1704
    %v1706 = vrot.slane %v1705, 2
    %v1707 = vadd.f32 %v1705, %v1706
    %v1708 = vrot.slane %v1707, 1
    %v1709 = vadd.f32 %v1707, %v1708
    %v1710 = vsel %vm1516, %v1672, 0.0
    %v1711 = vrot.slane %v1710, 4
    %v1712 = vadd.f32 %v1710, %v1711
    %v1713 = vrot.slane %v1712, 2
    %v1714 = vadd.f32 %v1712, %v1713
    %v1715 = vrot.slane %v1714, 1
    %v1716 = vadd.f32 %v1714, %v1715
    %v1717 = vsel %vm1516, %v1673, 0.0
    %v1718 = vrot.slane %v1717, 4
    %v1719 = vadd.f32 %v1717, %v1718
    %v1720 = vrot.slane %v1719, 2
    %v1721 = vadd.f32 %v1719, %v1720
    %v1722 = vrot.slane %v1721, 1
    %v1723 = vadd.f32 %v1721, %v1722
    %v1724 = vsel %vm1516, %v1674, 0.0
    %v1725 = vrot.slane %v1724, 4
    %v1726 = vadd.f32 %v1724, %v1725
    %v1727 = vrot.slane %v1726, 2
    %v1728 = vadd.f32 %v1726, %v1727
    %v1729 = vrot.slane %v1728, 1
    %v1730 = vadd.f32 %v1728, %v1729
    %v1739 = vsel %vm1654, %v1688, %v1681
    %v1740 = vsel %vm1656, %v1695, %v1739
    %v1741 = vsel %vm1658, %v1702, %v1740
    %v1742 = vsel %vm1654, %v1716, %v1709
    %v1743 = vsel %vm1656, %v1723, %v1742
    %v1744 = vsel %vm1658, %v1730, %v1743
    %1747 = vst.msk [vmem:[#allocation11] sm:$0xf] %vm1516, %v1741
    %1748 = vst.msk [vmem:[#allocation11 + $0x4] sm:$0xf] %vm1516, %v1744
    // Predicated region
    $region34: #{tpu_custom_call.1} parent=1 // pred_check
      _
    $region35: #{tpu_custom_call.1} parent=1 // pred_check_branch
      %1750 = sbr.rel (0) target = $region37
    $region36: #{tpu_custom_call.1} parent=1 // pred_region
      %s1752 = ssub.s32 128, 128
      %1753 = vsyncadd [#allocation4], %s1752
      %s1754 = sshll.u32 [#allocation10], 4
      %s1755 = int_to_ptr.vmem [resolvable:$true] %s1754
      %1760 = dma.vmem_to_hbm [thread:$0]  %s1755, 128, %s4, [#allocation4], 64, 64, 4
    $region37: #{tpu_custom_call.1} parent=1 // pred_fallthru
      _
    // Predicated region
    $region38: #{tpu_custom_call.1} parent=1 // pred_check
      _
    $region39: #{tpu_custom_call.1} parent=1 // pred_check_branch
      %1762 = sbr.rel (0) target = $region41
    $region40: #{tpu_custom_call.1} parent=1 // pred_region
      %s1764 = ssub.s32 128, 128
      %1765 = vsyncadd [#allocation12], %s1764
      %s1766 = sshll.u32 [#allocation11], 4
      %s1767 = int_to_ptr.vmem [resolvable:$true] %s1766
      %1772 = dma.vmem_to_hbm [thread:$0]  %s1767, 128, %s5, [#allocation12], 64, 64, 4
    $region41: #{tpu_custom_call.1} parent=1 // pred_fallthru
      _
    // Predicated region
    $region42: #{tpu_custom_call.1} parent=1 // pred_check
      _
    $region43: #{tpu_custom_call.1} parent=1 // pred_check_branch
      %1774 = sbr.rel (0) target = $region45
    $region44: #{tpu_custom_call.1} parent=1 // pred_region
      %1775 = dma.done [#allocation4], 128
    $region45: #{tpu_custom_call.1} parent=1 // pred_fallthru
      _
    // Predicated region
    $region46: #{tpu_custom_call.1} parent=1 // pred_check
      _
    $region47: #{tpu_custom_call.1} parent=1 // pred_check_branch
      %1777 = sbr.rel (0) target = $region49
    $region48: #{tpu_custom_call.1} parent=1 // pred_region
      %1778 = dma.done [#allocation12], 128
    $region49: #{tpu_custom_call.1} parent=1 // pred_fallthru
      _
    %1779 = vsyncpa [#allocation3], 1
    %1780 = vsyncpa [#allocation6], 1
    %1781 = vsyncpa [#allocation9], 1
    %1782 = vsyncpa [#allocation4], 1
    %1783 = vsyncpa [#allocation12], 1

</llo_original>
